<compile_context>
chip_gen: v7x
topology: tpu7x:2x2x1
jax: 0.10.0
libtpu: 0.0.40
codegen_flags: <defaults>
</compile_context>

<pallas_src>
import math

import jax
import jax.numpy as jnp
import numpy as np
from jax.experimental import pallas as pl
from jax.experimental.pallas import tpu as pltpu

# ----------------------------- configuration --------------------------------
DIM = 32                      # channels
H = W = 8                     # input resolution
WIN = 4                       # window size
SHIFT = 2                     # shift size (SW-MSA)
NUM_HEADS = 4
HEAD_DIM = DIM // NUM_HEADS
MLP_RATIO = 4.0
HIDDEN = int(DIM * MLP_RATIO)
N = WIN * WIN                 # tokens per window
NW = (H // WIN) * (W // WIN)  # windows per image
B = 2
L = H * W
BL = B * L                    # all tokens of the batch
EPS = 1e-5
SCALE = HEAD_DIM ** (-0.5)


# ----------------------------- helpers (host) --------------------------------
def window_partition(x, ws):
    # x: (B, H, W, C) -> (B*nW, ws, ws, C)
    b, h, w, c = x.shape
    x = x.reshape(b, h // ws, ws, w // ws, ws, c)
    return x.transpose(0, 1, 3, 2, 4, 5).reshape(-1, ws, ws, c)


def window_reverse(windows, ws, h, w):
    # windows: (B*nW, ws, ws, C) -> (B, H, W, C)
    b = windows.shape[0] // (h * w // ws // ws)
    x = windows.reshape(b, h // ws, w // ws, ws, ws, -1)
    return x.transpose(0, 1, 3, 2, 4, 5).reshape(b, h, w, -1)


def get_relative_position_index(win_h, win_w):
    coords = jnp.stack(jnp.meshgrid(jnp.arange(win_h), jnp.arange(win_w),
                                    indexing="ij"))            # (2, Wh, Ww)
    coords_flat = coords.reshape(2, -1)                        # (2, N)
    rel = coords_flat[:, :, None] - coords_flat[:, None, :]    # (2, N, N)
    rel = rel.transpose(1, 2, 0)                               # (N, N, 2)
    rel = rel.at[:, :, 0].add(win_h - 1)
    rel = rel.at[:, :, 1].add(win_w - 1)
    rel = rel.at[:, :, 0].multiply(2 * win_w - 1)
    return rel.sum(-1)                                         # (N, N)


def make_attn_mask():
    # identical to the PyTorch SW-MSA mask construction (used by the reference)
    img_mask = jnp.zeros((1, H, W, 1), jnp.float32)
    cnt = 0
    for hs in (slice(0, -WIN), slice(-WIN, -SHIFT), slice(-SHIFT, None)):
        for ws in (slice(0, -WIN), slice(-WIN, -SHIFT), slice(-SHIFT, None)):
            img_mask = img_mask.at[:, hs, ws, :].set(float(cnt))
            cnt += 1
    mask_windows = window_partition(img_mask, WIN).reshape(-1, N)    # (nW, N)
    attn_mask = mask_windows[:, None, :] - mask_windows[:, :, None]  # (nW, N, N)
    return jnp.where(attn_mask != 0, -100.0, 0.0).astype(jnp.float32)


def make_full_bias(rel_bias):
    """Fold shift + window partition + rel-pos bias + SW-MSA mask into a single
    (NUM_HEADS, L, L) additive tensor in ORIGINAL token order.

    For tokens i, j of the same shifted window:
        bias[h, i, j] = rel_bias[h, p(i), p(j)] + (0 or -100 SW-MSA mask)
    For tokens in different shifted windows:
        bias[h, i, j] = -1e9   (exp underflows to exactly 0 -> excluded)
    """
    hh, ww = np.meshgrid(np.arange(H), np.arange(W), indexing="ij")
    hp = (hh - SHIFT) % H                 # coords after torch.roll(x, -SHIFT)
    wp = (ww - SHIFT) % W
    win_tok = ((hp // WIN) * (W // WIN) + (wp // WIN)).reshape(L)
    pos_tok = ((hp % WIN) * WIN + (wp % WIN)).reshape(L)

    # 9-region SW-MSA labels (same slicing as the PyTorch code), evaluated at
    # the shifted coordinate of each original token.
    reg = np.zeros((H, W), np.int64)
    if SHIFT > 0:
        cnt = 0
        for hs in (slice(0, -WIN), slice(-WIN, -SHIFT), slice(-SHIFT, None)):
            for wss in (slice(0, -WIN), slice(-WIN, -SHIFT), slice(-SHIFT, None)):
                reg[hs, wss] = cnt
                cnt += 1
    reg_tok = reg[hp, wp].reshape(L)

    same_win = win_tok[:, None] == win_tok[None, :]
    same_reg = reg_tok[:, None] == reg_tok[None, :]
    mask = np.where(same_win, np.where(same_reg, 0.0, -100.0), -1e9)
    mask = mask.astype(np.float32)                                   # (L, L)

    rel = np.asarray(rel_bias)                                       # (nh, N, N)
    rel_full = rel[:, pos_tok][:, :, pos_tok]                        # (nh, L, L)
    return jnp.asarray(rel_full + mask[None], jnp.float32)


def fold_params(p):
    """One-off host-side algebraic folds (zero runtime cost in the kernel):
       * norm1 affine (g1, b1) and the q SCALE fold into wqkv / bqkv,
       * norm2 affine (g2, b2) folds into w1 / bb1,
       * fused attention bias is shipped in bf16 (exactly representable
         sentinels; additive pre-softmax, so accuracy impact is negligible)."""
    f32 = jnp.float32
    wqkv_f = p["g1"][0][:, None] * p["wqkv"]                 # diag(g1) @ Wqkv
    bqkv_f = p["bqkv"] + p["b1"] @ p["wqkv"]                 # b1 @ Wqkv + bqkv
    col_scale = jnp.concatenate([jnp.full((DIM,), SCALE, f32),
                                 jnp.ones((2 * DIM,), f32)])  # scale Q columns only
    wqkv_f = wqkv_f * col_scale[None, :]
    bqkv_f = bqkv_f * col_scale[None, :]

    w1_f = p["g2"][0][:, None] * p["w1"]                     # diag(g2) @ W1
    bb1_f = p["bb1"] + p["b2"] @ p["w1"]                     # b2 @ W1 + bb1

    bias = make_full_bias(p["rel_bias"]).astype(jnp.bfloat16)  # (nh, L, L) bf16
    return dict(bias=bias, wqkv=wqkv_f, bqkv=bqkv_f,
                wproj=p["wproj"], bproj=p["bproj"],
                w1=w1_f, bb1=bb1_f, w2=p["w2"], bb2=p["bb2"])


# ----------------------------- fused Pallas kernel ---------------------------
def _swin_block_kernel(x_ref, bias_ref, wqkv_ref, bqkv_ref, wproj_ref,
                       bproj_ref, w1_ref, bb1_ref, w2_ref, bb2_ref,
                       o_ref, attn_scr):
    # x_ref: (B*L, C) — all tokens of the whole batch, original token order.
    x = x_ref[...].astype(jnp.float32)                               # (BL, C)

    # ---- norm1 (raw; the affine was folded into wqkv/bqkv host-side) + QKV
    #      for every token of the batch in one MXU matmul: (BL,C)@(C,3C).
    mean = jnp.mean(x, axis=-1, keepdims=True)
    var = jnp.mean(jnp.square(x - mean), axis=-1, keepdims=True)
    xn = (x - mean) * jax.lax.rsqrt(var + EPS)
    qkv = jnp.dot(xn, wqkv_ref[...],
                  preferred_element_type=jnp.float32) + bqkv_ref[0]  # (BL, 3C)

    # ---- shifted-window multi-head attention.  The shifted-window structure
    #      lives entirely in bias_ref (bf16, upcast here), so no roll /
    #      partition / reverse / concatenate is needed.  Each head writes its
    #      (L, 8) output into its 8-lane slot of the (BL, C) scratch slab;
    #      the output projection is then ONE (BL,32)@(32,32) matmul instead of
    #      four K=8 skinny matmuls per image.
    for h in range(NUM_HEADS):
        lo = h * HEAD_DIM
        bias_h = bias_ref[h].astype(jnp.float32)                      # (L, L)
        for b in range(B):
            r0 = b * L
            q = qkv[r0:r0 + L, lo:lo + HEAD_DIM]                      # SCALE folded in
            k = qkv[r0:r0 + L, DIM + lo:DIM + lo + HEAD_DIM]
            v = qkv[r0:r0 + L, 2 * DIM + lo:2 * DIM + lo + HEAD_DIM]
            s = jax.lax.dot_general(q, k, (((1,), (1,)), ((), ())),
                                    preferred_element_type=jnp.float32)  # (L, L)
            s = s + bias_h
            s = s - jnp.max(s, axis=-1, keepdims=True)
            p = jnp.exp(s)                                            # 0 off-window
            p = p / jnp.sum(p, axis=-1, keepdims=True)                # exact divide
            attn_scr[r0:r0 + L, lo:lo + HEAD_DIM] = jnp.dot(
                p, v, preferred_element_type=jnp.float32)             # (L, hd)

    attn_out = jnp.dot(attn_scr[...], wproj_ref[...],
                       preferred_element_type=jnp.float32) + bproj_ref[0]

    # ---- residual + norm2 (raw; affine folded into w1/bb1) + MLP (GELU) + residual
    x1 = x + attn_out
    mean2 = jnp.mean(x1, axis=-1, keepdims=True)
    var2 = jnp.mean(jnp.square(x1 - mean2), axis=-1, keepdims=True)
    x2n = (x1 - mean2) * jax.lax.rsqrt(var2 + EPS)
    hid = jnp.dot(x2n, w1_ref[...],
                  preferred_element_type=jnp.float32) + bb1_ref[0]    # (BL, HIDDEN)
    hid = 0.5 * hid * (1.0 + jax.lax.erf(hid * (1.0 / math.sqrt(2.0))))
    y = jnp.dot(hid, w2_ref[...],
                preferred_element_type=jnp.float32) + bb2_ref[0]      # (BL, C)

    o_ref[...] = (x1 + y).astype(o_ref.dtype)


# Advisory cost hint so XLA can overlap surrounding HLO with this tiny call.
_COST = pl.CostEstimate(
    flops=2 * B * (L * DIM * 3 * DIM                       # qkv
                   + 2 * NUM_HEADS * L * L * HEAD_DIM      # scores + attn@v
                   + L * DIM * DIM                         # output projection
                   + 2 * L * DIM * HIDDEN),                # fc1 + fc2
    transcendentals=B * (NUM_HEADS * L * L + L * HIDDEN),  # softmax exp + gelu erf
    bytes_accessed=(2 * BL * DIM * 4                       # x in + out (f32)
                    + NUM_HEADS * L * L * 2                # fused bias (bf16)
                    + 4 * (DIM * 3 * DIM + 3 * DIM + DIM * DIM + DIM
                           + DIM * HIDDEN + HIDDEN + HIDDEN * DIM + DIM)),
)


def swin_block_forward(x, p):
    """x: (B, L, C).  Single pallas_call, single grid step: the batch is folded
    into the M dimension of every dense op (best for single-TC v5e/v6e).
    VMEM working set is ~220 KB — far below every generation's limit."""
    z2 = lambda i: (0, 0)
    z3 = lambda i: (0, 0, 0)
    out2d = pl.pallas_call(
        _swin_block_kernel,
        out_shape=jax.ShapeDtypeStruct((BL, DIM), x.dtype),
        grid=(1,),
        in_specs=[
            pl.BlockSpec((BL, DIM), z2),                    # x (batch folded into M)
            pl.BlockSpec((NUM_HEADS, L, L), z3),            # fused bias (bf16)
            pl.BlockSpec((DIM, 3 * DIM), z2),               # qkv weight (folded)
            pl.BlockSpec((1, 3 * DIM), z2),                 # qkv bias   (folded)
            pl.BlockSpec((DIM, DIM), z2),                   # proj weight
            pl.BlockSpec((1, DIM), z2),                     # proj bias
            pl.BlockSpec((DIM, HIDDEN), z2),                # fc1 weight (folded)
            pl.BlockSpec((1, HIDDEN), z2),                  # fc1 bias   (folded)
            pl.BlockSpec((HIDDEN, DIM), z2),                # fc2 weight
            pl.BlockSpec((1, DIM), z2),                     # fc2 bias
        ],
        out_specs=pl.BlockSpec((BL, DIM), z2),
        scratch_shapes=[pltpu.VMEM((BL, DIM), jnp.float32)],  # per-head output slab
        compiler_params=pltpu.CompilerParams(
            dimension_semantics=("arbitrary",)),
        cost_estimate=_COST,
    )(x.reshape(BL, DIM), p["bias"], p["wqkv"], p["bqkv"], p["wproj"],
      p["bproj"], p["w1"], p["bb1"], p["w2"], p["bb2"])
    return out2d.reshape(B, L, DIM)


# ----------------------------- pure-JAX reference ----------------------------
def _layernorm(x, g, b):
    mean = jnp.mean(x, axis=-1, keepdims=True)
    var = jnp.mean(jnp.square(x - mean), axis=-1, keepdims=True)
    return (x - mean) * jax.lax.rsqrt(var + EPS) * g[0] + b[0]


def reference_forward(x, p):
    shortcut = x
    xn = _layernorm(x, p["g1"], p["b1"])
    x_img = xn.reshape(B, H, W, DIM)
    x_img = jnp.roll(x_img, shift=(-SHIFT, -SHIFT), axis=(1, 2))
    xw = window_partition(x_img, WIN).reshape(-1, N, DIM)          # (B*nW, N, C)
    bw = xw.shape[0]

    qkv = xw @ p["wqkv"] + p["bqkv"][0]                            # (B*nW, N, 3C)
    qkv = qkv.reshape(bw, N, 3, NUM_HEADS, HEAD_DIM).transpose(2, 0, 3, 1, 4)
    q, k, v = qkv[0], qkv[1], qkv[2]                               # (B*nW, nh, N, hd)
    attn = (q * SCALE) @ k.transpose(0, 1, 3, 2)                   # (B*nW, nh, N, N)
    attn = attn + p["rel_bias"][None]
    attn = attn.reshape(B, NW, NUM_HEADS, N, N) + p["attn_mask"][None, :, None]
    attn = attn.reshape(bw, NUM_HEADS, N, N)
    attn = jax.nn.softmax(attn, axis=-1)
    out = (attn @ v).transpose(0, 2, 1, 3).reshape(bw, N, DIM)
    out = out @ p["wproj"] + p["bproj"][0]

    out = window_reverse(out.reshape(-1, WIN, WIN, DIM), WIN, H, W)
    out = jnp.roll(out, shift=(SHIFT, SHIFT), axis=(1, 2)).reshape(B, L, DIM)

    x1 = shortcut + out
    y = _layernorm(x1, p["g2"], p["b2"])
    h = y @ p["w1"] + p["bb1"][0]
    h = 0.5 * h * (1.0 + jax.lax.erf(h / math.sqrt(2.0)))
    return x1 + h @ p["w2"] + p["bb2"][0]


# ----------------------------- main ------------------------------------------
if __name__ == "__main__":
    key = jax.random.PRNGKey(0)
    ks = jax.random.split(key, 16)
    f32 = jnp.float32

    # deterministic synthetic parameters (shapes from the module __init__);
    # LayerNorm affines are non-trivial so the host-side weight folds are
    # actually exercised against the unfolded reference.
    rel_table = 0.02 * jax.random.normal(ks[0], ((2 * WIN - 1) * (2 * WIN - 1),
                                                 NUM_HEADS), f32)
    rel_idx = get_relative_position_index(WIN, WIN)                 # (N, N)
    rel_bias = rel_table[rel_idx.reshape(-1)].reshape(N, N, NUM_HEADS)
    rel_bias = rel_bias.transpose(2, 0, 1)                          # (nh, N, N)

    params = dict(
        rel_bias=rel_bias,
        attn_mask=make_attn_mask(),
        g1=1.0 + 0.1 * jax.random.normal(ks[10], (1, DIM), f32),
        b1=0.05 * jax.random.normal(ks[11], (1, DIM), f32),
        wqkv=0.05 * jax.random.normal(ks[1], (DIM, 3 * DIM), f32),
        bqkv=0.01 * jax.random.normal(ks[2], (1, 3 * DIM), f32),
        wproj=0.05 * jax.random.normal(ks[3], (DIM, DIM), f32),
        bproj=0.01 * jax.random.normal(ks[4], (1, DIM), f32),
        g2=1.0 + 0.1 * jax.random.normal(ks[12], (1, DIM), f32),
        b2=0.05 * jax.random.normal(ks[13], (1, DIM), f32),
        w1=0.05 * jax.random.normal(ks[5], (DIM, HIDDEN), f32),
        bb1=0.01 * jax.random.normal(ks[6], (1, HIDDEN), f32),
        w2=0.05 * jax.random.normal(ks[7], (HIDDEN, DIM), f32),
        bb2=0.01 * jax.random.normal(ks[8], (1, DIM), f32),
    )
    kparams = fold_params(params)      # host-side, one-off

    x = jax.random.normal(ks[9], (B, L, DIM), f32)

    out = jax.jit(swin_block_forward)(x, kparams)
    out = jax.block_until_ready(out)

    ref = jax.block_until_ready(reference_forward(x, params))
    # softmax now uses an exact divide; the only approximation left is the
    # bf16 fused attention bias, whose additive pre-softmax error is ~1e-4.
    np.testing.assert_allclose(np.asarray(out), np.asarray(ref),
                               rtol=2e-3, atol=2e-3)
    print("KERNEL_OK")
</pallas_src>

<mosaic_0001>
module attributes {stable_mosaic.version = 11 : i64} {
  func.func @_swin_block_kernel(%arg0: i32, %arg1: memref<128x32xf32, #tpu.memory_space<vmem>>, %arg2: memref<4x64x64xbf16, #tpu.memory_space<vmem>>, %arg3: memref<32x96xf32, #tpu.memory_space<vmem>>, %arg4: memref<1x96xf32, #tpu.memory_space<vmem>>, %arg5: memref<32x32xf32, #tpu.memory_space<vmem>>, %arg6: memref<1x32xf32, #tpu.memory_space<vmem>>, %arg7: memref<32x128xf32, #tpu.memory_space<vmem>>, %arg8: memref<1x128xf32, #tpu.memory_space<vmem>>, %arg9: memref<128x32xf32, #tpu.memory_space<vmem>>, %arg10: memref<1x32xf32, #tpu.memory_space<vmem>>, %arg11: memref<128x32xf32, #tpu.memory_space<vmem>>, %arg12: memref<128x32xf32, #tpu.memory_space<vmem>>) attributes {dimension_semantics = [#tpu.dimension_semantics<arbitrary>], iteration_bounds = array<i64: 1>, scalar_prefetch = 0 : i64, scratch_operands = 1 : i64, tpu.core_type = #tpu.core_type<tc>, window_params = [{pipeline_mode = #tpu.pipeline_mode<synchronous>, transform_indices = @transform_0, window_bounds = array<i64: 128, 32>}, {pipeline_mode = #tpu.pipeline_mode<synchronous>, transform_indices = @transform_1, window_bounds = array<i64: 4, 64, 64>}, {pipeline_mode = #tpu.pipeline_mode<synchronous>, transform_indices = @transform_2, window_bounds = array<i64: 32, 96>}, {pipeline_mode = #tpu.pipeline_mode<synchronous>, transform_indices = @transform_3, window_bounds = array<i64: 1, 96>}, {pipeline_mode = #tpu.pipeline_mode<synchronous>, transform_indices = @transform_4, window_bounds = array<i64: 32, 32>}, {pipeline_mode = #tpu.pipeline_mode<synchronous>, transform_indices = @transform_5, window_bounds = array<i64: 1, 32>}, {pipeline_mode = #tpu.pipeline_mode<synchronous>, transform_indices = @transform_6, window_bounds = array<i64: 32, 128>}, {pipeline_mode = #tpu.pipeline_mode<synchronous>, transform_indices = @transform_7, window_bounds = array<i64: 1, 128>}, {pipeline_mode = #tpu.pipeline_mode<synchronous>, transform_indices = @transform_8, window_bounds = array<i64: 128, 32>}, {pipeline_mode = #tpu.pipeline_mode<synchronous>, transform_indices = @transform_9, window_bounds = array<i64: 1, 32>}, {pipeline_mode = #tpu.pipeline_mode<synchronous>, transform_indices = @transform_10, window_bounds = array<i64: 128, 32>}]} {
    %c0 = arith.constant 0 : index
    %c0_0 = arith.constant 0 : index
    %0 = vector.load %arg1[%c0, %c0_0] : memref<128x32xf32, #tpu.memory_space<vmem>>, vector<128x32xf32>
    %cst = arith.constant dense<0.000000e+00> : vector<128xf32>
    %1 = vector.multi_reduction <add>, %0, %cst [1] : vector<128x32xf32> to vector<128xf32>
    %2 = vector.shape_cast %1 : vector<128xf32> to vector<128x1xf32>
    %cst_1 = arith.constant 3.200000e+01 : f32
    %3 = vector.broadcast %cst_1 : f32 to vector<128x1xf32>
    %4 = arith.divf %2, %3 : vector<128x1xf32>
    %5 = vector.broadcast %4 : vector<128x1xf32> to vector<128x32xf32>
    %6 = arith.subf %0, %5 : vector<128x32xf32>
    %7 = arith.mulf %6, %6 : vector<128x32xf32>
    %cst_2 = arith.constant dense<0.000000e+00> : vector<128xf32>
    %8 = vector.multi_reduction <add>, %7, %cst_2 [1] : vector<128x32xf32> to vector<128xf32>
    %9 = vector.shape_cast %8 : vector<128xf32> to vector<128x1xf32>
    %cst_3 = arith.constant 3.200000e+01 : f32
    %10 = vector.broadcast %cst_3 : f32 to vector<128x1xf32>
    %11 = arith.divf %9, %10 : vector<128x1xf32>
    %12 = vector.broadcast %4 : vector<128x1xf32> to vector<128x32xf32>
    %13 = arith.subf %0, %12 : vector<128x32xf32>
    %cst_4 = arith.constant 9.99999974E-6 : f32
    %14 = vector.broadcast %cst_4 : f32 to vector<128x1xf32>
    %15 = arith.addf %11, %14 : vector<128x1xf32>
    %16 = math.rsqrt %15 : vector<128x1xf32>
    %17 = vector.broadcast %16 : vector<128x1xf32> to vector<128x32xf32>
    %18 = arith.mulf %13, %17 : vector<128x32xf32>
    %c0_5 = arith.constant 0 : index
    %c0_6 = arith.constant 0 : index
    %19 = vector.load %arg3[%c0_5, %c0_6] : memref<32x96xf32, #tpu.memory_space<vmem>>, vector<32x96xf32>
    %cst_7 = arith.constant dense<0.000000e+00> : vector<128x96xf32>
    %20 = tpu.matmul %18, %19, %cst_7 {dimension_numbers = #tpu.dot_dimension_numbers<[1], [0], [0], [1], [0, 0, 1, 1], [], []>} : vector<128x32xf32>, vector<32x96xf32>, vector<128x96xf32> -> vector<128x96xf32>
    %c0_8 = arith.constant 0 : index
    %c0_9 = arith.constant 0 : index
    %21 = vector.load %arg4[%c0_8, %c0_9] : memref<1x96xf32, #tpu.memory_space<vmem>>, vector<1x96xf32>
    %22 = vector.shape_cast %21 : vector<1x96xf32> to vector<96xf32>
    %23 = vector.shape_cast %22 : vector<96xf32> to vector<1x96xf32>
    %24 = vector.broadcast %23 : vector<1x96xf32> to vector<128x96xf32>
    %25 = arith.addf %20, %24 : vector<128x96xf32>
    %c0_10 = arith.constant 0 : index
    %c0_11 = arith.constant 0 : index
    %c0_12 = arith.constant 0 : index
    %26 = vector.load %arg2[%c0_10, %c0_11, %c0_12] : memref<4x64x64xbf16, #tpu.memory_space<vmem>>, vector<1x64x64xbf16>
    %27 = vector.shape_cast %26 : vector<1x64x64xbf16> to vector<64x64xbf16>
    %28 = arith.extf %27 : vector<64x64xbf16> to vector<64x64xf32>
    %29 = vector.extract_strided_slice %25 {offsets = [0, 0], sizes = [64, 8], strides = [1, 1]} : vector<128x96xf32> to vector<64x8xf32>
    %30 = vector.extract_strided_slice %25 {offsets = [0, 32], sizes = [64, 8], strides = [1, 1]} : vector<128x96xf32> to vector<64x8xf32>
    %31 = vector.extract_strided_slice %25 {offsets = [0, 64], sizes = [64, 8], strides = [1, 1]} : vector<128x96xf32> to vector<64x8xf32>
    %cst_13 = arith.constant dense<0.000000e+00> : vector<64x64xf32>
    %32 = tpu.matmul %29, %30, %cst_13 {dimension_numbers = #tpu.dot_dimension_numbers<[1], [1], [0], [0], [0, 0, 1, 0], [], []>} : vector<64x8xf32>, vector<64x8xf32>, vector<64x64xf32> -> vector<64x64xf32>
    %33 = arith.addf %32, %28 : vector<64x64xf32>
    %cst_14 = arith.constant dense<0xFF800000> : vector<64xf32>
    %34 = vector.multi_reduction <maximumf>, %33, %cst_14 [1] : vector<64x64xf32> to vector<64xf32>
    %35 = vector.shape_cast %34 : vector<64xf32> to vector<64x1xf32>
    %36 = vector.broadcast %35 : vector<64x1xf32> to vector<64x64xf32>
    %37 = arith.subf %33, %36 : vector<64x64xf32>
    %38 = math.exp %37 : vector<64x64xf32>
    %cst_15 = arith.constant dense<0.000000e+00> : vector<64xf32>
    %39 = vector.multi_reduction <add>, %38, %cst_15 [1] : vector<64x64xf32> to vector<64xf32>
    %40 = vector.shape_cast %39 : vector<64xf32> to vector<64x1xf32>
    %41 = vector.broadcast %40 : vector<64x1xf32> to vector<64x64xf32>
    %42 = arith.divf %38, %41 : vector<64x64xf32>
    %cst_16 = arith.constant dense<0.000000e+00> : vector<64x8xf32>
    %43 = tpu.matmul %42, %31, %cst_16 {dimension_numbers = #tpu.dot_dimension_numbers<[1], [0], [0], [1], [0, 0, 1, 1], [], []>} : vector<64x64xf32>, vector<64x8xf32>, vector<64x8xf32> -> vector<64x8xf32>
    %c0_17 = arith.constant 0 : index
    %c0_18 = arith.constant 0 : index
    %44 = vector.load %arg12[%c0_17, %c0_18] : memref<128x32xf32, #tpu.memory_space<vmem>>, vector<64x8xf32>
    tpu.vector_store %arg12[%c0_17, %c0_18], %43 {strides = array<i32>} : memref<128x32xf32, #tpu.memory_space<vmem>>, vector<64x8xf32>,
    %45 = vector.extract_strided_slice %25 {offsets = [64, 0], sizes = [64, 8], strides = [1, 1]} : vector<128x96xf32> to vector<64x8xf32>
    %46 = vector.extract_strided_slice %25 {offsets = [64, 32], sizes = [64, 8], strides = [1, 1]} : vector<128x96xf32> to vector<64x8xf32>
    %47 = vector.extract_strided_slice %25 {offsets = [64, 64], sizes = [64, 8], strides = [1, 1]} : vector<128x96xf32> to vector<64x8xf32>
    %cst_19 = arith.constant dense<0.000000e+00> : vector<64x64xf32>
    %48 = tpu.matmul %45, %46, %cst_19 {dimension_numbers = #tpu.dot_dimension_numbers<[1], [1], [0], [0], [0, 0, 1, 0], [], []>} : vector<64x8xf32>, vector<64x8xf32>, vector<64x64xf32> -> vector<64x64xf32>
    %49 = arith.addf %48, %28 : vector<64x64xf32>
    %cst_20 = arith.constant dense<0xFF800000> : vector<64xf32>
    %50 = vector.multi_reduction <maximumf>, %49, %cst_20 [1] : vector<64x64xf32> to vector<64xf32>
    %51 = vector.shape_cast %50 : vector<64xf32> to vector<64x1xf32>
    %52 = vector.broadcast %51 : vector<64x1xf32> to vector<64x64xf32>
    %53 = arith.subf %49, %52 : vector<64x64xf32>
    %54 = math.exp %53 : vector<64x64xf32>
    %cst_21 = arith.constant dense<0.000000e+00> : vector<64xf32>
    %55 = vector.multi_reduction <add>, %54, %cst_21 [1] : vector<64x64xf32> to vector<64xf32>
    %56 = vector.shape_cast %55 : vector<64xf32> to vector<64x1xf32>
    %57 = vector.broadcast %56 : vector<64x1xf32> to vector<64x64xf32>
    %58 = arith.divf %54, %57 : vector<64x64xf32>
    %cst_22 = arith.constant dense<0.000000e+00> : vector<64x8xf32>
    %59 = tpu.matmul %58, %47, %cst_22 {dimension_numbers = #tpu.dot_dimension_numbers<[1], [0], [0], [1], [0, 0, 1, 1], [], []>} : vector<64x64xf32>, vector<64x8xf32>, vector<64x8xf32> -> vector<64x8xf32>
    %c64 = arith.constant 64 : index
    %c0_23 = arith.constant 0 : index
    %60 = vector.load %arg12[%c64, %c0_23] : memref<128x32xf32, #tpu.memory_space<vmem>>, vector<64x8xf32>
    tpu.vector_store %arg12[%c64, %c0_23], %59 {strides = array<i32>} : memref<128x32xf32, #tpu.memory_space<vmem>>, vector<64x8xf32>,
    %c1 = arith.constant 1 : index
    %c0_24 = arith.constant 0 : index
    %c0_25 = arith.constant 0 : index
    %61 = vector.load %arg2[%c1, %c0_24, %c0_25] : memref<4x64x64xbf16, #tpu.memory_space<vmem>>, vector<1x64x64xbf16>
    %62 = vector.shape_cast %61 : vector<1x64x64xbf16> to vector<64x64xbf16>
    %63 = arith.extf %62 : vector<64x64xbf16> to vector<64x64xf32>
    %64 = vector.extract_strided_slice %25 {offsets = [0, 8], sizes = [64, 8], strides = [1, 1]} : vector<128x96xf32> to vector<64x8xf32>
    %65 = vector.extract_strided_slice %25 {offsets = [0, 40], sizes = [64, 8], strides = [1, 1]} : vector<128x96xf32> to vector<64x8xf32>
    %66 = vector.extract_strided_slice %25 {offsets = [0, 72], sizes = [64, 8], strides = [1, 1]} : vector<128x96xf32> to vector<64x8xf32>
    %cst_26 = arith.constant dense<0.000000e+00> : vector<64x64xf32>
    %67 = tpu.matmul %64, %65, %cst_26 {dimension_numbers = #tpu.dot_dimension_numbers<[1], [1], [0], [0], [0, 0, 1, 0], [], []>} : vector<64x8xf32>, vector<64x8xf32>, vector<64x64xf32> -> vector<64x64xf32>
    %68 = arith.addf %67, %63 : vector<64x64xf32>
    %cst_27 = arith.constant dense<0xFF800000> : vector<64xf32>
    %69 = vector.multi_reduction <maximumf>, %68, %cst_27 [1] : vector<64x64xf32> to vector<64xf32>
    %70 = vector.shape_cast %69 : vector<64xf32> to vector<64x1xf32>
    %71 = vector.broadcast %70 : vector<64x1xf32> to vector<64x64xf32>
    %72 = arith.subf %68, %71 : vector<64x64xf32>
    %73 = math.exp %72 : vector<64x64xf32>
    %cst_28 = arith.constant dense<0.000000e+00> : vector<64xf32>
    %74 = vector.multi_reduction <add>, %73, %cst_28 [1] : vector<64x64xf32> to vector<64xf32>
    %75 = vector.shape_cast %74 : vector<64xf32> to vector<64x1xf32>
    %76 = vector.broadcast %75 : vector<64x1xf32> to vector<64x64xf32>
    %77 = arith.divf %73, %76 : vector<64x64xf32>
    %cst_29 = arith.constant dense<0.000000e+00> : vector<64x8xf32>
    %78 = tpu.matmul %77, %66, %cst_29 {dimension_numbers = #tpu.dot_dimension_numbers<[1], [0], [0], [1], [0, 0, 1, 1], [], []>} : vector<64x64xf32>, vector<64x8xf32>, vector<64x8xf32> -> vector<64x8xf32>
    %c0_30 = arith.constant 0 : index
    %c8 = arith.constant 8 : index
    %79 = vector.load %arg12[%c0_30, %c8] : memref<128x32xf32, #tpu.memory_space<vmem>>, vector<64x8xf32>
    tpu.vector_store %arg12[%c0_30, %c8], %78 {strides = array<i32>} : memref<128x32xf32, #tpu.memory_space<vmem>>, vector<64x8xf32>,
    %80 = vector.extract_strided_slice %25 {offsets = [64, 8], sizes = [64, 8], strides = [1, 1]} : vector<128x96xf32> to vector<64x8xf32>
    %81 = vector.extract_strided_slice %25 {offsets = [64, 40], sizes = [64, 8], strides = [1, 1]} : vector<128x96xf32> to vector<64x8xf32>
    %82 = vector.extract_strided_slice %25 {offsets = [64, 72], sizes = [64, 8], strides = [1, 1]} : vector<128x96xf32> to vector<64x8xf32>
    %cst_31 = arith.constant dense<0.000000e+00> : vector<64x64xf32>
    %83 = tpu.matmul %80, %81, %cst_31 {dimension_numbers = #tpu.dot_dimension_numbers<[1], [1], [0], [0], [0, 0, 1, 0], [], []>} : vector<64x8xf32>, vector<64x8xf32>, vector<64x64xf32> -> vector<64x64xf32>
    %84 = arith.addf %83, %63 : vector<64x64xf32>
    %cst_32 = arith.constant dense<0xFF800000> : vector<64xf32>
    %85 = vector.multi_reduction <maximumf>, %84, %cst_32 [1] : vector<64x64xf32> to vector<64xf32>
    %86 = vector.shape_cast %85 : vector<64xf32> to vector<64x1xf32>
    %87 = vector.broadcast %86 : vector<64x1xf32> to vector<64x64xf32>
    %88 = arith.subf %84, %87 : vector<64x64xf32>
    %89 = math.exp %88 : vector<64x64xf32>
    %cst_33 = arith.constant dense<0.000000e+00> : vector<64xf32>
    %90 = vector.multi_reduction <add>, %89, %cst_33 [1] : vector<64x64xf32> to vector<64xf32>
    %91 = vector.shape_cast %90 : vector<64xf32> to vector<64x1xf32>
    %92 = vector.broadcast %91 : vector<64x1xf32> to vector<64x64xf32>
    %93 = arith.divf %89, %92 : vector<64x64xf32>
    %cst_34 = arith.constant dense<0.000000e+00> : vector<64x8xf32>
    %94 = tpu.matmul %93, %82, %cst_34 {dimension_numbers = #tpu.dot_dimension_numbers<[1], [0], [0], [1], [0, 0, 1, 1], [], []>} : vector<64x64xf32>, vector<64x8xf32>, vector<64x8xf32> -> vector<64x8xf32>
    %c64_35 = arith.constant 64 : index
    %c8_36 = arith.constant 8 : index
    %95 = vector.load %arg12[%c64_35, %c8_36] : memref<128x32xf32, #tpu.memory_space<vmem>>, vector<64x8xf32>
    tpu.vector_store %arg12[%c64_35, %c8_36], %94 {strides = array<i32>} : memref<128x32xf32, #tpu.memory_space<vmem>>, vector<64x8xf32>,
    %c2 = arith.constant 2 : index
    %c0_37 = arith.constant 0 : index
    %c0_38 = arith.constant 0 : index
    %96 = vector.load %arg2[%c2, %c0_37, %c0_38] : memref<4x64x64xbf16, #tpu.memory_space<vmem>>, vector<1x64x64xbf16>
    %97 = vector.shape_cast %96 : vector<1x64x64xbf16> to vector<64x64xbf16>
    %98 = arith.extf %97 : vector<64x64xbf16> to vector<64x64xf32>
    %99 = vector.extract_strided_slice %25 {offsets = [0, 16], sizes = [64, 8], strides = [1, 1]} : vector<128x96xf32> to vector<64x8xf32>
    %100 = vector.extract_strided_slice %25 {offsets = [0, 48], sizes = [64, 8], strides = [1, 1]} : vector<128x96xf32> to vector<64x8xf32>
    %101 = vector.extract_strided_slice %25 {offsets = [0, 80], sizes = [64, 8], strides = [1, 1]} : vector<128x96xf32> to vector<64x8xf32>
    %cst_39 = arith.constant dense<0.000000e+00> : vector<64x64xf32>
    %102 = tpu.matmul %99, %100, %cst_39 {dimension_numbers = #tpu.dot_dimension_numbers<[1], [1], [0], [0], [0, 0, 1, 0], [], []>} : vector<64x8xf32>, vector<64x8xf32>, vector<64x64xf32> -> vector<64x64xf32>
    %103 = arith.addf %102, %98 : vector<64x64xf32>
    %cst_40 = arith.constant dense<0xFF800000> : vector<64xf32>
    %104 = vector.multi_reduction <maximumf>, %103, %cst_40 [1] : vector<64x64xf32> to vector<64xf32>
    %105 = vector.shape_cast %104 : vector<64xf32> to vector<64x1xf32>
    %106 = vector.broadcast %105 : vector<64x1xf32> to vector<64x64xf32>
    %107 = arith.subf %103, %106 : vector<64x64xf32>
    %108 = math.exp %107 : vector<64x64xf32>
    %cst_41 = arith.constant dense<0.000000e+00> : vector<64xf32>
    %109 = vector.multi_reduction <add>, %108, %cst_41 [1] : vector<64x64xf32> to vector<64xf32>
    %110 = vector.shape_cast %109 : vector<64xf32> to vector<64x1xf32>
    %111 = vector.broadcast %110 : vector<64x1xf32> to vector<64x64xf32>
    %112 = arith.divf %108, %111 : vector<64x64xf32>
    %cst_42 = arith.constant dense<0.000000e+00> : vector<64x8xf32>
    %113 = tpu.matmul %112, %101, %cst_42 {dimension_numbers = #tpu.dot_dimension_numbers<[1], [0], [0], [1], [0, 0, 1, 1], [], []>} : vector<64x64xf32>, vector<64x8xf32>, vector<64x8xf32> -> vector<64x8xf32>
    %c0_43 = arith.constant 0 : index
    %c16 = arith.constant 16 : index
    %114 = vector.load %arg12[%c0_43, %c16] : memref<128x32xf32, #tpu.memory_space<vmem>>, vector<64x8xf32>
    tpu.vector_store %arg12[%c0_43, %c16], %113 {strides = array<i32>} : memref<128x32xf32, #tpu.memory_space<vmem>>, vector<64x8xf32>,
    %115 = vector.extract_strided_slice %25 {offsets = [64, 16], sizes = [64, 8], strides = [1, 1]} : vector<128x96xf32> to vector<64x8xf32>
    %116 = vector.extract_strided_slice %25 {offsets = [64, 48], sizes = [64, 8], strides = [1, 1]} : vector<128x96xf32> to vector<64x8xf32>
    %117 = vector.extract_strided_slice %25 {offsets = [64, 80], sizes = [64, 8], strides = [1, 1]} : vector<128x96xf32> to vector<64x8xf32>
    %cst_44 = arith.constant dense<0.000000e+00> : vector<64x64xf32>
    %118 = tpu.matmul %115, %116, %cst_44 {dimension_numbers = #tpu.dot_dimension_numbers<[1], [1], [0], [0], [0, 0, 1, 0], [], []>} : vector<64x8xf32>, vector<64x8xf32>, vector<64x64xf32> -> vector<64x64xf32>
    %119 = arith.addf %118, %98 : vector<64x64xf32>
    %cst_45 = arith.constant dense<0xFF800000> : vector<64xf32>
    %120 = vector.multi_reduction <maximumf>, %119, %cst_45 [1] : vector<64x64xf32> to vector<64xf32>
    %121 = vector.shape_cast %120 : vector<64xf32> to vector<64x1xf32>
    %122 = vector.broadcast %121 : vector<64x1xf32> to vector<64x64xf32>
    %123 = arith.subf %119, %122 : vector<64x64xf32>
    %124 = math.exp %123 : vector<64x64xf32>
    %cst_46 = arith.constant dense<0.000000e+00> : vector<64xf32>
    %125 = vector.multi_reduction <add>, %124, %cst_46 [1] : vector<64x64xf32> to vector<64xf32>
    %126 = vector.shape_cast %125 : vector<64xf32> to vector<64x1xf32>
    %127 = vector.broadcast %126 : vector<64x1xf32> to vector<64x64xf32>
    %128 = arith.divf %124, %127 : vector<64x64xf32>
    %cst_47 = arith.constant dense<0.000000e+00> : vector<64x8xf32>
    %129 = tpu.matmul %128, %117, %cst_47 {dimension_numbers = #tpu.dot_dimension_numbers<[1], [0], [0], [1], [0, 0, 1, 1], [], []>} : vector<64x64xf32>, vector<64x8xf32>, vector<64x8xf32> -> vector<64x8xf32>
    %c64_48 = arith.constant 64 : index
    %c16_49 = arith.constant 16 : index
    %130 = vector.load %arg12[%c64_48, %c16_49] : memref<128x32xf32, #tpu.memory_space<vmem>>, vector<64x8xf32>
    tpu.vector_store %arg12[%c64_48, %c16_49], %129 {strides = array<i32>} : memref<128x32xf32, #tpu.memory_space<vmem>>, vector<64x8xf32>,
    %c3 = arith.constant 3 : index
    %c0_50 = arith.constant 0 : index
    %c0_51 = arith.constant 0 : index
    %131 = vector.load %arg2[%c3, %c0_50, %c0_51] : memref<4x64x64xbf16, #tpu.memory_space<vmem>>, vector<1x64x64xbf16>
    %132 = vector.shape_cast %131 : vector<1x64x64xbf16> to vector<64x64xbf16>
    %133 = arith.extf %132 : vector<64x64xbf16> to vector<64x64xf32>
    %134 = vector.extract_strided_slice %25 {offsets = [0, 24], sizes = [64, 8], strides = [1, 1]} : vector<128x96xf32> to vector<64x8xf32>
    %135 = vector.extract_strided_slice %25 {offsets = [0, 56], sizes = [64, 8], strides = [1, 1]} : vector<128x96xf32> to vector<64x8xf32>
    %136 = vector.extract_strided_slice %25 {offsets = [0, 88], sizes = [64, 8], strides = [1, 1]} : vector<128x96xf32> to vector<64x8xf32>
    %cst_52 = arith.constant dense<0.000000e+00> : vector<64x64xf32>
    %137 = tpu.matmul %134, %135, %cst_52 {dimension_numbers = #tpu.dot_dimension_numbers<[1], [1], [0], [0], [0, 0, 1, 0], [], []>} : vector<64x8xf32>, vector<64x8xf32>, vector<64x64xf32> -> vector<64x64xf32>
    %138 = arith.addf %137, %133 : vector<64x64xf32>
    %cst_53 = arith.constant dense<0xFF800000> : vector<64xf32>
    %139 = vector.multi_reduction <maximumf>, %138, %cst_53 [1] : vector<64x64xf32> to vector<64xf32>
    %140 = vector.shape_cast %139 : vector<64xf32> to vector<64x1xf32>
    %141 = vector.broadcast %140 : vector<64x1xf32> to vector<64x64xf32>
    %142 = arith.subf %138, %141 : vector<64x64xf32>
    %143 = math.exp %142 : vector<64x64xf32>
    %cst_54 = arith.constant dense<0.000000e+00> : vector<64xf32>
    %144 = vector.multi_reduction <add>, %143, %cst_54 [1] : vector<64x64xf32> to vector<64xf32>
    %145 = vector.shape_cast %144 : vector<64xf32> to vector<64x1xf32>
    %146 = vector.broadcast %145 : vector<64x1xf32> to vector<64x64xf32>
    %147 = arith.divf %143, %146 : vector<64x64xf32>
    %cst_55 = arith.constant dense<0.000000e+00> : vector<64x8xf32>
    %148 = tpu.matmul %147, %136, %cst_55 {dimension_numbers = #tpu.dot_dimension_numbers<[1], [0], [0], [1], [0, 0, 1, 1], [], []>} : vector<64x64xf32>, vector<64x8xf32>, vector<64x8xf32> -> vector<64x8xf32>
    %c0_56 = arith.constant 0 : index
    %c24 = arith.constant 24 : index
    %149 = vector.load %arg12[%c0_56, %c24] : memref<128x32xf32, #tpu.memory_space<vmem>>, vector<64x8xf32>
    tpu.vector_store %arg12[%c0_56, %c24], %148 {strides = array<i32>} : memref<128x32xf32, #tpu.memory_space<vmem>>, vector<64x8xf32>,
    %150 = vector.extract_strided_slice %25 {offsets = [64, 24], sizes = [64, 8], strides = [1, 1]} : vector<128x96xf32> to vector<64x8xf32>
    %151 = vector.extract_strided_slice %25 {offsets = [64, 56], sizes = [64, 8], strides = [1, 1]} : vector<128x96xf32> to vector<64x8xf32>
    %152 = vector.extract_strided_slice %25 {offsets = [64, 88], sizes = [64, 8], strides = [1, 1]} : vector<128x96xf32> to vector<64x8xf32>
    %cst_57 = arith.constant dense<0.000000e+00> : vector<64x64xf32>
    %153 = tpu.matmul %150, %151, %cst_57 {dimension_numbers = #tpu.dot_dimension_numbers<[1], [1], [0], [0], [0, 0, 1, 0], [], []>} : vector<64x8xf32>, vector<64x8xf32>, vector<64x64xf32> -> vector<64x64xf32>
    %154 = arith.addf %153, %133 : vector<64x64xf32>
    %cst_58 = arith.constant dense<0xFF800000> : vector<64xf32>
    %155 = vector.multi_reduction <maximumf>, %154, %cst_58 [1] : vector<64x64xf32> to vector<64xf32>
    %156 = vector.shape_cast %155 : vector<64xf32> to vector<64x1xf32>
    %157 = vector.broadcast %156 : vector<64x1xf32> to vector<64x64xf32>
    %158 = arith.subf %154, %157 : vector<64x64xf32>
    %159 = math.exp %158 : vector<64x64xf32>
    %cst_59 = arith.constant dense<0.000000e+00> : vector<64xf32>
    %160 = vector.multi_reduction <add>, %159, %cst_59 [1] : vector<64x64xf32> to vector<64xf32>
    %161 = vector.shape_cast %160 : vector<64xf32> to vector<64x1xf32>
    %162 = vector.broadcast %161 : vector<64x1xf32> to vector<64x64xf32>
    %163 = arith.divf %159, %162 : vector<64x64xf32>
    %cst_60 = arith.constant dense<0.000000e+00> : vector<64x8xf32>
    %164 = tpu.matmul %163, %152, %cst_60 {dimension_numbers = #tpu.dot_dimension_numbers<[1], [0], [0], [1], [0, 0, 1, 1], [], []>} : vector<64x64xf32>, vector<64x8xf32>, vector<64x8xf32> -> vector<64x8xf32>
    %c64_61 = arith.constant 64 : index
    %c24_62 = arith.constant 24 : index
    %165 = vector.load %arg12[%c64_61, %c24_62] : memref<128x32xf32, #tpu.memory_space<vmem>>, vector<64x8xf32>
    tpu.vector_store %arg12[%c64_61, %c24_62], %164 {strides = array<i32>} : memref<128x32xf32, #tpu.memory_space<vmem>>, vector<64x8xf32>,
    %c0_63 = arith.constant 0 : index
    %c0_64 = arith.constant 0 : index
    %166 = vector.load %arg12[%c0_63, %c0_64] : memref<128x32xf32, #tpu.memory_space<vmem>>, vector<128x32xf32>
    %c0_65 = arith.constant 0 : index
    %c0_66 = arith.constant 0 : index
    %167 = vector.load %arg5[%c0_65, %c0_66] : memref<32x32xf32, #tpu.memory_space<vmem>>, vector<32x32xf32>
    %cst_67 = arith.constant dense<0.000000e+00> : vector<128x32xf32>
    %168 = tpu.matmul %166, %167, %cst_67 {dimension_numbers = #tpu.dot_dimension_numbers<[1], [0], [0], [1], [0, 0, 1, 1], [], []>} : vector<128x32xf32>, vector<32x32xf32>, vector<128x32xf32> -> vector<128x32xf32>
    %c0_68 = arith.constant 0 : index
    %c0_69 = arith.constant 0 : index
    %169 = vector.load %arg6[%c0_68, %c0_69] : memref<1x32xf32, #tpu.memory_space<vmem>>, vector<1x32xf32>
    %170 = vector.shape_cast %169 : vector<1x32xf32> to vector<32xf32>
    %171 = vector.shape_cast %170 : vector<32xf32> to vector<1x32xf32>
    %172 = vector.broadcast %171 : vector<1x32xf32> to vector<128x32xf32>
    %173 = arith.addf %168, %172 : vector<128x32xf32>
    %174 = arith.addf %0, %173 : vector<128x32xf32>
    %cst_70 = arith.constant dense<0.000000e+00> : vector<128xf32>
    %175 = vector.multi_reduction <add>, %174, %cst_70 [1] : vector<128x32xf32> to vector<128xf32>
    %176 = vector.shape_cast %175 : vector<128xf32> to vector<128x1xf32>
    %cst_71 = arith.constant 3.200000e+01 : f32
    %177 = vector.broadcast %cst_71 : f32 to vector<128x1xf32>
    %178 = arith.divf %176, %177 : vector<128x1xf32>
    %179 = vector.broadcast %178 : vector<128x1xf32> to vector<128x32xf32>
    %180 = arith.subf %174, %179 : vector<128x32xf32>
    %181 = arith.mulf %180, %180 : vector<128x32xf32>
    %cst_72 = arith.constant dense<0.000000e+00> : vector<128xf32>
    %182 = vector.multi_reduction <add>, %181, %cst_72 [1] : vector<128x32xf32> to vector<128xf32>
    %183 = vector.shape_cast %182 : vector<128xf32> to vector<128x1xf32>
    %cst_73 = arith.constant 3.200000e+01 : f32
    %184 = vector.broadcast %cst_73 : f32 to vector<128x1xf32>
    %185 = arith.divf %183, %184 : vector<128x1xf32>
    %186 = vector.broadcast %178 : vector<128x1xf32> to vector<128x32xf32>
    %187 = arith.subf %174, %186 : vector<128x32xf32>
    %cst_74 = arith.constant 9.99999974E-6 : f32
    %188 = vector.broadcast %cst_74 : f32 to vector<128x1xf32>
    %189 = arith.addf %185, %188 : vector<128x1xf32>
    %190 = math.rsqrt %189 : vector<128x1xf32>
    %191 = vector.broadcast %190 : vector<128x1xf32> to vector<128x32xf32>
    %192 = arith.mulf %187, %191 : vector<128x32xf32>
    %c0_75 = arith.constant 0 : index
    %c0_76 = arith.constant 0 : index
    %193 = vector.load %arg7[%c0_75, %c0_76] : memref<32x128xf32, #tpu.memory_space<vmem>>, vector<32x128xf32>
    %cst_77 = arith.constant dense<0.000000e+00> : vector<128x128xf32>
    %194 = tpu.matmul %192, %193, %cst_77 {dimension_numbers = #tpu.dot_dimension_numbers<[1], [0], [0], [1], [0, 0, 1, 1], [], []>} : vector<128x32xf32>, vector<32x128xf32>, vector<128x128xf32> -> vector<128x128xf32>
    %c0_78 = arith.constant 0 : index
    %c0_79 = arith.constant 0 : index
    %195 = vector.load %arg8[%c0_78, %c0_79] : memref<1x128xf32, #tpu.memory_space<vmem>>, vector<1x128xf32>
    %196 = vector.shape_cast %195 : vector<1x128xf32> to vector<128xf32>
    %197 = vector.shape_cast %196 : vector<128xf32> to vector<1x128xf32>
    %198 = vector.broadcast %197 : vector<1x128xf32> to vector<128x128xf32>
    %199 = arith.addf %194, %198 : vector<128x128xf32>
    %cst_80 = arith.constant 5.000000e-01 : f32
    %200 = vector.broadcast %cst_80 : f32 to vector<128x128xf32>
    %201 = arith.mulf %200, %199 : vector<128x128xf32>
    %cst_81 = arith.constant 0.707106769 : f32
    %202 = vector.broadcast %cst_81 : f32 to vector<128x128xf32>
    %203 = arith.mulf %199, %202 : vector<128x128xf32>
    %204 = math.erf %203 : vector<128x128xf32>
    %cst_82 = arith.constant 1.000000e+00 : f32
    %205 = vector.broadcast %cst_82 : f32 to vector<128x128xf32>
    %206 = arith.addf %205, %204 : vector<128x128xf32>
    %207 = arith.mulf %201, %206 : vector<128x128xf32>
    %c0_83 = arith.constant 0 : index
    %c0_84 = arith.constant 0 : index
    %208 = vector.load %arg9[%c0_83, %c0_84] : memref<128x32xf32, #tpu.memory_space<vmem>>, vector<128x32xf32>
    %cst_85 = arith.constant dense<0.000000e+00> : vector<128x32xf32>
    %209 = tpu.matmul %207, %208, %cst_85 {dimension_numbers = #tpu.dot_dimension_numbers<[1], [0], [0], [1], [0, 0, 1, 1], [], []>} : vector<128x128xf32>, vector<128x32xf32>, vector<128x32xf32> -> vector<128x32xf32>
    %c0_86 = arith.constant 0 : index
    %c0_87 = arith.constant 0 : index
    %210 = vector.load %arg10[%c0_86, %c0_87] : memref<1x32xf32, #tpu.memory_space<vmem>>, vector<1x32xf32>
    %211 = vector.shape_cast %210 : vector<1x32xf32> to vector<32xf32>
    %212 = vector.shape_cast %211 : vector<32xf32> to vector<1x32xf32>
    %213 = vector.broadcast %212 : vector<1x32xf32> to vector<128x32xf32>
    %214 = arith.addf %209, %213 : vector<128x32xf32>
    %215 = arith.addf %174, %214 : vector<128x32xf32>
    %c0_88 = arith.constant 0 : index
    %c0_89 = arith.constant 0 : index
    %216 = vector.load %arg11[%c0_88, %c0_89] : memref<128x32xf32, #tpu.memory_space<vmem>>, vector<128x32xf32>
    tpu.vector_store %arg11[%c0_88, %c0_89], %215 {strides = array<i32>} : memref<128x32xf32, #tpu.memory_space<vmem>>, vector<128x32xf32>,
    return
  }
  func.func @transform_0(%arg0: i32) -> (i32, i32) {
    %c0_i32 = arith.constant 0 : i32
    %c0_i32_0 = arith.constant 0 : i32
    %c0_i32_1 = arith.constant 0 : i32
    return %c0_i32, %c0_i32_0 : i32, i32
  }
  func.func @transform_1(%arg0: i32) -> (i32, i32, i32) {
    %c0_i32 = arith.constant 0 : i32
    %c0_i32_0 = arith.constant 0 : i32
    %c0_i32_1 = arith.constant 0 : i32
    %c0_i32_2 = arith.constant 0 : i32
    return %c0_i32, %c0_i32_0, %c0_i32_1 : i32, i32, i32
  }
  func.func @transform_2(%arg0: i32) -> (i32, i32) {
    %c0_i32 = arith.constant 0 : i32
    %c0_i32_0 = arith.constant 0 : i32
    %c0_i32_1 = arith.constant 0 : i32
    return %c0_i32, %c0_i32_0 : i32, i32
  }
  func.func @transform_3(%arg0: i32) -> (i32, i32) {
    %c0_i32 = arith.constant 0 : i32
    %c0_i32_0 = arith.constant 0 : i32
    %c0_i32_1 = arith.constant 0 : i32
    return %c0_i32, %c0_i32_0 : i32, i32
  }
  func.func @transform_4(%arg0: i32) -> (i32, i32) {
    %c0_i32 = arith.constant 0 : i32
    %c0_i32_0 = arith.constant 0 : i32
    %c0_i32_1 = arith.constant 0 : i32
    return %c0_i32, %c0_i32_0 : i32, i32
  }
  func.func @transform_5(%arg0: i32) -> (i32, i32) {
    %c0_i32 = arith.constant 0 : i32
    %c0_i32_0 = arith.constant 0 : i32
    %c0_i32_1 = arith.constant 0 : i32
    return %c0_i32, %c0_i32_0 : i32, i32
  }
  func.func @transform_6(%arg0: i32) -> (i32, i32) {
    %c0_i32 = arith.constant 0 : i32
    %c0_i32_0 = arith.constant 0 : i32
    %c0_i32_1 = arith.constant 0 : i32
    return %c0_i32, %c0_i32_0 : i32, i32
  }
  func.func @transform_7(%arg0: i32) -> (i32, i32) {
    %c0_i32 = arith.constant 0 : i32
    %c0_i32_0 = arith.constant 0 : i32
    %c0_i32_1 = arith.constant 0 : i32
    return %c0_i32, %c0_i32_0 : i32, i32
  }
  func.func @transform_8(%arg0: i32) -> (i32, i32) {
    %c0_i32 = arith.constant 0 : i32
    %c0_i32_0 = arith.constant 0 : i32
    %c0_i32_1 = arith.constant 0 : i32
    return %c0_i32, %c0_i32_0 : i32, i32
  }
  func.func @transform_9(%arg0: i32) -> (i32, i32) {
    %c0_i32 = arith.constant 0 : i32
    %c0_i32_0 = arith.constant 0 : i32
    %c0_i32_1 = arith.constant 0 : i32
    return %c0_i32, %c0_i32_0 : i32, i32
  }
  func.func @transform_10(%arg0: i32) -> (i32, i32) {
    %c0_i32 = arith.constant 0 : i32
    %c0_i32_0 = arith.constant 0 : i32
    %c0_i32_1 = arith.constant 0 : i32
    return %c0_i32, %c0_i32_0 : i32, i32
  }
}

</mosaic_0001>

<llo_original>
// kernel: swin_block_forward.1
$region0: #{swin_block_forward.1}
  #allocation0 [shape = 'u32[]', space=smem, size = 0x4, offset = 0x4, fixed_abs, tag = 'smem constant byte address 0x4 - core index']
  #allocation1 [shape = 'u32[144,128]{1,0:T(1,128)}', space=vmem, size = 0x12000, scoped, tag = 'internal scratch']
  #allocation2 [shape = 'f32[128,32]{1,0:T(8,128)}', space=vmem, size = 0x10000, scoped, tag = 'scratch operand']
  %s0 = inlined_call_operand.vmem [shape: f32[128,32], index: 0, kind: input, shape index: {}]
  %s1 = inlined_call_operand.vmem [shape: bf16[4,64,64], index: 1, kind: input, shape index: {}]
  %s2 = inlined_call_operand.vmem [shape: f32[32,96], index: 2, kind: input, shape index: {}]
  %s3 = inlined_call_operand.vmem [shape: f32[1,96], index: 3, kind: input, shape index: {}]
  %s4 = inlined_call_operand.vmem [shape: f32[32,32], index: 4, kind: input, shape index: {}]
  %s5 = inlined_call_operand.vmem [shape: f32[1,32], index: 5, kind: input, shape index: {}]
  %s6 = inlined_call_operand.vmem [shape: f32[32,128], index: 6, kind: input, shape index: {}]
  %s7 = inlined_call_operand.vmem [shape: f32[1,128], index: 7, kind: input, shape index: {}]
  %s8 = inlined_call_operand.vmem [shape: f32[128,32], index: 8, kind: input, shape index: {}]
  %s9 = inlined_call_operand.vmem [shape: f32[1,32], index: 9, kind: input, shape index: {}]
  %s10 = inlined_call_operand.vmem [shape: f32[128,32], index: 10, kind: output, shape index: {}]
  %s11 = sld [smem:[#allocation0]]
  $region50: #{swin_block_forward.1} parent=0
    _
  %s13 = ssub.s32 1, %s11
  %s14 = scalar_select 0, %s13, %s11
  // Predicated region
  $region2: #{swin_block_forward.1} parent=0 // pred_check
    _
  $region3: #{swin_block_forward.1} parent=0 // pred_check_branch
    %16 = sbr.rel (0) target = $region5
  $region4: #{swin_block_forward.1} parent=0 // pred_region
    _
  $region5: #{swin_block_forward.1} parent=0 // pred_fallthru
    _
  // Predicated region
  $region6: #{swin_block_forward.1} parent=0 // pred_check
    _
  $region7: #{swin_block_forward.1} parent=0 // pred_check_branch
    %18 = sbr.rel (0) target = $region9
  $region8: #{swin_block_forward.1} parent=0 // pred_region
    _
  $region9: #{swin_block_forward.1} parent=0 // pred_fallthru
    _
  // Predicated region
  $region10: #{swin_block_forward.1} parent=0 // pred_check
    _
  $region11: #{swin_block_forward.1} parent=0 // pred_check_branch
    %20 = sbr.rel (0) target = $region13
  $region12: #{swin_block_forward.1} parent=0 // pred_region
    _
  $region13: #{swin_block_forward.1} parent=0 // pred_fallthru
    _
  // Predicated region
  $region14: #{swin_block_forward.1} parent=0 // pred_check
    _
  $region15: #{swin_block_forward.1} parent=0 // pred_check_branch
    %22 = sbr.rel (0) target = $region17
  $region16: #{swin_block_forward.1} parent=0 // pred_region
    _
  $region17: #{swin_block_forward.1} parent=0 // pred_fallthru
    _
  // Predicated region
  $region18: #{swin_block_forward.1} parent=0 // pred_check
    _
  $region19: #{swin_block_forward.1} parent=0 // pred_check_branch
    %24 = sbr.rel (0) target = $region21
  $region20: #{swin_block_forward.1} parent=0 // pred_region
    _
  $region21: #{swin_block_forward.1} parent=0 // pred_fallthru
    _
  // Predicated region
  $region22: #{swin_block_forward.1} parent=0 // pred_check
    _
  $region23: #{swin_block_forward.1} parent=0 // pred_check_branch
    %26 = sbr.rel (0) target = $region25
  $region24: #{swin_block_forward.1} parent=0 // pred_region
    _
  $region25: #{swin_block_forward.1} parent=0 // pred_fallthru
    _
  // Predicated region
  $region26: #{swin_block_forward.1} parent=0 // pred_check
    _
  $region27: #{swin_block_forward.1} parent=0 // pred_check_branch
    %28 = sbr.rel (0) target = $region29
  $region28: #{swin_block_forward.1} parent=0 // pred_region
    _
  $region29: #{swin_block_forward.1} parent=0 // pred_fallthru
    _
  // Predicated region
  $region30: #{swin_block_forward.1} parent=0 // pred_check
    _
  $region31: #{swin_block_forward.1} parent=0 // pred_check_branch
    %30 = sbr.rel (0) target = $region33
  $region32: #{swin_block_forward.1} parent=0 // pred_region
    _
  $region33: #{swin_block_forward.1} parent=0 // pred_fallthru
    _
  // Predicated region
  $region34: #{swin_block_forward.1} parent=0 // pred_check
    _
  $region35: #{swin_block_forward.1} parent=0 // pred_check_branch
    %32 = sbr.rel (0) target = $region37
  $region36: #{swin_block_forward.1} parent=0 // pred_region
    _
  $region37: #{swin_block_forward.1} parent=0 // pred_fallthru
    _
  // Predicated region
  $region38: #{swin_block_forward.1} parent=0 // pred_check
    _
  $region39: #{swin_block_forward.1} parent=0 // pred_check_branch
    %34 = sbr.rel (0) target = $region41
  $region40: #{swin_block_forward.1} parent=0 // pred_region
    _
  $region41: #{swin_block_forward.1} parent=0 // pred_fallthru
    _
  %v35 = vld [vmem:[%s0] sm:$0xff]
  %v36 = vld [vmem:[%s0 + $0x8] sm:$0xff]
  %v37 = vld [vmem:[%s0 + $0x10] sm:$0xff]
  %v38 = vld [vmem:[%s0 + $0x18] sm:$0xff]
  %v39 = vld [vmem:[%s0 + $0x20] sm:$0xff]
  %v40 = vld [vmem:[%s0 + $0x28] sm:$0xff]
  %v41 = vld [vmem:[%s0 + $0x30] sm:$0xff]
  %v42 = vld [vmem:[%s0 + $0x38] sm:$0xff]
  %v43 = vld [vmem:[%s0 + $0x40] sm:$0xff]
  %v44 = vld [vmem:[%s0 + $0x48] sm:$0xff]
  %v45 = vld [vmem:[%s0 + $0x50] sm:$0xff]
  %v46 = vld [vmem:[%s0 + $0x58] sm:$0xff]
  %v47 = vld [vmem:[%s0 + $0x60] sm:$0xff]
  %v48 = vld [vmem:[%s0 + $0x68] sm:$0xff]
  %v49 = vld [vmem:[%s0 + $0x70] sm:$0xff]
  %v50 = vld [vmem:[%s0 + $0x78] sm:$0xff]
  %vm51 = vcmask 261120
  %v52 = vsel %vm51, %v35, 0.0
  %53 = vadd.xlane.f32.xlu0 %v52
  %v54 = vpop.xlane.xlu0 %53
  %v55 = vsel %vm51, %v36, 0.0
  %56 = vadd.xlane.f32.xlu0 %v55
  %v57 = vpop.xlane.xlu0 %56
  %v58 = vsel %vm51, %v37, 0.0
  %59 = vadd.xlane.f32.xlu0 %v58
  %v60 = vpop.xlane.xlu0 %59
  %v61 = vsel %vm51, %v38, 0.0
  %62 = vadd.xlane.f32.xlu0 %v61
  %v63 = vpop.xlane.xlu0 %62
  %v64 = vsel %vm51, %v39, 0.0
  %65 = vadd.xlane.f32.xlu0 %v64
  %v66 = vpop.xlane.xlu0 %65
  %v67 = vsel %vm51, %v40, 0.0
  %68 = vadd.xlane.f32.xlu0 %v67
  %v69 = vpop.xlane.xlu0 %68
  %v70 = vsel %vm51, %v41, 0.0
  %71 = vadd.xlane.f32.xlu0 %v70
  %v72 = vpop.xlane.xlu0 %71
  %v73 = vsel %vm51, %v42, 0.0
  %74 = vadd.xlane.f32.xlu0 %v73
  %v75 = vpop.xlane.xlu0 %74
  %v76 = vsel %vm51, %v43, 0.0
  %77 = vadd.xlane.f32.xlu0 %v76
  %v78 = vpop.xlane.xlu0 %77
  %v79 = vsel %vm51, %v44, 0.0
  %80 = vadd.xlane.f32.xlu0 %v79
  %v81 = vpop.xlane.xlu0 %80
  %v82 = vsel %vm51, %v45, 0.0
  %83 = vadd.xlane.f32.xlu0 %v82
  %v84 = vpop.xlane.xlu0 %83
  %v85 = vsel %vm51, %v46, 0.0
  %86 = vadd.xlane.f32.xlu0 %v85
  %v87 = vpop.xlane.xlu0 %86
  %v88 = vsel %vm51, %v47, 0.0
  %89 = vadd.xlane.f32.xlu0 %v88
  %v90 = vpop.xlane.xlu0 %89
  %v91 = vsel %vm51, %v48, 0.0
  %92 = vadd.xlane.f32.xlu0 %v91
  %v93 = vpop.xlane.xlu0 %92
  %v94 = vsel %vm51, %v49, 0.0
  %95 = vadd.xlane.f32.xlu0 %v94
  %v96 = vpop.xlane.xlu0 %95
  %v97 = vsel %vm51, %v50, 0.0
  %98 = vadd.xlane.f32.xlu0 %v97
  %v99 = vpop.xlane.xlu0 %98
  %v100 = vrcp.pop 32.0
  %v101 = vmul.f32 %v54, %v100
  %v102 = vmul.f32 %v57, %v100
  %v103 = vmul.f32 %v60, %v100
  %v104 = vmul.f32 %v63, %v100
  %v105 = vmul.f32 %v66, %v100
  %v106 = vmul.f32 %v69, %v100
  %v107 = vmul.f32 %v72, %v100
  %v108 = vmul.f32 %v75, %v100
  %v109 = vmul.f32 %v78, %v100
  %v110 = vmul.f32 %v81, %v100
  %v111 = vmul.f32 %v84, %v100
  %v112 = vmul.f32 %v87, %v100
  %v113 = vmul.f32 %v90, %v100
  %v114 = vmul.f32 %v93, %v100
  %v115 = vmul.f32 %v96, %v100
  %v116 = vmul.f32 %v99, %v100
  %v117 = vsub.f32 %v35, %v101
  %v118 = vsub.f32 %v36, %v102
  %v119 = vsub.f32 %v37, %v103
  %v120 = vsub.f32 %v38, %v104
  %v121 = vsub.f32 %v39, %v105
  %v122 = vsub.f32 %v40, %v106
  %v123 = vsub.f32 %v41, %v107
  %v124 = vsub.f32 %v42, %v108
  %v125 = vsub.f32 %v43, %v109
  %v126 = vsub.f32 %v44, %v110
  %v127 = vsub.f32 %v45, %v111
  %v128 = vsub.f32 %v46, %v112
  %v129 = vsub.f32 %v47, %v113
  %v130 = vsub.f32 %v48, %v114
  %v131 = vsub.f32 %v49, %v115
  %v132 = vsub.f32 %v50, %v116
  %v133 = vmul.f32 %v117, %v117
  %v134 = vmul.f32 %v118, %v118
  %v135 = vmul.f32 %v119, %v119
  %v136 = vmul.f32 %v120, %v120
  %v137 = vmul.f32 %v121, %v121
  %v138 = vmul.f32 %v122, %v122
  %v139 = vmul.f32 %v123, %v123
  %v140 = vmul.f32 %v124, %v124
  %v141 = vmul.f32 %v125, %v125
  %v142 = vmul.f32 %v126, %v126
  %v143 = vmul.f32 %v127, %v127
  %v144 = vmul.f32 %v128, %v128
  %v145 = vmul.f32 %v129, %v129
  %v146 = vmul.f32 %v130, %v130
  %v147 = vmul.f32 %v131, %v131
  %v148 = vmul.f32 %v132, %v132
  %v149 = vsel %vm51, %v133, 0.0
  %150 = vadd.xlane.f32.xlu0 %v149
  %v151 = vpop.xlane.xlu0 %150
  %v152 = vsel %vm51, %v134, 0.0
  %153 = vadd.xlane.f32.xlu0 %v152
  %v154 = vpop.xlane.xlu0 %153
  %v155 = vsel %vm51, %v135, 0.0
  %156 = vadd.xlane.f32.xlu0 %v155
  %v157 = vpop.xlane.xlu0 %156
  %v158 = vsel %vm51, %v136, 0.0
  %159 = vadd.xlane.f32.xlu0 %v158
  %v160 = vpop.xlane.xlu0 %159
  %v161 = vsel %vm51, %v137, 0.0
  %162 = vadd.xlane.f32.xlu0 %v161
  %v163 = vpop.xlane.xlu0 %162
  %v164 = vsel %vm51, %v138, 0.0
  %165 = vadd.xlane.f32.xlu0 %v164
  %v166 = vpop.xlane.xlu0 %165
  %v167 = vsel %vm51, %v139, 0.0
  %168 = vadd.xlane.f32.xlu0 %v167
  %v169 = vpop.xlane.xlu0 %168
  %v170 = vsel %vm51, %v140, 0.0
  %171 = vadd.xlane.f32.xlu0 %v170
  %v172 = vpop.xlane.xlu0 %171
  %v173 = vsel %vm51, %v141, 0.0
  %174 = vadd.xlane.f32.xlu0 %v173
  %v175 = vpop.xlane.xlu0 %174
  %v176 = vsel %vm51, %v142, 0.0
  %177 = vadd.xlane.f32.xlu0 %v176
  %v178 = vpop.xlane.xlu0 %177
  %v179 = vsel %vm51, %v143, 0.0
  %180 = vadd.xlane.f32.xlu0 %v179
  %v181 = vpop.xlane.xlu0 %180
  %v182 = vsel %vm51, %v144, 0.0
  %183 = vadd.xlane.f32.xlu0 %v182
  %v184 = vpop.xlane.xlu0 %183
  %v185 = vsel %vm51, %v145, 0.0
  %186 = vadd.xlane.f32.xlu0 %v185
  %v187 = vpop.xlane.xlu0 %186
  %v188 = vsel %vm51, %v146, 0.0
  %189 = vadd.xlane.f32.xlu0 %v188
  %v190 = vpop.xlane.xlu0 %189
  %v191 = vsel %vm51, %v147, 0.0
  %192 = vadd.xlane.f32.xlu0 %v191
  %v193 = vpop.xlane.xlu0 %192
  %v194 = vsel %vm51, %v148, 0.0
  %195 = vadd.xlane.f32.xlu0 %v194
  %v196 = vpop.xlane.xlu0 %195
  %v197 = vmul.f32 %v151, %v100
  %v198 = vmul.f32 %v154, %v100
  %v199 = vmul.f32 %v157, %v100
  %v200 = vmul.f32 %v160, %v100
  %v201 = vmul.f32 %v163, %v100
  %v202 = vmul.f32 %v166, %v100
  %v203 = vmul.f32 %v169, %v100
  %v204 = vmul.f32 %v172, %v100
  %v205 = vmul.f32 %v175, %v100
  %v206 = vmul.f32 %v178, %v100
  %v207 = vmul.f32 %v181, %v100
  %v208 = vmul.f32 %v184, %v100
  %v209 = vmul.f32 %v187, %v100
  %v210 = vmul.f32 %v190, %v100
  %v211 = vmul.f32 %v193, %v100
  %v212 = vmul.f32 %v196, %v100
  %v213 = vadd.f32 %v197, 1e-05
  %v214 = vadd.f32 %v198, 1e-05
  %v215 = vadd.f32 %v199, 1e-05
  %v216 = vadd.f32 %v200, 1e-05
  %v217 = vadd.f32 %v201, 1e-05
  %v218 = vadd.f32 %v202, 1e-05
  %v219 = vadd.f32 %v203, 1e-05
  %v220 = vadd.f32 %v204, 1e-05
  %v221 = vadd.f32 %v205, 1e-05
  %v222 = vadd.f32 %v206, 1e-05
  %v223 = vadd.f32 %v207, 1e-05
  %v224 = vadd.f32 %v208, 1e-05
  %v225 = vadd.f32 %v209, 1e-05
  %v226 = vadd.f32 %v210, 1e-05
  %v227 = vadd.f32 %v211, 1e-05
  %v228 = vadd.f32 %v212, 1e-05
  %v229 = vrsqrt.pop %v213
  %v230 = vrsqrt.pop %v214
  %v231 = vrsqrt.pop %v215
  %v232 = vrsqrt.pop %v216
  %v233 = vrsqrt.pop %v217
  %v234 = vrsqrt.pop %v218
  %v235 = vrsqrt.pop %v219
  %v236 = vrsqrt.pop %v220
  %v237 = vrsqrt.pop %v221
  %v238 = vrsqrt.pop %v222
  %v239 = vrsqrt.pop %v223
  %v240 = vrsqrt.pop %v224
  %v241 = vrsqrt.pop %v225
  %v242 = vrsqrt.pop %v226
  %v243 = vrsqrt.pop %v227
  %v244 = vrsqrt.pop %v228
  %v245 = vmul.f32 %v117, %v229
  %v246 = vmul.f32 %v118, %v230
  %v247 = vmul.f32 %v119, %v231
  %v248 = vmul.f32 %v120, %v232
  %v249 = vmul.f32 %v121, %v233
  %v250 = vmul.f32 %v122, %v234
  %v251 = vmul.f32 %v123, %v235
  %v252 = vmul.f32 %v124, %v236
  %v253 = vmul.f32 %v125, %v237
  %v254 = vmul.f32 %v126, %v238
  %v255 = vmul.f32 %v127, %v239
  %v256 = vmul.f32 %v128, %v240
  %v257 = vmul.f32 %v129, %v241
  %v258 = vmul.f32 %v130, %v242
  %v259 = vmul.f32 %v131, %v243
  %v260 = vmul.f32 %v132, %v244
  %v261 = vld [vmem:[%s2] sm:$0xff]
  %v262 = vld [vmem:[%s2 + $0x8] sm:$0xff]
  %v263 = vld [vmem:[%s2 + $0x10] sm:$0xff]
  %v264 = vld [vmem:[%s2 + $0x18] sm:$0xff]
  %v265 = vld [vmem:[%s3] sm:$0x1]
  %v267 = vlaneseq
  %v268 = vshrl.u32 %v267, 7
  %v269 = vsub.s32 0, %v268
  %v270 = vrot.slane %v265, %v269
  %v273 = vsel %vm51, %v245, 0
  %v276 = vsel %vm51, %v246, 0
  %v279 = vsel %vm51, %v247, 0
  %v282 = vsel %vm51, %v248, 0
  %v285 = vsel %vm51, %v249, 0
  %v288 = vsel %vm51, %v250, 0
  %v291 = vsel %vm51, %v251, 0
  %v294 = vsel %vm51, %v252, 0
  %v297 = vsel %vm51, %v253, 0
  %v300 = vsel %vm51, %v254, 0
  %v303 = vsel %vm51, %v255, 0
  %v306 = vsel %vm51, %v256, 0
  %v309 = vsel %vm51, %v257, 0
  %v312 = vsel %vm51, %v258, 0
  %v315 = vsel %vm51, %v259, 0
  %v318 = vsel %vm51, %v260, 0
  %320 = vmatprep.subr.mxu0 0.0
  %321 = vmatpush1.msra.mxu0 %v261
  %322 = vmatprep.subr.mxu0 0.0
  %323 = vmatpush1.msra.mxu0 %v262
  %324 = vmatprep.subr.mxu0 0.0
  %325 = vmatpush1.msra.mxu0 %v263
  %326 = vmatprep.subr.mxu0 0.0
  %327 = vmatpush1.msra.mxu0 %v264
  %328 = vmatprep.subr.mxu0 0.0
  %329 = vmatpush1.msra.mxu0 0.0
  %330 = vmatprep.subr.mxu0 0.0
  %331 = vmatpush1.msra.mxu0 0.0
  %332 = vmatprep.subr.mxu0 0.0
  %333 = vmatpush1.msra.mxu0 0.0
  %334 = vmatprep.subr.mxu0 0.0
  %335 = vmatpush1.msra.mxu0 0.0
  %336 = vmatprep.subr.mxu0 0.0
  %337 = vmatpush1.msra.mxu0 0.0
  %338 = vmatprep.subr.mxu0 0.0
  %339 = vmatpush1.msra.mxu0 0.0
  %340 = vmatprep.subr.mxu0 0.0
  %341 = vmatpush1.msra.mxu0 0.0
  %342 = vmatprep.subr.mxu0 0.0
  %343 = vmatpush1.msra.mxu0 0.0
  %344 = vmatprep.subr.mxu0 0.0
  %345 = vmatpush1.msra.mxu0 0.0
  %346 = vmatprep.subr.mxu0 0.0
  %347 = vmatpush1.msra.mxu0 0.0
  %348 = vmatprep.subr.mxu0 0.0
  %349 = vmatpush1.msra.mxu0 0.0
  %350 = vmatprep.subr.mxu0 0.0
  %351 = vmatpush1.msra.mxu0 0.0
  %352 = vmatprep.subr.mxu0 0.0
  %353 = vmatpush1.msra.mxu0 0.0
  %354 = vmatprep.subr.mxu0 0.0
  %355 = vmatpush1.msra.mxu0 0.0
  %356 = vmatprep.subr.mxu0 0.0
  %357 = vmatpush1.msra.mxu0 0.0
  %358 = vmatprep.subr.mxu0 0.0
  %359 = vmatpush1.msra.mxu0 0.0
  %360 = vmatprep.subr.mxu0 0.0
  %361 = vmatpush1.msra.mxu0 0.0
  %362 = vmatprep.subr.mxu0 0.0
  %363 = vmatpush1.msra.mxu0 0.0
  %364 = vmatprep.subr.mxu0 0.0
  %365 = vmatpush1.msra.mxu0 0.0
  %366 = vmatprep.subr.mxu0 0.0
  %367 = vmatpush1.msra.mxu0 0.0
  %368 = vmatprep.subr.mxu0 0.0
  %369 = vmatpush1.msra.mxu0 0.0
  %370 = vmatprep.subr.mxu0 0.0
  %371 = vmatpush1.msra.mxu0 0.0
  %372 = vmatprep.subr.mxu0 0.0
  %373 = vmatpush1.msra.mxu0 0.0
  %374 = vmatprep.subr.mxu0 0.0
  %375 = vmatpush1.msra.mxu0 0.0
  %376 = vmatprep.subr.mxu0 0.0
  %377 = vmatpush1.msra.mxu0 0.0
  %378 = vmatprep.subr.mxu0 0.0
  %379 = vmatpush1.msra.mxu0 0.0
  %380 = vmatprep.subr.mxu0 0.0
  %381 = vmatpush1.msra.mxu0 0.0
  %382 = vmatprep.subr.mxu0 0.0
  %383 = vmatpush1.msra.mxu0 0.0
  %384 = vmatprep.mubr.f32.mxu0 0.0
  %385 = vmatmul.mubr.f32.gmra.mrb[0].mxu0 %v273
  %v386 = vpop.f32.mrb[0].mxu0
  %v387 = vadd.f32 %v270, %v386
  %v388 = vpop.f32.mrb[0].mxu0
  %389 = vmatprep.mubr.f32.mxu0 0.0
  %390 = vmatmul.mubr.f32.gmra.mrb[0].mxu0 %v276
  %v391 = vpop.f32.mrb[0].mxu0
  %v392 = vadd.f32 %v270, %v391
  %v393 = vpop.f32.mrb[0].mxu0
  %394 = vmatprep.mubr.f32.mxu0 0.0
  %395 = vmatmul.mubr.f32.gmra.mrb[0].mxu0 %v279
  %v396 = vpop.f32.mrb[0].mxu0
  %v397 = vadd.f32 %v270, %v396
  %v398 = vpop.f32.mrb[0].mxu0
  %399 = vmatprep.mubr.f32.mxu0 0.0
  %400 = vmatmul.mubr.f32.gmra.mrb[0].mxu0 %v282
  %v401 = vpop.f32.mrb[0].mxu0
  %v402 = vadd.f32 %v270, %v401
  %v403 = vpop.f32.mrb[0].mxu0
  %404 = vmatprep.mubr.f32.mxu0 0.0
  %405 = vmatmul.mubr.f32.gmra.mrb[0].mxu0 %v285
  %v406 = vpop.f32.mrb[0].mxu0
  %v407 = vadd.f32 %v270, %v406
  %v408 = vpop.f32.mrb[0].mxu0
  %409 = vmatprep.mubr.f32.mxu0 0.0
  %410 = vmatmul.mubr.f32.gmra.mrb[0].mxu0 %v288
  %v411 = vpop.f32.mrb[0].mxu0
  %v412 = vadd.f32 %v270, %v411
  %v413 = vpop.f32.mrb[0].mxu0
  %414 = vmatprep.mubr.f32.mxu0 0.0
  %415 = vmatmul.mubr.f32.gmra.mrb[0].mxu0 %v291
  %v416 = vpop.f32.mrb[0].mxu0
  %v417 = vadd.f32 %v270, %v416
  %v418 = vpop.f32.mrb[0].mxu0
  %419 = vmatprep.mubr.f32.mxu0 0.0
  %420 = vmatmul.mubr.f32.gmra.mrb[0].mxu0 %v294
  %v421 = vpop.f32.mrb[0].mxu0
  %v422 = vadd.f32 %v270, %v421
  %v423 = vpop.f32.mrb[0].mxu0
  %424 = vmatprep.mubr.f32.mxu0 0.0
  %425 = vmatmul.mubr.f32.gmra.mrb[0].mxu0 %v297
  %v426 = vpop.f32.mrb[0].mxu0
  %v427 = vadd.f32 %v270, %v426
  %v428 = vpop.f32.mrb[0].mxu0
  %429 = vmatprep.mubr.f32.mxu0 0.0
  %430 = vmatmul.mubr.f32.gmra.mrb[0].mxu0 %v300
  %v431 = vpop.f32.mrb[0].mxu0
  %v432 = vadd.f32 %v270, %v431
  %v433 = vpop.f32.mrb[0].mxu0
  %434 = vmatprep.mubr.f32.mxu0 0.0
  %435 = vmatmul.mubr.f32.gmra.mrb[0].mxu0 %v303
  %v436 = vpop.f32.mrb[0].mxu0
  %v437 = vadd.f32 %v270, %v436
  %v438 = vpop.f32.mrb[0].mxu0
  %439 = vmatprep.mubr.f32.mxu0 0.0
  %440 = vmatmul.mubr.f32.gmra.mrb[0].mxu0 %v306
  %v441 = vpop.f32.mrb[0].mxu0
  %v442 = vadd.f32 %v270, %v441
  %v443 = vpop.f32.mrb[0].mxu0
  %444 = vmatprep.mubr.f32.mxu0 0.0
  %445 = vmatmul.mubr.f32.gmra.mrb[0].mxu0 %v309
  %v446 = vpop.f32.mrb[0].mxu0
  %v447 = vadd.f32 %v270, %v446
  %v448 = vpop.f32.mrb[0].mxu0
  %449 = vmatprep.mubr.f32.mxu0 0.0
  %450 = vmatmul.mubr.f32.gmra.mrb[0].mxu0 %v312
  %v451 = vpop.f32.mrb[0].mxu0
  %v452 = vadd.f32 %v270, %v451
  %v453 = vpop.f32.mrb[0].mxu0
  %454 = vmatprep.mubr.f32.mxu0 0.0
  %455 = vmatmul.mubr.f32.gmra.mrb[0].mxu0 %v315
  %v456 = vpop.f32.mrb[0].mxu0
  %v457 = vadd.f32 %v270, %v456
  %v458 = vpop.f32.mrb[0].mxu0
  %459 = vmatprep.mubr.f32.mxu0 0.0
  %460 = vmatmul.mubr.f32.gmra.mrb[0].mxu0 %v318
  %v461 = vpop.f32.mrb[0].mxu0
  %v462 = vadd.f32 %v270, %v461
  %v463 = vpop.f32.mrb[0].mxu0
  %464 = vdwg.mxu0
  %v465 = vld [vmem:[%s1] sm:$0xf]
  %v466 = vld [vmem:[%s1 + $0x4] sm:$0xf]
  %v467 = vld [vmem:[%s1 + $0x8] sm:$0xf]
  %v468 = vld [vmem:[%s1 + $0xc] sm:$0xf]
  %v469 = vld [vmem:[%s1 + $0x10] sm:$0xf]
  %v470 = vld [vmem:[%s1 + $0x14] sm:$0xf]
  %v471 = vld [vmem:[%s1 + $0x18] sm:$0xf]
  %v472 = vld [vmem:[%s1 + $0x1c] sm:$0xf]
  %v473 = vunpack.c.l.bf16 %v465
  %v474 = vunpack.c.l.bf16 %v466
  %v475 = vunpack.c.l.bf16 %v467
  %v476 = vunpack.c.l.bf16 %v468
  %v477 = vunpack.c.l.bf16 %v469
  %v478 = vunpack.c.l.bf16 %v470
  %v479 = vunpack.c.l.bf16 %v471
  %v480 = vunpack.c.l.bf16 %v472
  %489 = vrot.lane.b32.xlu0 %v387, 96
  %v490 = vpop.permute.xlu0 %489
  %491 = vrot.lane.b32.xlu0 %v392, 96
  %v492 = vpop.permute.xlu0 %491
  %493 = vrot.lane.b32.xlu0 %v397, 96
  %v494 = vpop.permute.xlu0 %493
  %495 = vrot.lane.b32.xlu0 %v402, 96
  %v496 = vpop.permute.xlu0 %495
  %497 = vrot.lane.b32.xlu0 %v407, 96
  %v498 = vpop.permute.xlu0 %497
  %499 = vrot.lane.b32.xlu0 %v412, 96
  %v500 = vpop.permute.xlu0 %499
  %501 = vrot.lane.b32.xlu0 %v417, 96
  %v502 = vpop.permute.xlu0 %501
  %503 = vrot.lane.b32.xlu0 %v422, 96
  %v504 = vpop.permute.xlu0 %503
  %vm505 = vcmask 64512
  %v506 = vsel %vm505, %v387, 0
  %v508 = vsel %vm505, %v392, 0
  %v510 = vsel %vm505, %v397, 0
  %v512 = vsel %vm505, %v402, 0
  %v514 = vsel %vm505, %v407, 0
  %v516 = vsel %vm505, %v412, 0
  %v518 = vsel %vm505, %v417, 0
  %v520 = vsel %vm505, %v422, 0
  %v522 = vsel %vm505, %v490, 0
  %v524 = vsel %vm505, %v492, 0
  %v526 = vsel %vm505, %v494, 0
  %v528 = vsel %vm505, %v496, 0
  %v530 = vsel %vm505, %v498, 0
  %v532 = vsel %vm505, %v500, 0
  %v534 = vsel %vm505, %v502, 0
  %v536 = vsel %vm505, %v504, 0
  %538 = vmatprep.subr.mxu0 0.0
  %539 = vmatpush1.xpose.msra.mxu0 %v522
  %540 = vmatprep.subr.mxu0 0.0
  %541 = vmatpush1.xpose.msra.mxu0 %v524
  %542 = vmatprep.subr.mxu0 0.0
  %543 = vmatpush1.xpose.msra.mxu0 %v526
  %544 = vmatprep.subr.mxu0 0.0
  %545 = vmatpush1.xpose.msra.mxu0 %v528
  %546 = vmatprep.subr.mxu0 0.0
  %547 = vmatpush1.xpose.msra.mxu0 %v530
  %548 = vmatprep.subr.mxu0 0.0
  %549 = vmatpush1.xpose.msra.mxu0 %v532
  %550 = vmatprep.subr.mxu0 0.0
  %551 = vmatpush1.xpose.msra.mxu0 %v534
  %552 = vmatprep.subr.mxu0 0.0
  %553 = vmatpush1.xpose.msra.mxu0 %v536
  %554 = vmatprep.subr.mxu0 0.0
  %555 = vmatpush1.xpose.msra.mxu0 0.0
  %556 = vmatprep.subr.mxu0 0.0
  %557 = vmatpush1.xpose.msra.mxu0 0.0
  %558 = vmatprep.subr.mxu0 0.0
  %559 = vmatpush1.xpose.msra.mxu0 0.0
  %560 = vmatprep.subr.mxu0 0.0
  %561 = vmatpush1.xpose.msra.mxu0 0.0
  %562 = vmatprep.subr.mxu0 0.0
  %563 = vmatpush1.xpose.msra.mxu0 0.0
  %564 = vmatprep.subr.mxu0 0.0
  %565 = vmatpush1.xpose.msra.mxu0 0.0
  %566 = vmatprep.subr.mxu0 0.0
  %567 = vmatpush1.xpose.msra.mxu0 0.0
  %568 = vmatprep.subr.mxu0 0.0
  %569 = vmatpush1.xpose.msra.mxu0 0.0
  %570 = vmatprep.subr.mxu0 0.0
  %571 = vmatpush1.xpose.msra.mxu0 0.0
  %572 = vmatprep.subr.mxu0 0.0
  %573 = vmatpush1.xpose.msra.mxu0 0.0
  %574 = vmatprep.subr.mxu0 0.0
  %575 = vmatpush1.xpose.msra.mxu0 0.0
  %576 = vmatprep.subr.mxu0 0.0
  %577 = vmatpush1.xpose.msra.mxu0 0.0
  %578 = vmatprep.subr.mxu0 0.0
  %579 = vmatpush1.xpose.msra.mxu0 0.0
  %580 = vmatprep.subr.mxu0 0.0
  %581 = vmatpush1.xpose.msra.mxu0 0.0
  %582 = vmatprep.subr.mxu0 0.0
  %583 = vmatpush1.xpose.msra.mxu0 0.0
  %584 = vmatprep.subr.mxu0 0.0
  %585 = vmatpush1.xpose.msra.mxu0 0.0
  %586 = vmatprep.subr.mxu0 0.0
  %587 = vmatpush1.xpose.msra.mxu0 0.0
  %588 = vmatprep.subr.mxu0 0.0
  %589 = vmatpush1.xpose.msra.mxu0 0.0
  %590 = vmatprep.subr.mxu0 0.0
  %591 = vmatpush1.xpose.msra.mxu0 0.0
  %592 = vmatprep.subr.mxu0 0.0
  %593 = vmatpush1.xpose.msra.mxu0 0.0
  %594 = vmatprep.subr.mxu0 0.0
  %595 = vmatpush1.xpose.msra.mxu0 0.0
  %596 = vmatprep.subr.mxu0 0.0
  %597 = vmatpush1.xpose.msra.mxu0 0.0
  %598 = vmatprep.subr.mxu0 0.0
  %599 = vmatpush1.xpose.msra.mxu0 0.0
  %600 = vmatprep.subr.mxu0 0.0
  %601 = vmatpush1.xpose.msra.mxu0 0.0
  %602 = vmatprep.mubr.f32.mxu0 0.0
  %603 = vmatmul.mubr.f32.gmra.mrb[0].mxu0 %v506
  %v604 = vpop.f32.mrb[0].mxu0
  %v605 = vadd.f32 %v473, %v604
  %v606 = vpop.f32.mrb[0].mxu0
  %607 = vmatprep.mubr.f32.mxu0 0.0
  %608 = vmatmul.mubr.f32.gmra.mrb[0].mxu0 %v508
  %v609 = vpop.f32.mrb[0].mxu0
  %v610 = vadd.f32 %v474, %v609
  %v611 = vpop.f32.mrb[0].mxu0
  %612 = vmatprep.mubr.f32.mxu0 0.0
  %613 = vmatmul.mubr.f32.gmra.mrb[0].mxu0 %v510
  %v614 = vpop.f32.mrb[0].mxu0
  %v615 = vadd.f32 %v475, %v614
  %v616 = vpop.f32.mrb[0].mxu0
  %617 = vmatprep.mubr.f32.mxu0 0.0
  %618 = vmatmul.mubr.f32.gmra.mrb[0].mxu0 %v512
  %v619 = vpop.f32.mrb[0].mxu0
  %v620 = vadd.f32 %v476, %v619
  %v621 = vpop.f32.mrb[0].mxu0
  %622 = vmatprep.mubr.f32.mxu0 0.0
  %623 = vmatmul.mubr.f32.gmra.mrb[0].mxu0 %v514
  %v624 = vpop.f32.mrb[0].mxu0
  %v625 = vadd.f32 %v477, %v624
  %v626 = vpop.f32.mrb[0].mxu0
  %627 = vmatprep.mubr.f32.mxu0 0.0
  %628 = vmatmul.mubr.f32.gmra.mrb[0].mxu0 %v516
  %v629 = vpop.f32.mrb[0].mxu0
  %v630 = vadd.f32 %v478, %v629
  %v631 = vpop.f32.mrb[0].mxu0
  %632 = vmatprep.mubr.f32.mxu0 0.0
  %633 = vmatmul.mubr.f32.gmra.mrb[0].mxu0 %v518
  %v634 = vpop.f32.mrb[0].mxu0
  %v635 = vadd.f32 %v479, %v634
  %v636 = vpop.f32.mrb[0].mxu0
  %637 = vmatprep.mubr.f32.mxu0 0.0
  %638 = vmatmul.mubr.f32.gmra.mrb[0].mxu0 %v520
  %v639 = vpop.f32.mrb[0].mxu0
  %v640 = vadd.f32 %v480, %v639
  %v641 = vpop.f32.mrb[0].mxu0
  %642 = vdwg.mxu0
  %vm643 = vcmask 523264
  %v644 = vsel %vm643, %v605, -inf
  %645 = vmax.xlane.f32.xlu0 %v644
  %v646 = vpop.xlane.xlu0 %645
  %v647 = vsel %vm643, %v610, -inf
  %648 = vmax.xlane.f32.xlu0 %v647
  %v649 = vpop.xlane.xlu0 %648
  %v650 = vsel %vm643, %v615, -inf
  %651 = vmax.xlane.f32.xlu0 %v650
  %v652 = vpop.xlane.xlu0 %651
  %v653 = vsel %vm643, %v620, -inf
  %654 = vmax.xlane.f32.xlu0 %v653
  %v655 = vpop.xlane.xlu0 %654
  %v656 = vsel %vm643, %v625, -inf
  %657 = vmax.xlane.f32.xlu0 %v656
  %v658 = vpop.xlane.xlu0 %657
  %v659 = vsel %vm643, %v630, -inf
  %660 = vmax.xlane.f32.xlu0 %v659
  %v661 = vpop.xlane.xlu0 %660
  %v662 = vsel %vm643, %v635, -inf
  %663 = vmax.xlane.f32.xlu0 %v662
  %v664 = vpop.xlane.xlu0 %663
  %v665 = vsel %vm643, %v640, -inf
  %666 = vmax.xlane.f32.xlu0 %v665
  %v667 = vpop.xlane.xlu0 %666
  %v668 = vsub.f32 %v605, %v646
  %v669 = vsub.f32 %v610, %v649
  %v670 = vsub.f32 %v615, %v652
  %v671 = vsub.f32 %v620, %v655
  %v672 = vsub.f32 %v625, %v658
  %v673 = vsub.f32 %v630, %v661
  %v674 = vsub.f32 %v635, %v664
  %v675 = vsub.f32 %v640, %v667
  %v676 = vmul.f32 %v668, 1.442695
  %v677 = vpow.pop %v676
  %v678 = vmul.f32 %v669, 1.442695
  %v679 = vpow.pop %v678
  %v680 = vmul.f32 %v670, 1.442695
  %v681 = vpow.pop %v680
  %v682 = vmul.f32 %v671, 1.442695
  %v683 = vpow.pop %v682
  %v684 = vmul.f32 %v672, 1.442695
  %v685 = vpow.pop %v684
  %v686 = vmul.f32 %v673, 1.442695
  %v687 = vpow.pop %v686
  %v688 = vmul.f32 %v674, 1.442695
  %v689 = vpow.pop %v688
  %v690 = vmul.f32 %v675, 1.442695
  %v691 = vpow.pop %v690
  %v692 = vsel %vm643, %v677, 0.0
  %693 = vadd.xlane.f32.xlu0 %v692
  %v694 = vpop.xlane.xlu0 %693
  %v695 = vsel %vm643, %v679, 0.0
  %696 = vadd.xlane.f32.xlu0 %v695
  %v697 = vpop.xlane.xlu0 %696
  %v698 = vsel %vm643, %v681, 0.0
  %699 = vadd.xlane.f32.xlu0 %v698
  %v700 = vpop.xlane.xlu0 %699
  %v701 = vsel %vm643, %v683, 0.0
  %702 = vadd.xlane.f32.xlu0 %v701
  %v703 = vpop.xlane.xlu0 %702
  %v704 = vsel %vm643, %v685, 0.0
  %705 = vadd.xlane.f32.xlu0 %v704
  %v706 = vpop.xlane.xlu0 %705
  %v707 = vsel %vm643, %v687, 0.0
  %708 = vadd.xlane.f32.xlu0 %v707
  %v709 = vpop.xlane.xlu0 %708
  %v710 = vsel %vm643, %v689, 0.0
  %711 = vadd.xlane.f32.xlu0 %v710
  %v712 = vpop.xlane.xlu0 %711
  %v713 = vsel %vm643, %v691, 0.0
  %714 = vadd.xlane.f32.xlu0 %v713
  %v715 = vpop.xlane.xlu0 %714
  %v716 = vrcp.pop %v694
  %v717 = vmul.f32 %v677, %v716
  %v718 = vrcp.pop %v697
  %v719 = vmul.f32 %v679, %v718
  %v720 = vrcp.pop %v700
  %v721 = vmul.f32 %v681, %v720
  %v722 = vrcp.pop %v703
  %v723 = vmul.f32 %v683, %v722
  %v724 = vrcp.pop %v706
  %v725 = vmul.f32 %v685, %v724
  %v726 = vrcp.pop %v709
  %v727 = vmul.f32 %v687, %v726
  %v728 = vrcp.pop %v712
  %v729 = vmul.f32 %v689, %v728
  %v730 = vrcp.pop %v715
  %v731 = vmul.f32 %v691, %v730
  %732 = vrot.lane.b32.xlu0 %v387, 64
  %v733 = vpop.permute.xlu0 %732
  %734 = vrot.lane.b32.xlu0 %v392, 64
  %v735 = vpop.permute.xlu0 %734
  %736 = vrot.lane.b32.xlu0 %v397, 64
  %v737 = vpop.permute.xlu0 %736
  %738 = vrot.lane.b32.xlu0 %v402, 64
  %v739 = vpop.permute.xlu0 %738
  %740 = vrot.lane.b32.xlu0 %v407, 64
  %v741 = vpop.permute.xlu0 %740
  %742 = vrot.lane.b32.xlu0 %v412, 64
  %v743 = vpop.permute.xlu0 %742
  %744 = vrot.lane.b32.xlu0 %v417, 64
  %v745 = vpop.permute.xlu0 %744
  %746 = vrot.lane.b32.xlu0 %v422, 64
  %v747 = vpop.permute.xlu0 %746
  %v757 = vsel %vm643, %v717, 0
  %v760 = vsel %vm643, %v719, 0
  %v763 = vsel %vm643, %v721, 0
  %v766 = vsel %vm643, %v723, 0
  %v769 = vsel %vm643, %v725, 0
  %v772 = vsel %vm643, %v727, 0
  %v775 = vsel %vm643, %v729, 0
  %v778 = vsel %vm643, %v731, 0
  %780 = vmatprep.subr.mxu0 0.0
  %781 = vmatpush1.msra.mxu0 %v733
  %782 = vmatprep.subr.mxu0 0.0
  %783 = vmatpush1.msra.mxu0 %v735
  %784 = vmatprep.subr.mxu0 0.0
  %785 = vmatpush1.msra.mxu0 %v737
  %786 = vmatprep.subr.mxu0 0.0
  %787 = vmatpush1.msra.mxu0 %v739
  %788 = vmatprep.subr.mxu0 0.0
  %789 = vmatpush1.msra.mxu0 %v741
  %790 = vmatprep.subr.mxu0 0.0
  %791 = vmatpush1.msra.mxu0 %v743
  %792 = vmatprep.subr.mxu0 0.0
  %793 = vmatpush1.msra.mxu0 %v745
  %794 = vmatprep.subr.mxu0 0.0
  %795 = vmatpush1.msra.mxu0 %v747
  %796 = vmatprep.subr.mxu0 0.0
  %797 = vmatpush1.msra.mxu0 0.0
  %798 = vmatprep.subr.mxu0 0.0
  %799 = vmatpush1.msra.mxu0 0.0
  %800 = vmatprep.subr.mxu0 0.0
  %801 = vmatpush1.msra.mxu0 0.0
  %802 = vmatprep.subr.mxu0 0.0
  %803 = vmatpush1.msra.mxu0 0.0
  %804 = vmatprep.subr.mxu0 0.0
  %805 = vmatpush1.msra.mxu0 0.0
  %806 = vmatprep.subr.mxu0 0.0
  %807 = vmatpush1.msra.mxu0 0.0
  %808 = vmatprep.subr.mxu0 0.0
  %809 = vmatpush1.msra.mxu0 0.0
  %810 = vmatprep.subr.mxu0 0.0
  %811 = vmatpush1.msra.mxu0 0.0
  %812 = vmatprep.subr.mxu0 0.0
  %813 = vmatpush1.msra.mxu0 0.0
  %814 = vmatprep.subr.mxu0 0.0
  %815 = vmatpush1.msra.mxu0 0.0
  %816 = vmatprep.subr.mxu0 0.0
  %817 = vmatpush1.msra.mxu0 0.0
  %818 = vmatprep.subr.mxu0 0.0
  %819 = vmatpush1.msra.mxu0 0.0
  %820 = vmatprep.subr.mxu0 0.0
  %821 = vmatpush1.msra.mxu0 0.0
  %822 = vmatprep.subr.mxu0 0.0
  %823 = vmatpush1.msra.mxu0 0.0
  %824 = vmatprep.subr.mxu0 0.0
  %825 = vmatpush1.msra.mxu0 0.0
  %826 = vmatprep.subr.mxu0 0.0
  %827 = vmatpush1.msra.mxu0 0.0
  %828 = vmatprep.subr.mxu0 0.0
  %829 = vmatpush1.msra.mxu0 0.0
  %830 = vmatprep.subr.mxu0 0.0
  %831 = vmatpush1.msra.mxu0 0.0
  %832 = vmatprep.subr.mxu0 0.0
  %833 = vmatpush1.msra.mxu0 0.0
  %834 = vmatprep.subr.mxu0 0.0
  %835 = vmatpush1.msra.mxu0 0.0
  %836 = vmatprep.subr.mxu0 0.0
  %837 = vmatpush1.msra.mxu0 0.0
  %838 = vmatprep.subr.mxu0 0.0
  %839 = vmatpush1.msra.mxu0 0.0
  %840 = vmatprep.subr.mxu0 0.0
  %841 = vmatpush1.msra.mxu0 0.0
  %842 = vmatprep.subr.mxu0 0.0
  %843 = vmatpush1.msra.mxu0 0.0
  %844 = vmatprep.mubr.f32.mxu0 0.0
  %845 = vmatmul.mubr.f32.gmra.mrb[0].mxu0 %v757
  %v846 = vpop.f32.mrb[0].mxu0
  %v847 = vadd.f32 0.0, %v846
  %v848 = vpop.f32.mrb[0].mxu0
  %849 = vmatprep.mubr.f32.mxu0 0.0
  %850 = vmatmul.mubr.f32.gmra.mrb[0].mxu0 %v760
  %v851 = vpop.f32.mrb[0].mxu0
  %v852 = vadd.f32 0.0, %v851
  %v853 = vpop.f32.mrb[0].mxu0
  %854 = vmatprep.mubr.f32.mxu0 0.0
  %855 = vmatmul.mubr.f32.gmra.mrb[0].mxu0 %v763
  %v856 = vpop.f32.mrb[0].mxu0
  %v857 = vadd.f32 0.0, %v856
  %v858 = vpop.f32.mrb[0].mxu0
  %859 = vmatprep.mubr.f32.mxu0 0.0
  %860 = vmatmul.mubr.f32.gmra.mrb[0].mxu0 %v766
  %v861 = vpop.f32.mrb[0].mxu0
  %v862 = vadd.f32 0.0, %v861
  %v863 = vpop.f32.mrb[0].mxu0
  %864 = vmatprep.mubr.f32.mxu0 0.0
  %865 = vmatmul.mubr.f32.gmra.mrb[0].mxu0 %v769
  %v866 = vpop.f32.mrb[0].mxu0
  %v867 = vadd.f32 0.0, %v866
  %v868 = vpop.f32.mrb[0].mxu0
  %869 = vmatprep.mubr.f32.mxu0 0.0
  %870 = vmatmul.mubr.f32.gmra.mrb[0].mxu0 %v772
  %v871 = vpop.f32.mrb[0].mxu0
  %v872 = vadd.f32 0.0, %v871
  %v873 = vpop.f32.mrb[0].mxu0
  %874 = vmatprep.mubr.f32.mxu0 0.0
  %875 = vmatmul.mubr.f32.gmra.mrb[0].mxu0 %v775
  %v876 = vpop.f32.mrb[0].mxu0
  %v877 = vadd.f32 0.0, %v876
  %v878 = vpop.f32.mrb[0].mxu0
  %879 = vmatprep.mubr.f32.mxu0 0.0
  %880 = vmatmul.mubr.f32.gmra.mrb[0].mxu0 %v778
  %v881 = vpop.f32.mrb[0].mxu0
  %v882 = vadd.f32 0.0, %v881
  %v883 = vpop.f32.mrb[0].mxu0
  %884 = vdwg.mxu0
  %885 = vst.msk [vmem:[#allocation2] sm:$0xff] %vm505, %v847
  %886 = vst.msk [vmem:[#allocation2 + $0x8] sm:$0xff] %vm505, %v852
  %887 = vst.msk [vmem:[#allocation2 + $0x10] sm:$0xff] %vm505, %v857
  %888 = vst.msk [vmem:[#allocation2 + $0x18] sm:$0xff] %vm505, %v862
  %889 = vst.msk [vmem:[#allocation2 + $0x20] sm:$0xff] %vm505, %v867
  %890 = vst.msk [vmem:[#allocation2 + $0x28] sm:$0xff] %vm505, %v872
  %891 = vst.msk [vmem:[#allocation2 + $0x30] sm:$0xff] %vm505, %v877
  %892 = vst.msk [vmem:[#allocation2 + $0x38] sm:$0xff] %vm505, %v882
  %901 = vrot.lane.b32.xlu0 %v427, 96
  %v902 = vpop.permute.xlu0 %901
  %903 = vrot.lane.b32.xlu0 %v432, 96
  %v904 = vpop.permute.xlu0 %903
  %905 = vrot.lane.b32.xlu0 %v437, 96
  %v906 = vpop.permute.xlu0 %905
  %907 = vrot.lane.b32.xlu0 %v442, 96
  %v908 = vpop.permute.xlu0 %907
  %909 = vrot.lane.b32.xlu0 %v447, 96
  %v910 = vpop.permute.xlu0 %909
  %911 = vrot.lane.b32.xlu0 %v452, 96
  %v912 = vpop.permute.xlu0 %911
  %913 = vrot.lane.b32.xlu0 %v457, 96
  %v914 = vpop.permute.xlu0 %913
  %915 = vrot.lane.b32.xlu0 %v462, 96
  %v916 = vpop.permute.xlu0 %915
  %v917 = vsel %vm505, %v427, 0
  %v919 = vsel %vm505, %v432, 0
  %v921 = vsel %vm505, %v437, 0
  %v923 = vsel %vm505, %v442, 0
  %v925 = vsel %vm505, %v447, 0
  %v927 = vsel %vm505, %v452, 0
  %v929 = vsel %vm505, %v457, 0
  %v931 = vsel %vm505, %v462, 0
  %v933 = vsel %vm505, %v902, 0
  %v935 = vsel %vm505, %v904, 0
  %v937 = vsel %vm505, %v906, 0
  %v939 = vsel %vm505, %v908, 0
  %v941 = vsel %vm505, %v910, 0
  %v943 = vsel %vm505, %v912, 0
  %v945 = vsel %vm505, %v914, 0
  %v947 = vsel %vm505, %v916, 0
  %949 = vmatprep.subr.mxu0 0.0
  %950 = vmatpush1.xpose.msra.mxu0 %v933
  %951 = vmatprep.subr.mxu0 0.0
  %952 = vmatpush1.xpose.msra.mxu0 %v935
  %953 = vmatprep.subr.mxu0 0.0
  %954 = vmatpush1.xpose.msra.mxu0 %v937
  %955 = vmatprep.subr.mxu0 0.0
  %956 = vmatpush1.xpose.msra.mxu0 %v939
  %957 = vmatprep.subr.mxu0 0.0
  %958 = vmatpush1.xpose.msra.mxu0 %v941
  %959 = vmatprep.subr.mxu0 0.0
  %960 = vmatpush1.xpose.msra.mxu0 %v943
  %961 = vmatprep.subr.mxu0 0.0
  %962 = vmatpush1.xpose.msra.mxu0 %v945
  %963 = vmatprep.subr.mxu0 0.0
  %964 = vmatpush1.xpose.msra.mxu0 %v947
  %965 = vmatprep.subr.mxu0 0.0
  %966 = vmatpush1.xpose.msra.mxu0 0.0
  %967 = vmatprep.subr.mxu0 0.0
  %968 = vmatpush1.xpose.msra.mxu0 0.0
  %969 = vmatprep.subr.mxu0 0.0
  %970 = vmatpush1.xpose.msra.mxu0 0.0
  %971 = vmatprep.subr.mxu0 0.0
  %972 = vmatpush1.xpose.msra.mxu0 0.0
  %973 = vmatprep.subr.mxu0 0.0
  %974 = vmatpush1.xpose.msra.mxu0 0.0
  %975 = vmatprep.subr.mxu0 0.0
  %976 = vmatpush1.xpose.msra.mxu0 0.0
  %977 = vmatprep.subr.mxu0 0.0
  %978 = vmatpush1.xpose.msra.mxu0 0.0
  %979 = vmatprep.subr.mxu0 0.0
  %980 = vmatpush1.xpose.msra.mxu0 0.0
  %981 = vmatprep.subr.mxu0 0.0
  %982 = vmatpush1.xpose.msra.mxu0 0.0
  %983 = vmatprep.subr.mxu0 0.0
  %984 = vmatpush1.xpose.msra.mxu0 0.0
  %985 = vmatprep.subr.mxu0 0.0
  %986 = vmatpush1.xpose.msra.mxu0 0.0
  %987 = vmatprep.subr.mxu0 0.0
  %988 = vmatpush1.xpose.msra.mxu0 0.0
  %989 = vmatprep.subr.mxu0 0.0
  %990 = vmatpush1.xpose.msra.mxu0 0.0
  %991 = vmatprep.subr.mxu0 0.0
  %992 = vmatpush1.xpose.msra.mxu0 0.0
  %993 = vmatprep.subr.mxu0 0.0
  %994 = vmatpush1.xpose.msra.mxu0 0.0
  %995 = vmatprep.subr.mxu0 0.0
  %996 = vmatpush1.xpose.msra.mxu0 0.0
  %997 = vmatprep.subr.mxu0 0.0
  %998 = vmatpush1.xpose.msra.mxu0 0.0
  %999 = vmatprep.subr.mxu0 0.0
  %1000 = vmatpush1.xpose.msra.mxu0 0.0
  %1001 = vmatprep.subr.mxu0 0.0
  %1002 = vmatpush1.xpose.msra.mxu0 0.0
  %1003 = vmatprep.subr.mxu0 0.0
  %1004 = vmatpush1.xpose.msra.mxu0 0.0
  %1005 = vmatprep.subr.mxu0 0.0
  %1006 = vmatpush1.xpose.msra.mxu0 0.0
  %1007 = vmatprep.subr.mxu0 0.0
  %1008 = vmatpush1.xpose.msra.mxu0 0.0
  %1009 = vmatprep.subr.mxu0 0.0
  %1010 = vmatpush1.xpose.msra.mxu0 0.0
  %1011 = vmatprep.subr.mxu0 0.0
  %1012 = vmatpush1.xpose.msra.mxu0 0.0
  %1013 = vmatprep.mubr.f32.mxu0 0.0
  %1014 = vmatmul.mubr.f32.gmra.mrb[0].mxu0 %v917
  %v1015 = vpop.f32.mrb[0].mxu0
  %v1016 = vadd.f32 %v473, %v1015
  %v1017 = vpop.f32.mrb[0].mxu0
  %1018 = vmatprep.mubr.f32.mxu0 0.0
  %1019 = vmatmul.mubr.f32.gmra.mrb[0].mxu0 %v919
  %v1020 = vpop.f32.mrb[0].mxu0
  %v1021 = vadd.f32 %v474, %v1020
  %v1022 = vpop.f32.mrb[0].mxu0
  %1023 = vmatprep.mubr.f32.mxu0 0.0
  %1024 = vmatmul.mubr.f32.gmra.mrb[0].mxu0 %v921
  %v1025 = vpop.f32.mrb[0].mxu0
  %v1026 = vadd.f32 %v475, %v1025
  %v1027 = vpop.f32.mrb[0].mxu0
  %1028 = vmatprep.mubr.f32.mxu0 0.0
  %1029 = vmatmul.mubr.f32.gmra.mrb[0].mxu0 %v923
  %v1030 = vpop.f32.mrb[0].mxu0
  %v1031 = vadd.f32 %v476, %v1030
  %v1032 = vpop.f32.mrb[0].mxu0
  %1033 = vmatprep.mubr.f32.mxu0 0.0
  %1034 = vmatmul.mubr.f32.gmra.mrb[0].mxu0 %v925
  %v1035 = vpop.f32.mrb[0].mxu0
  %v1036 = vadd.f32 %v477, %v1035
  %v1037 = vpop.f32.mrb[0].mxu0
  %1038 = vmatprep.mubr.f32.mxu0 0.0
  %1039 = vmatmul.mubr.f32.gmra.mrb[0].mxu0 %v927
  %v1040 = vpop.f32.mrb[0].mxu0
  %v1041 = vadd.f32 %v478, %v1040
  %v1042 = vpop.f32.mrb[0].mxu0
  %1043 = vmatprep.mubr.f32.mxu0 0.0
  %1044 = vmatmul.mubr.f32.gmra.mrb[0].mxu0 %v929
  %v1045 = vpop.f32.mrb[0].mxu0
  %v1046 = vadd.f32 %v479, %v1045
  %v1047 = vpop.f32.mrb[0].mxu0
  %1048 = vmatprep.mubr.f32.mxu0 0.0
  %1049 = vmatmul.mubr.f32.gmra.mrb[0].mxu0 %v931
  %v1050 = vpop.f32.mrb[0].mxu0
  %v1051 = vadd.f32 %v480, %v1050
  %v1052 = vpop.f32.mrb[0].mxu0
  %1053 = vdwg.mxu0
  %v1054 = vsel %vm643, %v1016, -inf
  %1055 = vmax.xlane.f32.xlu0 %v1054
  %v1056 = vpop.xlane.xlu0 %1055
  %v1057 = vsel %vm643, %v1021, -inf
  %1058 = vmax.xlane.f32.xlu0 %v1057
  %v1059 = vpop.xlane.xlu0 %1058
  %v1060 = vsel %vm643, %v1026, -inf
  %1061 = vmax.xlane.f32.xlu0 %v1060
  %v1062 = vpop.xlane.xlu0 %1061
  %v1063 = vsel %vm643, %v1031, -inf
  %1064 = vmax.xlane.f32.xlu0 %v1063
  %v1065 = vpop.xlane.xlu0 %1064
  %v1066 = vsel %vm643, %v1036, -inf
  %1067 = vmax.xlane.f32.xlu0 %v1066
  %v1068 = vpop.xlane.xlu0 %1067
  %v1069 = vsel %vm643, %v1041, -inf
  %1070 = vmax.xlane.f32.xlu0 %v1069
  %v1071 = vpop.xlane.xlu0 %1070
  %v1072 = vsel %vm643, %v1046, -inf
  %1073 = vmax.xlane.f32.xlu0 %v1072
  %v1074 = vpop.xlane.xlu0 %1073
  %v1075 = vsel %vm643, %v1051, -inf
  %1076 = vmax.xlane.f32.xlu0 %v1075
  %v1077 = vpop.xlane.xlu0 %1076
  %v1078 = vsub.f32 %v1016, %v1056
  %v1079 = vsub.f32 %v1021, %v1059
  %v1080 = vsub.f32 %v1026, %v1062
  %v1081 = vsub.f32 %v1031, %v1065
  %v1082 = vsub.f32 %v1036, %v1068
  %v1083 = vsub.f32 %v1041, %v1071
  %v1084 = vsub.f32 %v1046, %v1074
  %v1085 = vsub.f32 %v1051, %v1077
  %v1086 = vmul.f32 %v1078, 1.442695
  %v1087 = vpow.pop %v1086
  %v1088 = vmul.f32 %v1079, 1.442695
  %v1089 = vpow.pop %v1088
  %v1090 = vmul.f32 %v1080, 1.442695
  %v1091 = vpow.pop %v1090
  %v1092 = vmul.f32 %v1081, 1.442695
  %v1093 = vpow.pop %v1092
  %v1094 = vmul.f32 %v1082, 1.442695
  %v1095 = vpow.pop %v1094
  %v1096 = vmul.f32 %v1083, 1.442695
  %v1097 = vpow.pop %v1096
  %v1098 = vmul.f32 %v1084, 1.442695
  %v1099 = vpow.pop %v1098
  %v1100 = vmul.f32 %v1085, 1.442695
  %v1101 = vpow.pop %v1100
  %v1102 = vsel %vm643, %v1087, 0.0
  %1103 = vadd.xlane.f32.xlu0 %v1102
  %v1104 = vpop.xlane.xlu0 %1103
  %v1105 = vsel %vm643, %v1089, 0.0
  %1106 = vadd.xlane.f32.xlu0 %v1105
  %v1107 = vpop.xlane.xlu0 %1106
  %v1108 = vsel %vm643, %v1091, 0.0
  %1109 = vadd.xlane.f32.xlu0 %v1108
  %v1110 = vpop.xlane.xlu0 %1109
  %v1111 = vsel %vm643, %v1093, 0.0
  %1112 = vadd.xlane.f32.xlu0 %v1111
  %v1113 = vpop.xlane.xlu0 %1112
  %v1114 = vsel %vm643, %v1095, 0.0
  %1115 = vadd.xlane.f32.xlu0 %v1114
  %v1116 = vpop.xlane.xlu0 %1115
  %v1117 = vsel %vm643, %v1097, 0.0
  %1118 = vadd.xlane.f32.xlu0 %v1117
  %v1119 = vpop.xlane.xlu0 %1118
  %v1120 = vsel %vm643, %v1099, 0.0
  %1121 = vadd.xlane.f32.xlu0 %v1120
  %v1122 = vpop.xlane.xlu0 %1121
  %v1123 = vsel %vm643, %v1101, 0.0
  %1124 = vadd.xlane.f32.xlu0 %v1123
  %v1125 = vpop.xlane.xlu0 %1124
  %v1126 = vrcp.pop %v1104
  %v1127 = vmul.f32 %v1087, %v1126
  %v1128 = vrcp.pop %v1107
  %v1129 = vmul.f32 %v1089, %v1128
  %v1130 = vrcp.pop %v1110
  %v1131 = vmul.f32 %v1091, %v1130
  %v1132 = vrcp.pop %v1113
  %v1133 = vmul.f32 %v1093, %v1132
  %v1134 = vrcp.pop %v1116
  %v1135 = vmul.f32 %v1095, %v1134
  %v1136 = vrcp.pop %v1119
  %v1137 = vmul.f32 %v1097, %v1136
  %v1138 = vrcp.pop %v1122
  %v1139 = vmul.f32 %v1099, %v1138
  %v1140 = vrcp.pop %v1125
  %v1141 = vmul.f32 %v1101, %v1140
  %1142 = vrot.lane.b32.xlu0 %v427, 64
  %v1143 = vpop.permute.xlu0 %1142
  %1144 = vrot.lane.b32.xlu0 %v432, 64
  %v1145 = vpop.permute.xlu0 %1144
  %1146 = vrot.lane.b32.xlu0 %v437, 64
  %v1147 = vpop.permute.xlu0 %1146
  %1148 = vrot.lane.b32.xlu0 %v442, 64
  %v1149 = vpop.permute.xlu0 %1148
  %1150 = vrot.lane.b32.xlu0 %v447, 64
  %v1151 = vpop.permute.xlu0 %1150
  %1152 = vrot.lane.b32.xlu0 %v452, 64
  %v1153 = vpop.permute.xlu0 %1152
  %1154 = vrot.lane.b32.xlu0 %v457, 64
  %v1155 = vpop.permute.xlu0 %1154
  %1156 = vrot.lane.b32.xlu0 %v462, 64
  %v1157 = vpop.permute.xlu0 %1156
  %v1167 = vsel %vm643, %v1127, 0
  %v1170 = vsel %vm643, %v1129, 0
  %v1173 = vsel %vm643, %v1131, 0
  %v1176 = vsel %vm643, %v1133, 0
  %v1179 = vsel %vm643, %v1135, 0
  %v1182 = vsel %vm643, %v1137, 0
  %v1185 = vsel %vm643, %v1139, 0
  %v1188 = vsel %vm643, %v1141, 0
  %1190 = vmatprep.subr.mxu0 0.0
  %1191 = vmatpush1.msra.mxu0 %v1143
  %1192 = vmatprep.subr.mxu0 0.0
  %1193 = vmatpush1.msra.mxu0 %v1145
  %1194 = vmatprep.subr.mxu0 0.0
  %1195 = vmatpush1.msra.mxu0 %v1147
  %1196 = vmatprep.subr.mxu0 0.0
  %1197 = vmatpush1.msra.mxu0 %v1149
  %1198 = vmatprep.subr.mxu0 0.0
  %1199 = vmatpush1.msra.mxu0 %v1151
  %1200 = vmatprep.subr.mxu0 0.0
  %1201 = vmatpush1.msra.mxu0 %v1153
  %1202 = vmatprep.subr.mxu0 0.0
  %1203 = vmatpush1.msra.mxu0 %v1155
  %1204 = vmatprep.subr.mxu0 0.0
  %1205 = vmatpush1.msra.mxu0 %v1157
  %1206 = vmatprep.subr.mxu0 0.0
  %1207 = vmatpush1.msra.mxu0 0.0
  %1208 = vmatprep.subr.mxu0 0.0
  %1209 = vmatpush1.msra.mxu0 0.0
  %1210 = vmatprep.subr.mxu0 0.0
  %1211 = vmatpush1.msra.mxu0 0.0
  %1212 = vmatprep.subr.mxu0 0.0
  %1213 = vmatpush1.msra.mxu0 0.0
  %1214 = vmatprep.subr.mxu0 0.0
  %1215 = vmatpush1.msra.mxu0 0.0
  %1216 = vmatprep.subr.mxu0 0.0
  %1217 = vmatpush1.msra.mxu0 0.0
  %1218 = vmatprep.subr.mxu0 0.0
  %1219 = vmatpush1.msra.mxu0 0.0
  %1220 = vmatprep.subr.mxu0 0.0
  %1221 = vmatpush1.msra.mxu0 0.0
  %1222 = vmatprep.subr.mxu0 0.0
  %1223 = vmatpush1.msra.mxu0 0.0
  %1224 = vmatprep.subr.mxu0 0.0
  %1225 = vmatpush1.msra.mxu0 0.0
  %1226 = vmatprep.subr.mxu0 0.0
  %1227 = vmatpush1.msra.mxu0 0.0
  %1228 = vmatprep.subr.mxu0 0.0
  %1229 = vmatpush1.msra.mxu0 0.0
  %1230 = vmatprep.subr.mxu0 0.0
  %1231 = vmatpush1.msra.mxu0 0.0
  %1232 = vmatprep.subr.mxu0 0.0
  %1233 = vmatpush1.msra.mxu0 0.0
  %1234 = vmatprep.subr.mxu0 0.0
  %1235 = vmatpush1.msra.mxu0 0.0
  %1236 = vmatprep.subr.mxu0 0.0
  %1237 = vmatpush1.msra.mxu0 0.0
  %1238 = vmatprep.subr.mxu0 0.0
  %1239 = vmatpush1.msra.mxu0 0.0
  %1240 = vmatprep.subr.mxu0 0.0
  %1241 = vmatpush1.msra.mxu0 0.0
  %1242 = vmatprep.subr.mxu0 0.0
  %1243 = vmatpush1.msra.mxu0 0.0
  %1244 = vmatprep.subr.mxu0 0.0
  %1245 = vmatpush1.msra.mxu0 0.0
  %1246 = vmatprep.subr.mxu0 0.0
  %1247 = vmatpush1.msra.mxu0 0.0
  %1248 = vmatprep.subr.mxu0 0.0
  %1249 = vmatpush1.msra.mxu0 0.0
  %1250 = vmatprep.subr.mxu0 0.0
  %1251 = vmatpush1.msra.mxu0 0.0
  %1252 = vmatprep.subr.mxu0 0.0
  %1253 = vmatpush1.msra.mxu0 0.0
  %1254 = vmatprep.mubr.f32.mxu0 0.0
  %1255 = vmatmul.mubr.f32.gmra.mrb[0].mxu0 %v1167
  %v1256 = vpop.f32.mrb[0].mxu0
  %v1257 = vadd.f32 0.0, %v1256
  %v1258 = vpop.f32.mrb[0].mxu0
  %1259 = vmatprep.mubr.f32.mxu0 0.0
  %1260 = vmatmul.mubr.f32.gmra.mrb[0].mxu0 %v1170
  %v1261 = vpop.f32.mrb[0].mxu0
  %v1262 = vadd.f32 0.0, %v1261
  %v1263 = vpop.f32.mrb[0].mxu0
  %1264 = vmatprep.mubr.f32.mxu0 0.0
  %1265 = vmatmul.mubr.f32.gmra.mrb[0].mxu0 %v1173
  %v1266 = vpop.f32.mrb[0].mxu0
  %v1267 = vadd.f32 0.0, %v1266
  %v1268 = vpop.f32.mrb[0].mxu0
  %1269 = vmatprep.mubr.f32.mxu0 0.0
  %1270 = vmatmul.mubr.f32.gmra.mrb[0].mxu0 %v1176
  %v1271 = vpop.f32.mrb[0].mxu0
  %v1272 = vadd.f32 0.0, %v1271
  %v1273 = vpop.f32.mrb[0].mxu0
  %1274 = vmatprep.mubr.f32.mxu0 0.0
  %1275 = vmatmul.mubr.f32.gmra.mrb[0].mxu0 %v1179
  %v1276 = vpop.f32.mrb[0].mxu0
  %v1277 = vadd.f32 0.0, %v1276
  %v1278 = vpop.f32.mrb[0].mxu0
  %1279 = vmatprep.mubr.f32.mxu0 0.0
  %1280 = vmatmul.mubr.f32.gmra.mrb[0].mxu0 %v1182
  %v1281 = vpop.f32.mrb[0].mxu0
  %v1282 = vadd.f32 0.0, %v1281
  %v1283 = vpop.f32.mrb[0].mxu0
  %1284 = vmatprep.mubr.f32.mxu0 0.0
  %1285 = vmatmul.mubr.f32.gmra.mrb[0].mxu0 %v1185
  %v1286 = vpop.f32.mrb[0].mxu0
  %v1287 = vadd.f32 0.0, %v1286
  %v1288 = vpop.f32.mrb[0].mxu0
  %1289 = vmatprep.mubr.f32.mxu0 0.0
  %1290 = vmatmul.mubr.f32.gmra.mrb[0].mxu0 %v1188
  %v1291 = vpop.f32.mrb[0].mxu0
  %v1292 = vadd.f32 0.0, %v1291
  %v1293 = vpop.f32.mrb[0].mxu0
  %1294 = vdwg.mxu0
  %1295 = vst.msk [vmem:[#allocation2 + $0x40] sm:$0xff] %vm505, %v1257
  %1296 = vst.msk [vmem:[#allocation2 + $0x48] sm:$0xff] %vm505, %v1262
  %1297 = vst.msk [vmem:[#allocation2 + $0x50] sm:$0xff] %vm505, %v1267
  %1298 = vst.msk [vmem:[#allocation2 + $0x58] sm:$0xff] %vm505, %v1272
  %1299 = vst.msk [vmem:[#allocation2 + $0x60] sm:$0xff] %vm505, %v1277
  %1300 = vst.msk [vmem:[#allocation2 + $0x68] sm:$0xff] %vm505, %v1282
  %1301 = vst.msk [vmem:[#allocation2 + $0x70] sm:$0xff] %vm505, %v1287
  %1302 = vst.msk [vmem:[#allocation2 + $0x78] sm:$0xff] %vm505, %v1292
  %s1303 = scalar_lea.vmem %s1, 32
  %v1304 = vld [vmem:[%s1303] sm:$0xf]
  %v1305 = vld [vmem:[%s1303 + $0x4] sm:$0xf]
  %v1306 = vld [vmem:[%s1303 + $0x8] sm:$0xf]
  %v1307 = vld [vmem:[%s1303 + $0xc] sm:$0xf]
  %v1308 = vld [vmem:[%s1303 + $0x10] sm:$0xf]
  %v1309 = vld [vmem:[%s1303 + $0x14] sm:$0xf]
  %v1310 = vld [vmem:[%s1303 + $0x18] sm:$0xf]
  %v1311 = vld [vmem:[%s1303 + $0x1c] sm:$0xf]
  %v1312 = vunpack.c.l.bf16 %v1304
  %v1313 = vunpack.c.l.bf16 %v1305
  %v1314 = vunpack.c.l.bf16 %v1306
  %v1315 = vunpack.c.l.bf16 %v1307
  %v1316 = vunpack.c.l.bf16 %v1308
  %v1317 = vunpack.c.l.bf16 %v1309
  %v1318 = vunpack.c.l.bf16 %v1310
  %v1319 = vunpack.c.l.bf16 %v1311
  %1320 = vrot.lane.b32.xlu0 %v387, 120
  %v1321 = vpop.permute.xlu0 %1320
  %1322 = vrot.lane.b32.xlu0 %v392, 120
  %v1323 = vpop.permute.xlu0 %1322
  %1324 = vrot.lane.b32.xlu0 %v397, 120
  %v1325 = vpop.permute.xlu0 %1324
  %1326 = vrot.lane.b32.xlu0 %v402, 120
  %v1327 = vpop.permute.xlu0 %1326
  %1328 = vrot.lane.b32.xlu0 %v407, 120
  %v1329 = vpop.permute.xlu0 %1328
  %1330 = vrot.lane.b32.xlu0 %v412, 120
  %v1331 = vpop.permute.xlu0 %1330
  %1332 = vrot.lane.b32.xlu0 %v417, 120
  %v1333 = vpop.permute.xlu0 %1332
  %1334 = vrot.lane.b32.xlu0 %v422, 120
  %v1335 = vpop.permute.xlu0 %1334
  %1336 = vrot.lane.b32.xlu0 %v387, 88
  %v1337 = vpop.permute.xlu0 %1336
  %1338 = vrot.lane.b32.xlu0 %v392, 88
  %v1339 = vpop.permute.xlu0 %1338
  %1340 = vrot.lane.b32.xlu0 %v397, 88
  %v1341 = vpop.permute.xlu0 %1340
  %1342 = vrot.lane.b32.xlu0 %v402, 88
  %v1343 = vpop.permute.xlu0 %1342
  %1344 = vrot.lane.b32.xlu0 %v407, 88
  %v1345 = vpop.permute.xlu0 %1344
  %1346 = vrot.lane.b32.xlu0 %v412, 88
  %v1347 = vpop.permute.xlu0 %1346
  %1348 = vrot.lane.b32.xlu0 %v417, 88
  %v1349 = vpop.permute.xlu0 %1348
  %1350 = vrot.lane.b32.xlu0 %v422, 88
  %v1351 = vpop.permute.xlu0 %1350
  %v1352 = vsel %vm505, %v1321, 0
  %v1354 = vsel %vm505, %v1323, 0
  %v1356 = vsel %vm505, %v1325, 0
  %v1358 = vsel %vm505, %v1327, 0
  %v1360 = vsel %vm505, %v1329, 0
  %v1362 = vsel %vm505, %v1331, 0
  %v1364 = vsel %vm505, %v1333, 0
  %v1366 = vsel %vm505, %v1335, 0
  %v1368 = vsel %vm505, %v1337, 0
  %v1370 = vsel %vm505, %v1339, 0
  %v1372 = vsel %vm505, %v1341, 0
  %v1374 = vsel %vm505, %v1343, 0
  %v1376 = vsel %vm505, %v1345, 0
  %v1378 = vsel %vm505, %v1347, 0
  %v1380 = vsel %vm505, %v1349, 0
  %v1382 = vsel %vm505, %v1351, 0
  %1384 = vmatprep.subr.mxu0 0.0
  %1385 = vmatpush1.xpose.msra.mxu0 %v1368
  %1386 = vmatprep.subr.mxu0 0.0
  %1387 = vmatpush1.xpose.msra.mxu0 %v1370
  %1388 = vmatprep.subr.mxu0 0.0
  %1389 = vmatpush1.xpose.msra.mxu0 %v1372
  %1390 = vmatprep.subr.mxu0 0.0
  %1391 = vmatpush1.xpose.msra.mxu0 %v1374
  %1392 = vmatprep.subr.mxu0 0.0
  %1393 = vmatpush1.xpose.msra.mxu0 %v1376
  %1394 = vmatprep.subr.mxu0 0.0
  %1395 = vmatpush1.xpose.msra.mxu0 %v1378
  %1396 = vmatprep.subr.mxu0 0.0
  %1397 = vmatpush1.xpose.msra.mxu0 %v1380
  %1398 = vmatprep.subr.mxu0 0.0
  %1399 = vmatpush1.xpose.msra.mxu0 %v1382
  %1400 = vmatprep.subr.mxu0 0.0
  %1401 = vmatpush1.xpose.msra.mxu0 0.0
  %1402 = vmatprep.subr.mxu0 0.0
  %1403 = vmatpush1.xpose.msra.mxu0 0.0
  %1404 = vmatprep.subr.mxu0 0.0
  %1405 = vmatpush1.xpose.msra.mxu0 0.0
  %1406 = vmatprep.subr.mxu0 0.0
  %1407 = vmatpush1.xpose.msra.mxu0 0.0
  %1408 = vmatprep.subr.mxu0 0.0
  %1409 = vmatpush1.xpose.msra.mxu0 0.0
  %1410 = vmatprep.subr.mxu0 0.0
  %1411 = vmatpush1.xpose.msra.mxu0 0.0
  %1412 = vmatprep.subr.mxu0 0.0
  %1413 = vmatpush1.xpose.msra.mxu0 0.0
  %1414 = vmatprep.subr.mxu0 0.0
  %1415 = vmatpush1.xpose.msra.mxu0 0.0
  %1416 = vmatprep.subr.mxu0 0.0
  %1417 = vmatpush1.xpose.msra.mxu0 0.0
  %1418 = vmatprep.subr.mxu0 0.0
  %1419 = vmatpush1.xpose.msra.mxu0 0.0
  %1420 = vmatprep.subr.mxu0 0.0
  %1421 = vmatpush1.xpose.msra.mxu0 0.0
  %1422 = vmatprep.subr.mxu0 0.0
  %1423 = vmatpush1.xpose.msra.mxu0 0.0
  %1424 = vmatprep.subr.mxu0 0.0
  %1425 = vmatpush1.xpose.msra.mxu0 0.0
  %1426 = vmatprep.subr.mxu0 0.0
  %1427 = vmatpush1.xpose.msra.mxu0 0.0
  %1428 = vmatprep.subr.mxu0 0.0
  %1429 = vmatpush1.xpose.msra.mxu0 0.0
  %1430 = vmatprep.subr.mxu0 0.0
  %1431 = vmatpush1.xpose.msra.mxu0 0.0
  %1432 = vmatprep.subr.mxu0 0.0
  %1433 = vmatpush1.xpose.msra.mxu0 0.0
  %1434 = vmatprep.subr.mxu0 0.0
  %1435 = vmatpush1.xpose.msra.mxu0 0.0
  %1436 = vmatprep.subr.mxu0 0.0
  %1437 = vmatpush1.xpose.msra.mxu0 0.0
  %1438 = vmatprep.subr.mxu0 0.0
  %1439 = vmatpush1.xpose.msra.mxu0 0.0
  %1440 = vmatprep.subr.mxu0 0.0
  %1441 = vmatpush1.xpose.msra.mxu0 0.0
  %1442 = vmatprep.subr.mxu0 0.0
  %1443 = vmatpush1.xpose.msra.mxu0 0.0
  %1444 = vmatprep.subr.mxu0 0.0
  %1445 = vmatpush1.xpose.msra.mxu0 0.0
  %1446 = vmatprep.subr.mxu0 0.0
  %1447 = vmatpush1.xpose.msra.mxu0 0.0
  %1448 = vmatprep.mubr.f32.mxu0 0.0
  %1449 = vmatmul.mubr.f32.gmra.mrb[0].mxu0 %v1352
  %v1450 = vpop.f32.mrb[0].mxu0
  %v1451 = vadd.f32 %v1312, %v1450
  %v1452 = vpop.f32.mrb[0].mxu0
  %1453 = vmatprep.mubr.f32.mxu0 0.0
  %1454 = vmatmul.mubr.f32.gmra.mrb[0].mxu0 %v1354
  %v1455 = vpop.f32.mrb[0].mxu0
  %v1456 = vadd.f32 %v1313, %v1455
  %v1457 = vpop.f32.mrb[0].mxu0
  %1458 = vmatprep.mubr.f32.mxu0 0.0
  %1459 = vmatmul.mubr.f32.gmra.mrb[0].mxu0 %v1356
  %v1460 = vpop.f32.mrb[0].mxu0
  %v1461 = vadd.f32 %v1314, %v1460
  %v1462 = vpop.f32.mrb[0].mxu0
  %1463 = vmatprep.mubr.f32.mxu0 0.0
  %1464 = vmatmul.mubr.f32.gmra.mrb[0].mxu0 %v1358
  %v1465 = vpop.f32.mrb[0].mxu0
  %v1466 = vadd.f32 %v1315, %v1465
  %v1467 = vpop.f32.mrb[0].mxu0
  %1468 = vmatprep.mubr.f32.mxu0 0.0
  %1469 = vmatmul.mubr.f32.gmra.mrb[0].mxu0 %v1360
  %v1470 = vpop.f32.mrb[0].mxu0
  %v1471 = vadd.f32 %v1316, %v1470
  %v1472 = vpop.f32.mrb[0].mxu0
  %1473 = vmatprep.mubr.f32.mxu0 0.0
  %1474 = vmatmul.mubr.f32.gmra.mrb[0].mxu0 %v1362
  %v1475 = vpop.f32.mrb[0].mxu0
  %v1476 = vadd.f32 %v1317, %v1475
  %v1477 = vpop.f32.mrb[0].mxu0
  %1478 = vmatprep.mubr.f32.mxu0 0.0
  %1479 = vmatmul.mubr.f32.gmra.mrb[0].mxu0 %v1364
  %v1480 = vpop.f32.mrb[0].mxu0
  %v1481 = vadd.f32 %v1318, %v1480
  %v1482 = vpop.f32.mrb[0].mxu0
  %1483 = vmatprep.mubr.f32.mxu0 0.0
  %1484 = vmatmul.mubr.f32.gmra.mrb[0].mxu0 %v1366
  %v1485 = vpop.f32.mrb[0].mxu0
  %v1486 = vadd.f32 %v1319, %v1485
  %v1487 = vpop.f32.mrb[0].mxu0
  %1488 = vdwg.mxu0
  %v1489 = vsel %vm643, %v1451, -inf
  %1490 = vmax.xlane.f32.xlu0 %v1489
  %v1491 = vpop.xlane.xlu0 %1490
  %v1492 = vsel %vm643, %v1456, -inf
  %1493 = vmax.xlane.f32.xlu0 %v1492
  %v1494 = vpop.xlane.xlu0 %1493
  %v1495 = vsel %vm643, %v1461, -inf
  %1496 = vmax.xlane.f32.xlu0 %v1495
  %v1497 = vpop.xlane.xlu0 %1496
  %v1498 = vsel %vm643, %v1466, -inf
  %1499 = vmax.xlane.f32.xlu0 %v1498
  %v1500 = vpop.xlane.xlu0 %1499
  %v1501 = vsel %vm643, %v1471, -inf
  %1502 = vmax.xlane.f32.xlu0 %v1501
  %v1503 = vpop.xlane.xlu0 %1502
  %v1504 = vsel %vm643, %v1476, -inf
  %1505 = vmax.xlane.f32.xlu0 %v1504
  %v1506 = vpop.xlane.xlu0 %1505
  %v1507 = vsel %vm643, %v1481, -inf
  %1508 = vmax.xlane.f32.xlu0 %v1507
  %v1509 = vpop.xlane.xlu0 %1508
  %v1510 = vsel %vm643, %v1486, -inf
  %1511 = vmax.xlane.f32.xlu0 %v1510
  %v1512 = vpop.xlane.xlu0 %1511
  %v1513 = vsub.f32 %v1451, %v1491
  %v1514 = vsub.f32 %v1456, %v1494
  %v1515 = vsub.f32 %v1461, %v1497
  %v1516 = vsub.f32 %v1466, %v1500
  %v1517 = vsub.f32 %v1471, %v1503
  %v1518 = vsub.f32 %v1476, %v1506
  %v1519 = vsub.f32 %v1481, %v1509
  %v1520 = vsub.f32 %v1486, %v1512
  %v1521 = vmul.f32 %v1513, 1.442695
  %v1522 = vpow.pop %v1521
  %v1523 = vmul.f32 %v1514, 1.442695
  %v1524 = vpow.pop %v1523
  %v1525 = vmul.f32 %v1515, 1.442695
  %v1526 = vpow.pop %v1525
  %v1527 = vmul.f32 %v1516, 1.442695
  %v1528 = vpow.pop %v1527
  %v1529 = vmul.f32 %v1517, 1.442695
  %v1530 = vpow.pop %v1529
  %v1531 = vmul.f32 %v1518, 1.442695
  %v1532 = vpow.pop %v1531
  %v1533 = vmul.f32 %v1519, 1.442695
  %v1534 = vpow.pop %v1533
  %v1535 = vmul.f32 %v1520, 1.442695
  %v1536 = vpow.pop %v1535
  %v1537 = vsel %vm643, %v1522, 0.0
  %1538 = vadd.xlane.f32.xlu0 %v1537
  %v1539 = vpop.xlane.xlu0 %1538
  %v1540 = vsel %vm643, %v1524, 0.0
  %1541 = vadd.xlane.f32.xlu0 %v1540
  %v1542 = vpop.xlane.xlu0 %1541
  %v1543 = vsel %vm643, %v1526, 0.0
  %1544 = vadd.xlane.f32.xlu0 %v1543
  %v1545 = vpop.xlane.xlu0 %1544
  %v1546 = vsel %vm643, %v1528, 0.0
  %1547 = vadd.xlane.f32.xlu0 %v1546
  %v1548 = vpop.xlane.xlu0 %1547
  %v1549 = vsel %vm643, %v1530, 0.0
  %1550 = vadd.xlane.f32.xlu0 %v1549
  %v1551 = vpop.xlane.xlu0 %1550
  %v1552 = vsel %vm643, %v1532, 0.0
  %1553 = vadd.xlane.f32.xlu0 %v1552
  %v1554 = vpop.xlane.xlu0 %1553
  %v1555 = vsel %vm643, %v1534, 0.0
  %1556 = vadd.xlane.f32.xlu0 %v1555
  %v1557 = vpop.xlane.xlu0 %1556
  %v1558 = vsel %vm643, %v1536, 0.0
  %1559 = vadd.xlane.f32.xlu0 %v1558
  %v1560 = vpop.xlane.xlu0 %1559
  %v1561 = vrcp.pop %v1539
  %v1562 = vmul.f32 %v1522, %v1561
  %v1563 = vrcp.pop %v1542
  %v1564 = vmul.f32 %v1524, %v1563
  %v1565 = vrcp.pop %v1545
  %v1566 = vmul.f32 %v1526, %v1565
  %v1567 = vrcp.pop %v1548
  %v1568 = vmul.f32 %v1528, %v1567
  %v1569 = vrcp.pop %v1551
  %v1570 = vmul.f32 %v1530, %v1569
  %v1571 = vrcp.pop %v1554
  %v1572 = vmul.f32 %v1532, %v1571
  %v1573 = vrcp.pop %v1557
  %v1574 = vmul.f32 %v1534, %v1573
  %v1575 = vrcp.pop %v1560
  %v1576 = vmul.f32 %v1536, %v1575
  %1577 = vrot.lane.b32.xlu0 %v387, 56
  %v1578 = vpop.permute.xlu0 %1577
  %1579 = vrot.lane.b32.xlu0 %v392, 56
  %v1580 = vpop.permute.xlu0 %1579
  %1581 = vrot.lane.b32.xlu0 %v397, 56
  %v1582 = vpop.permute.xlu0 %1581
  %1583 = vrot.lane.b32.xlu0 %v402, 56
  %v1584 = vpop.permute.xlu0 %1583
  %1585 = vrot.lane.b32.xlu0 %v407, 56
  %v1586 = vpop.permute.xlu0 %1585
  %1587 = vrot.lane.b32.xlu0 %v412, 56
  %v1588 = vpop.permute.xlu0 %1587
  %1589 = vrot.lane.b32.xlu0 %v417, 56
  %v1590 = vpop.permute.xlu0 %1589
  %1591 = vrot.lane.b32.xlu0 %v422, 56
  %v1592 = vpop.permute.xlu0 %1591
  %v1602 = vsel %vm643, %v1562, 0
  %v1605 = vsel %vm643, %v1564, 0
  %v1608 = vsel %vm643, %v1566, 0
  %v1611 = vsel %vm643, %v1568, 0
  %v1614 = vsel %vm643, %v1570, 0
  %v1617 = vsel %vm643, %v1572, 0
  %v1620 = vsel %vm643, %v1574, 0
  %v1623 = vsel %vm643, %v1576, 0
  %1625 = vmatprep.subr.mxu0 0.0
  %1626 = vmatpush1.msra.mxu0 %v1578
  %1627 = vmatprep.subr.mxu0 0.0
  %1628 = vmatpush1.msra.mxu0 %v1580
  %1629 = vmatprep.subr.mxu0 0.0
  %1630 = vmatpush1.msra.mxu0 %v1582
  %1631 = vmatprep.subr.mxu0 0.0
  %1632 = vmatpush1.msra.mxu0 %v1584
  %1633 = vmatprep.subr.mxu0 0.0
  %1634 = vmatpush1.msra.mxu0 %v1586
  %1635 = vmatprep.subr.mxu0 0.0
  %1636 = vmatpush1.msra.mxu0 %v1588
  %1637 = vmatprep.subr.mxu0 0.0
  %1638 = vmatpush1.msra.mxu0 %v1590
  %1639 = vmatprep.subr.mxu0 0.0
  %1640 = vmatpush1.msra.mxu0 %v1592
  %1641 = vmatprep.subr.mxu0 0.0
  %1642 = vmatpush1.msra.mxu0 0.0
  %1643 = vmatprep.subr.mxu0 0.0
  %1644 = vmatpush1.msra.mxu0 0.0
  %1645 = vmatprep.subr.mxu0 0.0
  %1646 = vmatpush1.msra.mxu0 0.0
  %1647 = vmatprep.subr.mxu0 0.0
  %1648 = vmatpush1.msra.mxu0 0.0
  %1649 = vmatprep.subr.mxu0 0.0
  %1650 = vmatpush1.msra.mxu0 0.0
  %1651 = vmatprep.subr.mxu0 0.0
  %1652 = vmatpush1.msra.mxu0 0.0
  %1653 = vmatprep.subr.mxu0 0.0
  %1654 = vmatpush1.msra.mxu0 0.0
  %1655 = vmatprep.subr.mxu0 0.0
  %1656 = vmatpush1.msra.mxu0 0.0
  %1657 = vmatprep.subr.mxu0 0.0
  %1658 = vmatpush1.msra.mxu0 0.0
  %1659 = vmatprep.subr.mxu0 0.0
  %1660 = vmatpush1.msra.mxu0 0.0
  %1661 = vmatprep.subr.mxu0 0.0
  %1662 = vmatpush1.msra.mxu0 0.0
  %1663 = vmatprep.subr.mxu0 0.0
  %1664 = vmatpush1.msra.mxu0 0.0
  %1665 = vmatprep.subr.mxu0 0.0
  %1666 = vmatpush1.msra.mxu0 0.0
  %1667 = vmatprep.subr.mxu0 0.0
  %1668 = vmatpush1.msra.mxu0 0.0
  %1669 = vmatprep.subr.mxu0 0.0
  %1670 = vmatpush1.msra.mxu0 0.0
  %1671 = vmatprep.subr.mxu0 0.0
  %1672 = vmatpush1.msra.mxu0 0.0
  %1673 = vmatprep.subr.mxu0 0.0
  %1674 = vmatpush1.msra.mxu0 0.0
  %1675 = vmatprep.subr.mxu0 0.0
  %1676 = vmatpush1.msra.mxu0 0.0
  %1677 = vmatprep.subr.mxu0 0.0
  %1678 = vmatpush1.msra.mxu0 0.0
  %1679 = vmatprep.subr.mxu0 0.0
  %1680 = vmatpush1.msra.mxu0 0.0
  %1681 = vmatprep.subr.mxu0 0.0
  %1682 = vmatpush1.msra.mxu0 0.0
  %1683 = vmatprep.subr.mxu0 0.0
  %1684 = vmatpush1.msra.mxu0 0.0
  %1685 = vmatprep.subr.mxu0 0.0
  %1686 = vmatpush1.msra.mxu0 0.0
  %1687 = vmatprep.subr.mxu0 0.0
  %1688 = vmatpush1.msra.mxu0 0.0
  %1689 = vmatprep.mubr.f32.mxu0 0.0
  %1690 = vmatmul.mubr.f32.gmra.mrb[0].mxu0 %v1602
  %v1691 = vpop.f32.mrb[0].mxu0
  %v1692 = vadd.f32 0.0, %v1691
  %v1693 = vpop.f32.mrb[0].mxu0
  %1694 = vmatprep.mubr.f32.mxu0 0.0
  %1695 = vmatmul.mubr.f32.gmra.mrb[0].mxu0 %v1605
  %v1696 = vpop.f32.mrb[0].mxu0
  %v1697 = vadd.f32 0.0, %v1696
  %v1698 = vpop.f32.mrb[0].mxu0
  %1699 = vmatprep.mubr.f32.mxu0 0.0
  %1700 = vmatmul.mubr.f32.gmra.mrb[0].mxu0 %v1608
  %v1701 = vpop.f32.mrb[0].mxu0
  %v1702 = vadd.f32 0.0, %v1701
  %v1703 = vpop.f32.mrb[0].mxu0
  %1704 = vmatprep.mubr.f32.mxu0 0.0
  %1705 = vmatmul.mubr.f32.gmra.mrb[0].mxu0 %v1611
  %v1706 = vpop.f32.mrb[0].mxu0
  %v1707 = vadd.f32 0.0, %v1706
  %v1708 = vpop.f32.mrb[0].mxu0
  %1709 = vmatprep.mubr.f32.mxu0 0.0
  %1710 = vmatmul.mubr.f32.gmra.mrb[0].mxu0 %v1614
  %v1711 = vpop.f32.mrb[0].mxu0
  %v1712 = vadd.f32 0.0, %v1711
  %v1713 = vpop.f32.mrb[0].mxu0
  %1714 = vmatprep.mubr.f32.mxu0 0.0
  %1715 = vmatmul.mubr.f32.gmra.mrb[0].mxu0 %v1617
  %v1716 = vpop.f32.mrb[0].mxu0
  %v1717 = vadd.f32 0.0, %v1716
  %v1718 = vpop.f32.mrb[0].mxu0
  %1719 = vmatprep.mubr.f32.mxu0 0.0
  %1720 = vmatmul.mubr.f32.gmra.mrb[0].mxu0 %v1620
  %v1721 = vpop.f32.mrb[0].mxu0
  %v1722 = vadd.f32 0.0, %v1721
  %v1723 = vpop.f32.mrb[0].mxu0
  %1724 = vmatprep.mubr.f32.mxu0 0.0
  %1725 = vmatmul.mubr.f32.gmra.mrb[0].mxu0 %v1623
  %v1726 = vpop.f32.mrb[0].mxu0
  %v1727 = vadd.f32 0.0, %v1726
  %v1728 = vpop.f32.mrb[0].mxu0
  %1729 = vdwg.mxu0
  %1738 = vrot.lane.b32.xlu0 %v1692, 8
  %v1739 = vpop.permute.xlu0 %1738
  %1740 = vrot.lane.b32.xlu0 %v1697, 8
  %v1741 = vpop.permute.xlu0 %1740
  %1742 = vrot.lane.b32.xlu0 %v1702, 8
  %v1743 = vpop.permute.xlu0 %1742
  %1744 = vrot.lane.b32.xlu0 %v1707, 8
  %v1745 = vpop.permute.xlu0 %1744
  %1746 = vrot.lane.b32.xlu0 %v1712, 8
  %v1747 = vpop.permute.xlu0 %1746
  %1748 = vrot.lane.b32.xlu0 %v1717, 8
  %v1749 = vpop.permute.xlu0 %1748
  %1750 = vrot.lane.b32.xlu0 %v1722, 8
  %v1751 = vpop.permute.xlu0 %1750
  %1752 = vrot.lane.b32.xlu0 %v1727, 8
  %v1753 = vpop.permute.xlu0 %1752
  %vm1762 = vcmask 130112
  %1763 = vst.msk [vmem:[#allocation2] sm:$0xff] %vm1762, %v1739
  %1764 = vst.msk [vmem:[#allocation2 + $0x8] sm:$0xff] %vm1762, %v1741
  %1765 = vst.msk [vmem:[#allocation2 + $0x10] sm:$0xff] %vm1762, %v1743
  %1766 = vst.msk [vmem:[#allocation2 + $0x18] sm:$0xff] %vm1762, %v1745
  %1767 = vst.msk [vmem:[#allocation2 + $0x20] sm:$0xff] %vm1762, %v1747
  %1768 = vst.msk [vmem:[#allocation2 + $0x28] sm:$0xff] %vm1762, %v1749
  %1769 = vst.msk [vmem:[#allocation2 + $0x30] sm:$0xff] %vm1762, %v1751
  %1770 = vst.msk [vmem:[#allocation2 + $0x38] sm:$0xff] %vm1762, %v1753
  %1771 = vrot.lane.b32.xlu0 %v427, 120
  %v1772 = vpop.permute.xlu0 %1771
  %1773 = vrot.lane.b32.xlu0 %v432, 120
  %v1774 = vpop.permute.xlu0 %1773
  %1775 = vrot.lane.b32.xlu0 %v437, 120
  %v1776 = vpop.permute.xlu0 %1775
  %1777 = vrot.lane.b32.xlu0 %v442, 120
  %v1778 = vpop.permute.xlu0 %1777
  %1779 = vrot.lane.b32.xlu0 %v447, 120
  %v1780 = vpop.permute.xlu0 %1779
  %1781 = vrot.lane.b32.xlu0 %v452, 120
  %v1782 = vpop.permute.xlu0 %1781
  %1783 = vrot.lane.b32.xlu0 %v457, 120
  %v1784 = vpop.permute.xlu0 %1783
  %1785 = vrot.lane.b32.xlu0 %v462, 120
  %v1786 = vpop.permute.xlu0 %1785
  %1787 = vrot.lane.b32.xlu0 %v427, 88
  %v1788 = vpop.permute.xlu0 %1787
  %1789 = vrot.lane.b32.xlu0 %v432, 88
  %v1790 = vpop.permute.xlu0 %1789
  %1791 = vrot.lane.b32.xlu0 %v437, 88
  %v1792 = vpop.permute.xlu0 %1791
  %1793 = vrot.lane.b32.xlu0 %v442, 88
  %v1794 = vpop.permute.xlu0 %1793
  %1795 = vrot.lane.b32.xlu0 %v447, 88
  %v1796 = vpop.permute.xlu0 %1795
  %1797 = vrot.lane.b32.xlu0 %v452, 88
  %v1798 = vpop.permute.xlu0 %1797
  %1799 = vrot.lane.b32.xlu0 %v457, 88
  %v1800 = vpop.permute.xlu0 %1799
  %1801 = vrot.lane.b32.xlu0 %v462, 88
  %v1802 = vpop.permute.xlu0 %1801
  %v1803 = vsel %vm505, %v1772, 0
  %v1805 = vsel %vm505, %v1774, 0
  %v1807 = vsel %vm505, %v1776, 0
  %v1809 = vsel %vm505, %v1778, 0
  %v1811 = vsel %vm505, %v1780, 0
  %v1813 = vsel %vm505, %v1782, 0
  %v1815 = vsel %vm505, %v1784, 0
  %v1817 = vsel %vm505, %v1786, 0
  %v1819 = vsel %vm505, %v1788, 0
  %v1821 = vsel %vm505, %v1790, 0
  %v1823 = vsel %vm505, %v1792, 0
  %v1825 = vsel %vm505, %v1794, 0
  %v1827 = vsel %vm505, %v1796, 0
  %v1829 = vsel %vm505, %v1798, 0
  %v1831 = vsel %vm505, %v1800, 0
  %v1833 = vsel %vm505, %v1802, 0
  %1835 = vmatprep.subr.mxu0 0.0
  %1836 = vmatpush1.xpose.msra.mxu0 %v1819
  %1837 = vmatprep.subr.mxu0 0.0
  %1838 = vmatpush1.xpose.msra.mxu0 %v1821
  %1839 = vmatprep.subr.mxu0 0.0
  %1840 = vmatpush1.xpose.msra.mxu0 %v1823
  %1841 = vmatprep.subr.mxu0 0.0
  %1842 = vmatpush1.xpose.msra.mxu0 %v1825
  %1843 = vmatprep.subr.mxu0 0.0
  %1844 = vmatpush1.xpose.msra.mxu0 %v1827
  %1845 = vmatprep.subr.mxu0 0.0
  %1846 = vmatpush1.xpose.msra.mxu0 %v1829
  %1847 = vmatprep.subr.mxu0 0.0
  %1848 = vmatpush1.xpose.msra.mxu0 %v1831
  %1849 = vmatprep.subr.mxu0 0.0
  %1850 = vmatpush1.xpose.msra.mxu0 %v1833
  %1851 = vmatprep.subr.mxu0 0.0
  %1852 = vmatpush1.xpose.msra.mxu0 0.0
  %1853 = vmatprep.subr.mxu0 0.0
  %1854 = vmatpush1.xpose.msra.mxu0 0.0
  %1855 = vmatprep.subr.mxu0 0.0
  %1856 = vmatpush1.xpose.msra.mxu0 0.0
  %1857 = vmatprep.subr.mxu0 0.0
  %1858 = vmatpush1.xpose.msra.mxu0 0.0
  %1859 = vmatprep.subr.mxu0 0.0
  %1860 = vmatpush1.xpose.msra.mxu0 0.0
  %1861 = vmatprep.subr.mxu0 0.0
  %1862 = vmatpush1.xpose.msra.mxu0 0.0
  %1863 = vmatprep.subr.mxu0 0.0
  %1864 = vmatpush1.xpose.msra.mxu0 0.0
  %1865 = vmatprep.subr.mxu0 0.0
  %1866 = vmatpush1.xpose.msra.mxu0 0.0
  %1867 = vmatprep.subr.mxu0 0.0
  %1868 = vmatpush1.xpose.msra.mxu0 0.0
  %1869 = vmatprep.subr.mxu0 0.0
  %1870 = vmatpush1.xpose.msra.mxu0 0.0
  %1871 = vmatprep.subr.mxu0 0.0
  %1872 = vmatpush1.xpose.msra.mxu0 0.0
  %1873 = vmatprep.subr.mxu0 0.0
  %1874 = vmatpush1.xpose.msra.mxu0 0.0
  %1875 = vmatprep.subr.mxu0 0.0
  %1876 = vmatpush1.xpose.msra.mxu0 0.0
  %1877 = vmatprep.subr.mxu0 0.0
  %1878 = vmatpush1.xpose.msra.mxu0 0.0
  %1879 = vmatprep.subr.mxu0 0.0
  %1880 = vmatpush1.xpose.msra.mxu0 0.0
  %1881 = vmatprep.subr.mxu0 0.0
  %1882 = vmatpush1.xpose.msra.mxu0 0.0
  %1883 = vmatprep.subr.mxu0 0.0
  %1884 = vmatpush1.xpose.msra.mxu0 0.0
  %1885 = vmatprep.subr.mxu0 0.0
  %1886 = vmatpush1.xpose.msra.mxu0 0.0
  %1887 = vmatprep.subr.mxu0 0.0
  %1888 = vmatpush1.xpose.msra.mxu0 0.0
  %1889 = vmatprep.subr.mxu0 0.0
  %1890 = vmatpush1.xpose.msra.mxu0 0.0
  %1891 = vmatprep.subr.mxu0 0.0
  %1892 = vmatpush1.xpose.msra.mxu0 0.0
  %1893 = vmatprep.subr.mxu0 0.0
  %1894 = vmatpush1.xpose.msra.mxu0 0.0
  %1895 = vmatprep.subr.mxu0 0.0
  %1896 = vmatpush1.xpose.msra.mxu0 0.0
  %1897 = vmatprep.subr.mxu0 0.0
  %1898 = vmatpush1.xpose.msra.mxu0 0.0
  %1899 = vmatprep.mubr.f32.mxu0 0.0
  %1900 = vmatmul.mubr.f32.gmra.mrb[0].mxu0 %v1803
  %v1901 = vpop.f32.mrb[0].mxu0
  %v1902 = vadd.f32 %v1312, %v1901
  %v1903 = vpop.f32.mrb[0].mxu0
  %1904 = vmatprep.mubr.f32.mxu0 0.0
  %1905 = vmatmul.mubr.f32.gmra.mrb[0].mxu0 %v1805
  %v1906 = vpop.f32.mrb[0].mxu0
  %v1907 = vadd.f32 %v1313, %v1906
  %v1908 = vpop.f32.mrb[0].mxu0
  %1909 = vmatprep.mubr.f32.mxu0 0.0
  %1910 = vmatmul.mubr.f32.gmra.mrb[0].mxu0 %v1807
  %v1911 = vpop.f32.mrb[0].mxu0
  %v1912 = vadd.f32 %v1314, %v1911
  %v1913 = vpop.f32.mrb[0].mxu0
  %1914 = vmatprep.mubr.f32.mxu0 0.0
  %1915 = vmatmul.mubr.f32.gmra.mrb[0].mxu0 %v1809
  %v1916 = vpop.f32.mrb[0].mxu0
  %v1917 = vadd.f32 %v1315, %v1916
  %v1918 = vpop.f32.mrb[0].mxu0
  %1919 = vmatprep.mubr.f32.mxu0 0.0
  %1920 = vmatmul.mubr.f32.gmra.mrb[0].mxu0 %v1811
  %v1921 = vpop.f32.mrb[0].mxu0
  %v1922 = vadd.f32 %v1316, %v1921
  %v1923 = vpop.f32.mrb[0].mxu0
  %1924 = vmatprep.mubr.f32.mxu0 0.0
  %1925 = vmatmul.mubr.f32.gmra.mrb[0].mxu0 %v1813
  %v1926 = vpop.f32.mrb[0].mxu0
  %v1927 = vadd.f32 %v1317, %v1926
  %v1928 = vpop.f32.mrb[0].mxu0
  %1929 = vmatprep.mubr.f32.mxu0 0.0
  %1930 = vmatmul.mubr.f32.gmra.mrb[0].mxu0 %v1815
  %v1931 = vpop.f32.mrb[0].mxu0
  %v1932 = vadd.f32 %v1318, %v1931
  %v1933 = vpop.f32.mrb[0].mxu0
  %1934 = vmatprep.mubr.f32.mxu0 0.0
  %1935 = vmatmul.mubr.f32.gmra.mrb[0].mxu0 %v1817
  %v1936 = vpop.f32.mrb[0].mxu0
  %v1937 = vadd.f32 %v1319, %v1936
  %v1938 = vpop.f32.mrb[0].mxu0
  %1939 = vdwg.mxu0
  %v1940 = vsel %vm643, %v1902, -inf
  %1941 = vmax.xlane.f32.xlu0 %v1940
  %v1942 = vpop.xlane.xlu0 %1941
  %v1943 = vsel %vm643, %v1907, -inf
  %1944 = vmax.xlane.f32.xlu0 %v1943
  %v1945 = vpop.xlane.xlu0 %1944
  %v1946 = vsel %vm643, %v1912, -inf
  %1947 = vmax.xlane.f32.xlu0 %v1946
  %v1948 = vpop.xlane.xlu0 %1947
  %v1949 = vsel %vm643, %v1917, -inf
  %1950 = vmax.xlane.f32.xlu0 %v1949
  %v1951 = vpop.xlane.xlu0 %1950
  %v1952 = vsel %vm643, %v1922, -inf
  %1953 = vmax.xlane.f32.xlu0 %v1952
  %v1954 = vpop.xlane.xlu0 %1953
  %v1955 = vsel %vm643, %v1927, -inf
  %1956 = vmax.xlane.f32.xlu0 %v1955
  %v1957 = vpop.xlane.xlu0 %1956
  %v1958 = vsel %vm643, %v1932, -inf
  %1959 = vmax.xlane.f32.xlu0 %v1958
  %v1960 = vpop.xlane.xlu0 %1959
  %v1961 = vsel %vm643, %v1937, -inf
  %1962 = vmax.xlane.f32.xlu0 %v1961
  %v1963 = vpop.xlane.xlu0 %1962
  %v1964 = vsub.f32 %v1902, %v1942
  %v1965 = vsub.f32 %v1907, %v1945
  %v1966 = vsub.f32 %v1912, %v1948
  %v1967 = vsub.f32 %v1917, %v1951
  %v1968 = vsub.f32 %v1922, %v1954
  %v1969 = vsub.f32 %v1927, %v1957
  %v1970 = vsub.f32 %v1932, %v1960
  %v1971 = vsub.f32 %v1937, %v1963
  %v1972 = vmul.f32 %v1964, 1.442695
  %v1973 = vpow.pop %v1972
  %v1974 = vmul.f32 %v1965, 1.442695
  %v1975 = vpow.pop %v1974
  %v1976 = vmul.f32 %v1966, 1.442695
  %v1977 = vpow.pop %v1976
  %v1978 = vmul.f32 %v1967, 1.442695
  %v1979 = vpow.pop %v1978
  %v1980 = vmul.f32 %v1968, 1.442695
  %v1981 = vpow.pop %v1980
  %v1982 = vmul.f32 %v1969, 1.442695
  %v1983 = vpow.pop %v1982
  %v1984 = vmul.f32 %v1970, 1.442695
  %v1985 = vpow.pop %v1984
  %v1986 = vmul.f32 %v1971, 1.442695
  %v1987 = vpow.pop %v1986
  %v1988 = vsel %vm643, %v1973, 0.0
  %1989 = vadd.xlane.f32.xlu0 %v1988
  %v1990 = vpop.xlane.xlu0 %1989
  %v1991 = vsel %vm643, %v1975, 0.0
  %1992 = vadd.xlane.f32.xlu0 %v1991
  %v1993 = vpop.xlane.xlu0 %1992
  %v1994 = vsel %vm643, %v1977, 0.0
  %1995 = vadd.xlane.f32.xlu0 %v1994
  %v1996 = vpop.xlane.xlu0 %1995
  %v1997 = vsel %vm643, %v1979, 0.0
  %1998 = vadd.xlane.f32.xlu0 %v1997
  %v1999 = vpop.xlane.xlu0 %1998
  %v2000 = vsel %vm643, %v1981, 0.0
  %2001 = vadd.xlane.f32.xlu0 %v2000
  %v2002 = vpop.xlane.xlu0 %2001
  %v2003 = vsel %vm643, %v1983, 0.0
  %2004 = vadd.xlane.f32.xlu0 %v2003
  %v2005 = vpop.xlane.xlu0 %2004
  %v2006 = vsel %vm643, %v1985, 0.0
  %2007 = vadd.xlane.f32.xlu0 %v2006
  %v2008 = vpop.xlane.xlu0 %2007
  %v2009 = vsel %vm643, %v1987, 0.0
  %2010 = vadd.xlane.f32.xlu0 %v2009
  %v2011 = vpop.xlane.xlu0 %2010
  %v2012 = vrcp.pop %v1990
  %v2013 = vmul.f32 %v1973, %v2012
  %v2014 = vrcp.pop %v1993
  %v2015 = vmul.f32 %v1975, %v2014
  %v2016 = vrcp.pop %v1996
  %v2017 = vmul.f32 %v1977, %v2016
  %v2018 = vrcp.pop %v1999
  %v2019 = vmul.f32 %v1979, %v2018
  %v2020 = vrcp.pop %v2002
  %v2021 = vmul.f32 %v1981, %v2020
  %v2022 = vrcp.pop %v2005
  %v2023 = vmul.f32 %v1983, %v2022
  %v2024 = vrcp.pop %v2008
  %v2025 = vmul.f32 %v1985, %v2024
  %v2026 = vrcp.pop %v2011
  %v2027 = vmul.f32 %v1987, %v2026
  %2028 = vrot.lane.b32.xlu0 %v427, 56
  %v2029 = vpop.permute.xlu0 %2028
  %2030 = vrot.lane.b32.xlu0 %v432, 56
  %v2031 = vpop.permute.xlu0 %2030
  %2032 = vrot.lane.b32.xlu0 %v437, 56
  %v2033 = vpop.permute.xlu0 %2032
  %2034 = vrot.lane.b32.xlu0 %v442, 56
  %v2035 = vpop.permute.xlu0 %2034
  %2036 = vrot.lane.b32.xlu0 %v447, 56
  %v2037 = vpop.permute.xlu0 %2036
  %2038 = vrot.lane.b32.xlu0 %v452, 56
  %v2039 = vpop.permute.xlu0 %2038
  %2040 = vrot.lane.b32.xlu0 %v457, 56
  %v2041 = vpop.permute.xlu0 %2040
  %2042 = vrot.lane.b32.xlu0 %v462, 56
  %v2043 = vpop.permute.xlu0 %2042
  %v2053 = vsel %vm643, %v2013, 0
  %v2056 = vsel %vm643, %v2015, 0
  %v2059 = vsel %vm643, %v2017, 0
  %v2062 = vsel %vm643, %v2019, 0
  %v2065 = vsel %vm643, %v2021, 0
  %v2068 = vsel %vm643, %v2023, 0
  %v2071 = vsel %vm643, %v2025, 0
  %v2074 = vsel %vm643, %v2027, 0
  %2076 = vmatprep.subr.mxu0 0.0
  %2077 = vmatpush1.msra.mxu0 %v2029
  %2078 = vmatprep.subr.mxu0 0.0
  %2079 = vmatpush1.msra.mxu0 %v2031
  %2080 = vmatprep.subr.mxu0 0.0
  %2081 = vmatpush1.msra.mxu0 %v2033
  %2082 = vmatprep.subr.mxu0 0.0
  %2083 = vmatpush1.msra.mxu0 %v2035
  %2084 = vmatprep.subr.mxu0 0.0
  %2085 = vmatpush1.msra.mxu0 %v2037
  %2086 = vmatprep.subr.mxu0 0.0
  %2087 = vmatpush1.msra.mxu0 %v2039
  %2088 = vmatprep.subr.mxu0 0.0
  %2089 = vmatpush1.msra.mxu0 %v2041
  %2090 = vmatprep.subr.mxu0 0.0
  %2091 = vmatpush1.msra.mxu0 %v2043
  %2092 = vmatprep.subr.mxu0 0.0
  %2093 = vmatpush1.msra.mxu0 0.0
  %2094 = vmatprep.subr.mxu0 0.0
  %2095 = vmatpush1.msra.mxu0 0.0
  %2096 = vmatprep.subr.mxu0 0.0
  %2097 = vmatpush1.msra.mxu0 0.0
  %2098 = vmatprep.subr.mxu0 0.0
  %2099 = vmatpush1.msra.mxu0 0.0
  %2100 = vmatprep.subr.mxu0 0.0
  %2101 = vmatpush1.msra.mxu0 0.0
  %2102 = vmatprep.subr.mxu0 0.0
  %2103 = vmatpush1.msra.mxu0 0.0
  %2104 = vmatprep.subr.mxu0 0.0
  %2105 = vmatpush1.msra.mxu0 0.0
  %2106 = vmatprep.subr.mxu0 0.0
  %2107 = vmatpush1.msra.mxu0 0.0
  %2108 = vmatprep.subr.mxu0 0.0
  %2109 = vmatpush1.msra.mxu0 0.0
  %2110 = vmatprep.subr.mxu0 0.0
  %2111 = vmatpush1.msra.mxu0 0.0
  %2112 = vmatprep.subr.mxu0 0.0
  %2113 = vmatpush1.msra.mxu0 0.0
  %2114 = vmatprep.subr.mxu0 0.0
  %2115 = vmatpush1.msra.mxu0 0.0
  %2116 = vmatprep.subr.mxu0 0.0
  %2117 = vmatpush1.msra.mxu0 0.0
  %2118 = vmatprep.subr.mxu0 0.0
  %2119 = vmatpush1.msra.mxu0 0.0
  %2120 = vmatprep.subr.mxu0 0.0
  %2121 = vmatpush1.msra.mxu0 0.0
  %2122 = vmatprep.subr.mxu0 0.0
  %2123 = vmatpush1.msra.mxu0 0.0
  %2124 = vmatprep.subr.mxu0 0.0
  %2125 = vmatpush1.msra.mxu0 0.0
  %2126 = vmatprep.subr.mxu0 0.0
  %2127 = vmatpush1.msra.mxu0 0.0
  %2128 = vmatprep.subr.mxu0 0.0
  %2129 = vmatpush1.msra.mxu0 0.0
  %2130 = vmatprep.subr.mxu0 0.0
  %2131 = vmatpush1.msra.mxu0 0.0
  %2132 = vmatprep.subr.mxu0 0.0
  %2133 = vmatpush1.msra.mxu0 0.0
  %2134 = vmatprep.subr.mxu0 0.0
  %2135 = vmatpush1.msra.mxu0 0.0
  %2136 = vmatprep.subr.mxu0 0.0
  %2137 = vmatpush1.msra.mxu0 0.0
  %2138 = vmatprep.subr.mxu0 0.0
  %2139 = vmatpush1.msra.mxu0 0.0
  %2140 = vmatprep.mubr.f32.mxu0 0.0
  %2141 = vmatmul.mubr.f32.gmra.mrb[0].mxu0 %v2053
  %v2142 = vpop.f32.mrb[0].mxu0
  %v2143 = vadd.f32 0.0, %v2142
  %v2144 = vpop.f32.mrb[0].mxu0
  %2145 = vmatprep.mubr.f32.mxu0 0.0
  %2146 = vmatmul.mubr.f32.gmra.mrb[0].mxu0 %v2056
  %v2147 = vpop.f32.mrb[0].mxu0
  %v2148 = vadd.f32 0.0, %v2147
  %v2149 = vpop.f32.mrb[0].mxu0
  %2150 = vmatprep.mubr.f32.mxu0 0.0
  %2151 = vmatmul.mubr.f32.gmra.mrb[0].mxu0 %v2059
  %v2152 = vpop.f32.mrb[0].mxu0
  %v2153 = vadd.f32 0.0, %v2152
  %v2154 = vpop.f32.mrb[0].mxu0
  %2155 = vmatprep.mubr.f32.mxu0 0.0
  %2156 = vmatmul.mubr.f32.gmra.mrb[0].mxu0 %v2062
  %v2157 = vpop.f32.mrb[0].mxu0
  %v2158 = vadd.f32 0.0, %v2157
  %v2159 = vpop.f32.mrb[0].mxu0
  %2160 = vmatprep.mubr.f32.mxu0 0.0
  %2161 = vmatmul.mubr.f32.gmra.mrb[0].mxu0 %v2065
  %v2162 = vpop.f32.mrb[0].mxu0
  %v2163 = vadd.f32 0.0, %v2162
  %v2164 = vpop.f32.mrb[0].mxu0
  %2165 = vmatprep.mubr.f32.mxu0 0.0
  %2166 = vmatmul.mubr.f32.gmra.mrb[0].mxu0 %v2068
  %v2167 = vpop.f32.mrb[0].mxu0
  %v2168 = vadd.f32 0.0, %v2167
  %v2169 = vpop.f32.mrb[0].mxu0
  %2170 = vmatprep.mubr.f32.mxu0 0.0
  %2171 = vmatmul.mubr.f32.gmra.mrb[0].mxu0 %v2071
  %v2172 = vpop.f32.mrb[0].mxu0
  %v2173 = vadd.f32 0.0, %v2172
  %v2174 = vpop.f32.mrb[0].mxu0
  %2175 = vmatprep.mubr.f32.mxu0 0.0
  %2176 = vmatmul.mubr.f32.gmra.mrb[0].mxu0 %v2074
  %v2177 = vpop.f32.mrb[0].mxu0
  %v2178 = vadd.f32 0.0, %v2177
  %v2179 = vpop.f32.mrb[0].mxu0
  %2180 = vdwg.mxu0
  %2189 = vrot.lane.b32.xlu0 %v2143, 8
  %v2190 = vpop.permute.xlu0 %2189
  %2191 = vrot.lane.b32.xlu0 %v2148, 8
  %v2192 = vpop.permute.xlu0 %2191
  %2193 = vrot.lane.b32.xlu0 %v2153, 8
  %v2194 = vpop.permute.xlu0 %2193
  %2195 = vrot.lane.b32.xlu0 %v2158, 8
  %v2196 = vpop.permute.xlu0 %2195
  %2197 = vrot.lane.b32.xlu0 %v2163, 8
  %v2198 = vpop.permute.xlu0 %2197
  %2199 = vrot.lane.b32.xlu0 %v2168, 8
  %v2200 = vpop.permute.xlu0 %2199
  %2201 = vrot.lane.b32.xlu0 %v2173, 8
  %v2202 = vpop.permute.xlu0 %2201
  %2203 = vrot.lane.b32.xlu0 %v2178, 8
  %v2204 = vpop.permute.xlu0 %2203
  %2213 = vst.msk [vmem:[#allocation2 + $0x40] sm:$0xff] %vm1762, %v2190
  %2214 = vst.msk [vmem:[#allocation2 + $0x48] sm:$0xff] %vm1762, %v2192
  %2215 = vst.msk [vmem:[#allocation2 + $0x50] sm:$0xff] %vm1762, %v2194
  %2216 = vst.msk [vmem:[#allocation2 + $0x58] sm:$0xff] %vm1762, %v2196
  %2217 = vst.msk [vmem:[#allocation2 + $0x60] sm:$0xff] %vm1762, %v2198
  %2218 = vst.msk [vmem:[#allocation2 + $0x68] sm:$0xff] %vm1762, %v2200
  %2219 = vst.msk [vmem:[#allocation2 + $0x70] sm:$0xff] %vm1762, %v2202
  %2220 = vst.msk [vmem:[#allocation2 + $0x78] sm:$0xff] %vm1762, %v2204
  %s2221 = scalar_lea.vmem %s1, 64
  %v2222 = vld [vmem:[%s2221] sm:$0xf]
  %v2223 = vld [vmem:[%s2221 + $0x4] sm:$0xf]
  %v2224 = vld [vmem:[%s2221 + $0x8] sm:$0xf]
  %v2225 = vld [vmem:[%s2221 + $0xc] sm:$0xf]
  %v2226 = vld [vmem:[%s2221 + $0x10] sm:$0xf]
  %v2227 = vld [vmem:[%s2221 + $0x14] sm:$0xf]
  %v2228 = vld [vmem:[%s2221 + $0x18] sm:$0xf]
  %v2229 = vld [vmem:[%s2221 + $0x1c] sm:$0xf]
  %v2230 = vunpack.c.l.bf16 %v2222
  %v2231 = vunpack.c.l.bf16 %v2223
  %v2232 = vunpack.c.l.bf16 %v2224
  %v2233 = vunpack.c.l.bf16 %v2225
  %v2234 = vunpack.c.l.bf16 %v2226
  %v2235 = vunpack.c.l.bf16 %v2227
  %v2236 = vunpack.c.l.bf16 %v2228
  %v2237 = vunpack.c.l.bf16 %v2229
  %2238 = vrot.lane.b32.xlu0 %v387, 112
  %v2239 = vpop.permute.xlu0 %2238
  %2240 = vrot.lane.b32.xlu0 %v392, 112
  %v2241 = vpop.permute.xlu0 %2240
  %2242 = vrot.lane.b32.xlu0 %v397, 112
  %v2243 = vpop.permute.xlu0 %2242
  %2244 = vrot.lane.b32.xlu0 %v402, 112
  %v2245 = vpop.permute.xlu0 %2244
  %2246 = vrot.lane.b32.xlu0 %v407, 112
  %v2247 = vpop.permute.xlu0 %2246
  %2248 = vrot.lane.b32.xlu0 %v412, 112
  %v2249 = vpop.permute.xlu0 %2248
  %2250 = vrot.lane.b32.xlu0 %v417, 112
  %v2251 = vpop.permute.xlu0 %2250
  %2252 = vrot.lane.b32.xlu0 %v422, 112
  %v2253 = vpop.permute.xlu0 %2252
  %2254 = vrot.lane.b32.xlu0 %v387, 80
  %v2255 = vpop.permute.xlu0 %2254
  %2256 = vrot.lane.b32.xlu0 %v392, 80
  %v2257 = vpop.permute.xlu0 %2256
  %2258 = vrot.lane.b32.xlu0 %v397, 80
  %v2259 = vpop.permute.xlu0 %2258
  %2260 = vrot.lane.b32.xlu0 %v402, 80
  %v2261 = vpop.permute.xlu0 %2260
  %2262 = vrot.lane.b32.xlu0 %v407, 80
  %v2263 = vpop.permute.xlu0 %2262
  %2264 = vrot.lane.b32.xlu0 %v412, 80
  %v2265 = vpop.permute.xlu0 %2264
  %2266 = vrot.lane.b32.xlu0 %v417, 80
  %v2267 = vpop.permute.xlu0 %2266
  %2268 = vrot.lane.b32.xlu0 %v422, 80
  %v2269 = vpop.permute.xlu0 %2268
  %v2270 = vsel %vm505, %v2239, 0
  %v2272 = vsel %vm505, %v2241, 0
  %v2274 = vsel %vm505, %v2243, 0
  %v2276 = vsel %vm505, %v2245, 0
  %v2278 = vsel %vm505, %v2247, 0
  %v2280 = vsel %vm505, %v2249, 0
  %v2282 = vsel %vm505, %v2251, 0
  %v2284 = vsel %vm505, %v2253, 0
  %v2286 = vsel %vm505, %v2255, 0
  %v2288 = vsel %vm505, %v2257, 0
  %v2290 = vsel %vm505, %v2259, 0
  %v2292 = vsel %vm505, %v2261, 0
  %v2294 = vsel %vm505, %v2263, 0
  %v2296 = vsel %vm505, %v2265, 0
  %v2298 = vsel %vm505, %v2267, 0
  %v2300 = vsel %vm505, %v2269, 0
  %2302 = vmatprep.subr.mxu0 0.0
  %2303 = vmatpush1.xpose.msra.mxu0 %v2286
  %2304 = vmatprep.subr.mxu0 0.0
  %2305 = vmatpush1.xpose.msra.mxu0 %v2288
  %2306 = vmatprep.subr.mxu0 0.0
  %2307 = vmatpush1.xpose.msra.mxu0 %v2290
  %2308 = vmatprep.subr.mxu0 0.0
  %2309 = vmatpush1.xpose.msra.mxu0 %v2292
  %2310 = vmatprep.subr.mxu0 0.0
  %2311 = vmatpush1.xpose.msra.mxu0 %v2294
  %2312 = vmatprep.subr.mxu0 0.0
  %2313 = vmatpush1.xpose.msra.mxu0 %v2296
  %2314 = vmatprep.subr.mxu0 0.0
  %2315 = vmatpush1.xpose.msra.mxu0 %v2298
  %2316 = vmatprep.subr.mxu0 0.0
  %2317 = vmatpush1.xpose.msra.mxu0 %v2300
  %2318 = vmatprep.subr.mxu0 0.0
  %2319 = vmatpush1.xpose.msra.mxu0 0.0
  %2320 = vmatprep.subr.mxu0 0.0
  %2321 = vmatpush1.xpose.msra.mxu0 0.0
  %2322 = vmatprep.subr.mxu0 0.0
  %2323 = vmatpush1.xpose.msra.mxu0 0.0
  %2324 = vmatprep.subr.mxu0 0.0
  %2325 = vmatpush1.xpose.msra.mxu0 0.0
  %2326 = vmatprep.subr.mxu0 0.0
  %2327 = vmatpush1.xpose.msra.mxu0 0.0
  %2328 = vmatprep.subr.mxu0 0.0
  %2329 = vmatpush1.xpose.msra.mxu0 0.0
  %2330 = vmatprep.subr.mxu0 0.0
  %2331 = vmatpush1.xpose.msra.mxu0 0.0
  %2332 = vmatprep.subr.mxu0 0.0
  %2333 = vmatpush1.xpose.msra.mxu0 0.0
  %2334 = vmatprep.subr.mxu0 0.0
  %2335 = vmatpush1.xpose.msra.mxu0 0.0
  %2336 = vmatprep.subr.mxu0 0.0
  %2337 = vmatpush1.xpose.msra.mxu0 0.0
  %2338 = vmatprep.subr.mxu0 0.0
  %2339 = vmatpush1.xpose.msra.mxu0 0.0
  %2340 = vmatprep.subr.mxu0 0.0
  %2341 = vmatpush1.xpose.msra.mxu0 0.0
  %2342 = vmatprep.subr.mxu0 0.0
  %2343 = vmatpush1.xpose.msra.mxu0 0.0
  %2344 = vmatprep.subr.mxu0 0.0
  %2345 = vmatpush1.xpose.msra.mxu0 0.0
  %2346 = vmatprep.subr.mxu0 0.0
  %2347 = vmatpush1.xpose.msra.mxu0 0.0
  %2348 = vmatprep.subr.mxu0 0.0
  %2349 = vmatpush1.xpose.msra.mxu0 0.0
  %2350 = vmatprep.subr.mxu0 0.0
  %2351 = vmatpush1.xpose.msra.mxu0 0.0
  %2352 = vmatprep.subr.mxu0 0.0
  %2353 = vmatpush1.xpose.msra.mxu0 0.0
  %2354 = vmatprep.subr.mxu0 0.0
  %2355 = vmatpush1.xpose.msra.mxu0 0.0
  %2356 = vmatprep.subr.mxu0 0.0
  %2357 = vmatpush1.xpose.msra.mxu0 0.0
  %2358 = vmatprep.subr.mxu0 0.0
  %2359 = vmatpush1.xpose.msra.mxu0 0.0
  %2360 = vmatprep.subr.mxu0 0.0
  %2361 = vmatpush1.xpose.msra.mxu0 0.0
  %2362 = vmatprep.subr.mxu0 0.0
  %2363 = vmatpush1.xpose.msra.mxu0 0.0
  %2364 = vmatprep.subr.mxu0 0.0
  %2365 = vmatpush1.xpose.msra.mxu0 0.0
  %2366 = vmatprep.mubr.f32.mxu0 0.0
  %2367 = vmatmul.mubr.f32.gmra.mrb[0].mxu0 %v2270
  %v2368 = vpop.f32.mrb[0].mxu0
  %v2369 = vadd.f32 %v2230, %v2368
  %v2370 = vpop.f32.mrb[0].mxu0
  %2371 = vmatprep.mubr.f32.mxu0 0.0
  %2372 = vmatmul.mubr.f32.gmra.mrb[0].mxu0 %v2272
  %v2373 = vpop.f32.mrb[0].mxu0
  %v2374 = vadd.f32 %v2231, %v2373
  %v2375 = vpop.f32.mrb[0].mxu0
  %2376 = vmatprep.mubr.f32.mxu0 0.0
  %2377 = vmatmul.mubr.f32.gmra.mrb[0].mxu0 %v2274
  %v2378 = vpop.f32.mrb[0].mxu0
  %v2379 = vadd.f32 %v2232, %v2378
  %v2380 = vpop.f32.mrb[0].mxu0
  %2381 = vmatprep.mubr.f32.mxu0 0.0
  %2382 = vmatmul.mubr.f32.gmra.mrb[0].mxu0 %v2276
  %v2383 = vpop.f32.mrb[0].mxu0
  %v2384 = vadd.f32 %v2233, %v2383
  %v2385 = vpop.f32.mrb[0].mxu0
  %2386 = vmatprep.mubr.f32.mxu0 0.0
  %2387 = vmatmul.mubr.f32.gmra.mrb[0].mxu0 %v2278
  %v2388 = vpop.f32.mrb[0].mxu0
  %v2389 = vadd.f32 %v2234, %v2388
  %v2390 = vpop.f32.mrb[0].mxu0
  %2391 = vmatprep.mubr.f32.mxu0 0.0
  %2392 = vmatmul.mubr.f32.gmra.mrb[0].mxu0 %v2280
  %v2393 = vpop.f32.mrb[0].mxu0
  %v2394 = vadd.f32 %v2235, %v2393
  %v2395 = vpop.f32.mrb[0].mxu0
  %2396 = vmatprep.mubr.f32.mxu0 0.0
  %2397 = vmatmul.mubr.f32.gmra.mrb[0].mxu0 %v2282
  %v2398 = vpop.f32.mrb[0].mxu0
  %v2399 = vadd.f32 %v2236, %v2398
  %v2400 = vpop.f32.mrb[0].mxu0
  %2401 = vmatprep.mubr.f32.mxu0 0.0
  %2402 = vmatmul.mubr.f32.gmra.mrb[0].mxu0 %v2284
  %v2403 = vpop.f32.mrb[0].mxu0
  %v2404 = vadd.f32 %v2237, %v2403
  %v2405 = vpop.f32.mrb[0].mxu0
  %2406 = vdwg.mxu0
  %v2407 = vsel %vm643, %v2369, -inf
  %2408 = vmax.xlane.f32.xlu0 %v2407
  %v2409 = vpop.xlane.xlu0 %2408
  %v2410 = vsel %vm643, %v2374, -inf
  %2411 = vmax.xlane.f32.xlu0 %v2410
  %v2412 = vpop.xlane.xlu0 %2411
  %v2413 = vsel %vm643, %v2379, -inf
  %2414 = vmax.xlane.f32.xlu0 %v2413
  %v2415 = vpop.xlane.xlu0 %2414
  %v2416 = vsel %vm643, %v2384, -inf
  %2417 = vmax.xlane.f32.xlu0 %v2416
  %v2418 = vpop.xlane.xlu0 %2417
  %v2419 = vsel %vm643, %v2389, -inf
  %2420 = vmax.xlane.f32.xlu0 %v2419
  %v2421 = vpop.xlane.xlu0 %2420
  %v2422 = vsel %vm643, %v2394, -inf
  %2423 = vmax.xlane.f32.xlu0 %v2422
  %v2424 = vpop.xlane.xlu0 %2423
  %v2425 = vsel %vm643, %v2399, -inf
  %2426 = vmax.xlane.f32.xlu0 %v2425
  %v2427 = vpop.xlane.xlu0 %2426
  %v2428 = vsel %vm643, %v2404, -inf
  %2429 = vmax.xlane.f32.xlu0 %v2428
  %v2430 = vpop.xlane.xlu0 %2429
  %v2431 = vsub.f32 %v2369, %v2409
  %v2432 = vsub.f32 %v2374, %v2412
  %v2433 = vsub.f32 %v2379, %v2415
  %v2434 = vsub.f32 %v2384, %v2418
  %v2435 = vsub.f32 %v2389, %v2421
  %v2436 = vsub.f32 %v2394, %v2424
  %v2437 = vsub.f32 %v2399, %v2427
  %v2438 = vsub.f32 %v2404, %v2430
  %v2439 = vmul.f32 %v2431, 1.442695
  %v2440 = vpow.pop %v2439
  %v2441 = vmul.f32 %v2432, 1.442695
  %v2442 = vpow.pop %v2441
  %v2443 = vmul.f32 %v2433, 1.442695
  %v2444 = vpow.pop %v2443
  %v2445 = vmul.f32 %v2434, 1.442695
  %v2446 = vpow.pop %v2445
  %v2447 = vmul.f32 %v2435, 1.442695
  %v2448 = vpow.pop %v2447
  %v2449 = vmul.f32 %v2436, 1.442695
  %v2450 = vpow.pop %v2449
  %v2451 = vmul.f32 %v2437, 1.442695
  %v2452 = vpow.pop %v2451
  %v2453 = vmul.f32 %v2438, 1.442695
  %v2454 = vpow.pop %v2453
  %v2455 = vsel %vm643, %v2440, 0.0
  %2456 = vadd.xlane.f32.xlu0 %v2455
  %v2457 = vpop.xlane.xlu0 %2456
  %v2458 = vsel %vm643, %v2442, 0.0
  %2459 = vadd.xlane.f32.xlu0 %v2458
  %v2460 = vpop.xlane.xlu0 %2459
  %v2461 = vsel %vm643, %v2444, 0.0
  %2462 = vadd.xlane.f32.xlu0 %v2461
  %v2463 = vpop.xlane.xlu0 %2462
  %v2464 = vsel %vm643, %v2446, 0.0
  %2465 = vadd.xlane.f32.xlu0 %v2464
  %v2466 = vpop.xlane.xlu0 %2465
  %v2467 = vsel %vm643, %v2448, 0.0
  %2468 = vadd.xlane.f32.xlu0 %v2467
  %v2469 = vpop.xlane.xlu0 %2468
  %v2470 = vsel %vm643, %v2450, 0.0
  %2471 = vadd.xlane.f32.xlu0 %v2470
  %v2472 = vpop.xlane.xlu0 %2471
  %v2473 = vsel %vm643, %v2452, 0.0
  %2474 = vadd.xlane.f32.xlu0 %v2473
  %v2475 = vpop.xlane.xlu0 %2474
  %v2476 = vsel %vm643, %v2454, 0.0
  %2477 = vadd.xlane.f32.xlu0 %v2476
  %v2478 = vpop.xlane.xlu0 %2477
  %v2479 = vrcp.pop %v2457
  %v2480 = vmul.f32 %v2440, %v2479
  %v2481 = vrcp.pop %v2460
  %v2482 = vmul.f32 %v2442, %v2481
  %v2483 = vrcp.pop %v2463
  %v2484 = vmul.f32 %v2444, %v2483
  %v2485 = vrcp.pop %v2466
  %v2486 = vmul.f32 %v2446, %v2485
  %v2487 = vrcp.pop %v2469
  %v2488 = vmul.f32 %v2448, %v2487
  %v2489 = vrcp.pop %v2472
  %v2490 = vmul.f32 %v2450, %v2489
  %v2491 = vrcp.pop %v2475
  %v2492 = vmul.f32 %v2452, %v2491
  %v2493 = vrcp.pop %v2478
  %v2494 = vmul.f32 %v2454, %v2493
  %2495 = vrot.lane.b32.xlu0 %v387, 48
  %v2496 = vpop.permute.xlu0 %2495
  %2497 = vrot.lane.b32.xlu0 %v392, 48
  %v2498 = vpop.permute.xlu0 %2497
  %2499 = vrot.lane.b32.xlu0 %v397, 48
  %v2500 = vpop.permute.xlu0 %2499
  %2501 = vrot.lane.b32.xlu0 %v402, 48
  %v2502 = vpop.permute.xlu0 %2501
  %2503 = vrot.lane.b32.xlu0 %v407, 48
  %v2504 = vpop.permute.xlu0 %2503
  %2505 = vrot.lane.b32.xlu0 %v412, 48
  %v2506 = vpop.permute.xlu0 %2505
  %2507 = vrot.lane.b32.xlu0 %v417, 48
  %v2508 = vpop.permute.xlu0 %2507
  %2509 = vrot.lane.b32.xlu0 %v422, 48
  %v2510 = vpop.permute.xlu0 %2509
  %v2520 = vsel %vm643, %v2480, 0
  %v2523 = vsel %vm643, %v2482, 0
  %v2526 = vsel %vm643, %v2484, 0
  %v2529 = vsel %vm643, %v2486, 0
  %v2532 = vsel %vm643, %v2488, 0
  %v2535 = vsel %vm643, %v2490, 0
  %v2538 = vsel %vm643, %v2492, 0
  %v2541 = vsel %vm643, %v2494, 0
  %2543 = vmatprep.subr.mxu0 0.0
  %2544 = vmatpush1.msra.mxu0 %v2496
  %2545 = vmatprep.subr.mxu0 0.0
  %2546 = vmatpush1.msra.mxu0 %v2498
  %2547 = vmatprep.subr.mxu0 0.0
  %2548 = vmatpush1.msra.mxu0 %v2500
  %2549 = vmatprep.subr.mxu0 0.0
  %2550 = vmatpush1.msra.mxu0 %v2502
  %2551 = vmatprep.subr.mxu0 0.0
  %2552 = vmatpush1.msra.mxu0 %v2504
  %2553 = vmatprep.subr.mxu0 0.0
  %2554 = vmatpush1.msra.mxu0 %v2506
  %2555 = vmatprep.subr.mxu0 0.0
  %2556 = vmatpush1.msra.mxu0 %v2508
  %2557 = vmatprep.subr.mxu0 0.0
  %2558 = vmatpush1.msra.mxu0 %v2510
  %2559 = vmatprep.subr.mxu0 0.0
  %2560 = vmatpush1.msra.mxu0 0.0
  %2561 = vmatprep.subr.mxu0 0.0
  %2562 = vmatpush1.msra.mxu0 0.0
  %2563 = vmatprep.subr.mxu0 0.0
  %2564 = vmatpush1.msra.mxu0 0.0
  %2565 = vmatprep.subr.mxu0 0.0
  %2566 = vmatpush1.msra.mxu0 0.0
  %2567 = vmatprep.subr.mxu0 0.0
  %2568 = vmatpush1.msra.mxu0 0.0
  %2569 = vmatprep.subr.mxu0 0.0
  %2570 = vmatpush1.msra.mxu0 0.0
  %2571 = vmatprep.subr.mxu0 0.0
  %2572 = vmatpush1.msra.mxu0 0.0
  %2573 = vmatprep.subr.mxu0 0.0
  %2574 = vmatpush1.msra.mxu0 0.0
  %2575 = vmatprep.subr.mxu0 0.0
  %2576 = vmatpush1.msra.mxu0 0.0
  %2577 = vmatprep.subr.mxu0 0.0
  %2578 = vmatpush1.msra.mxu0 0.0
  %2579 = vmatprep.subr.mxu0 0.0
  %2580 = vmatpush1.msra.mxu0 0.0
  %2581 = vmatprep.subr.mxu0 0.0
  %2582 = vmatpush1.msra.mxu0 0.0
  %2583 = vmatprep.subr.mxu0 0.0
  %2584 = vmatpush1.msra.mxu0 0.0
  %2585 = vmatprep.subr.mxu0 0.0
  %2586 = vmatpush1.msra.mxu0 0.0
  %2587 = vmatprep.subr.mxu0 0.0
  %2588 = vmatpush1.msra.mxu0 0.0
  %2589 = vmatprep.subr.mxu0 0.0
  %2590 = vmatpush1.msra.mxu0 0.0
  %2591 = vmatprep.subr.mxu0 0.0
  %2592 = vmatpush1.msra.mxu0 0.0
  %2593 = vmatprep.subr.mxu0 0.0
  %2594 = vmatpush1.msra.mxu0 0.0
  %2595 = vmatprep.subr.mxu0 0.0
  %2596 = vmatpush1.msra.mxu0 0.0
  %2597 = vmatprep.subr.mxu0 0.0
  %2598 = vmatpush1.msra.mxu0 0.0
  %2599 = vmatprep.subr.mxu0 0.0
  %2600 = vmatpush1.msra.mxu0 0.0
  %2601 = vmatprep.subr.mxu0 0.0
  %2602 = vmatpush1.msra.mxu0 0.0
  %2603 = vmatprep.subr.mxu0 0.0
  %2604 = vmatpush1.msra.mxu0 0.0
  %2605 = vmatprep.subr.mxu0 0.0
  %2606 = vmatpush1.msra.mxu0 0.0
  %2607 = vmatprep.mubr.f32.mxu0 0.0
  %2608 = vmatmul.mubr.f32.gmra.mrb[0].mxu0 %v2520
  %v2609 = vpop.f32.mrb[0].mxu0
  %v2610 = vadd.f32 0.0, %v2609
  %v2611 = vpop.f32.mrb[0].mxu0
  %2612 = vmatprep.mubr.f32.mxu0 0.0
  %2613 = vmatmul.mubr.f32.gmra.mrb[0].mxu0 %v2523
  %v2614 = vpop.f32.mrb[0].mxu0
  %v2615 = vadd.f32 0.0, %v2614
  %v2616 = vpop.f32.mrb[0].mxu0
  %2617 = vmatprep.mubr.f32.mxu0 0.0
  %2618 = vmatmul.mubr.f32.gmra.mrb[0].mxu0 %v2526
  %v2619 = vpop.f32.mrb[0].mxu0
  %v2620 = vadd.f32 0.0, %v2619
  %v2621 = vpop.f32.mrb[0].mxu0
  %2622 = vmatprep.mubr.f32.mxu0 0.0
  %2623 = vmatmul.mubr.f32.gmra.mrb[0].mxu0 %v2529
  %v2624 = vpop.f32.mrb[0].mxu0
  %v2625 = vadd.f32 0.0, %v2624
  %v2626 = vpop.f32.mrb[0].mxu0
  %2627 = vmatprep.mubr.f32.mxu0 0.0
  %2628 = vmatmul.mubr.f32.gmra.mrb[0].mxu0 %v2532
  %v2629 = vpop.f32.mrb[0].mxu0
  %v2630 = vadd.f32 0.0, %v2629
  %v2631 = vpop.f32.mrb[0].mxu0
  %2632 = vmatprep.mubr.f32.mxu0 0.0
  %2633 = vmatmul.mubr.f32.gmra.mrb[0].mxu0 %v2535
  %v2634 = vpop.f32.mrb[0].mxu0
  %v2635 = vadd.f32 0.0, %v2634
  %v2636 = vpop.f32.mrb[0].mxu0
  %2637 = vmatprep.mubr.f32.mxu0 0.0
  %2638 = vmatmul.mubr.f32.gmra.mrb[0].mxu0 %v2538
  %v2639 = vpop.f32.mrb[0].mxu0
  %v2640 = vadd.f32 0.0, %v2639
  %v2641 = vpop.f32.mrb[0].mxu0
  %2642 = vmatprep.mubr.f32.mxu0 0.0
  %2643 = vmatmul.mubr.f32.gmra.mrb[0].mxu0 %v2541
  %v2644 = vpop.f32.mrb[0].mxu0
  %v2645 = vadd.f32 0.0, %v2644
  %v2646 = vpop.f32.mrb[0].mxu0
  %2647 = vdwg.mxu0
  %2656 = vrot.lane.b32.xlu0 %v2610, 16
  %v2657 = vpop.permute.xlu0 %2656
  %2658 = vrot.lane.b32.xlu0 %v2615, 16
  %v2659 = vpop.permute.xlu0 %2658
  %2660 = vrot.lane.b32.xlu0 %v2620, 16
  %v2661 = vpop.permute.xlu0 %2660
  %2662 = vrot.lane.b32.xlu0 %v2625, 16
  %v2663 = vpop.permute.xlu0 %2662
  %2664 = vrot.lane.b32.xlu0 %v2630, 16
  %v2665 = vpop.permute.xlu0 %2664
  %2666 = vrot.lane.b32.xlu0 %v2635, 16
  %v2667 = vpop.permute.xlu0 %2666
  %2668 = vrot.lane.b32.xlu0 %v2640, 16
  %v2669 = vpop.permute.xlu0 %2668
  %2670 = vrot.lane.b32.xlu0 %v2645, 16
  %v2671 = vpop.permute.xlu0 %2670
  %vm2680 = vcmask 195712
  %2681 = vst.msk [vmem:[#allocation2] sm:$0xff] %vm2680, %v2657
  %2682 = vst.msk [vmem:[#allocation2 + $0x8] sm:$0xff] %vm2680, %v2659
  %2683 = vst.msk [vmem:[#allocation2 + $0x10] sm:$0xff] %vm2680, %v2661
  %2684 = vst.msk [vmem:[#allocation2 + $0x18] sm:$0xff] %vm2680, %v2663
  %2685 = vst.msk [vmem:[#allocation2 + $0x20] sm:$0xff] %vm2680, %v2665
  %2686 = vst.msk [vmem:[#allocation2 + $0x28] sm:$0xff] %vm2680, %v2667
  %2687 = vst.msk [vmem:[#allocation2 + $0x30] sm:$0xff] %vm2680, %v2669
  %2688 = vst.msk [vmem:[#allocation2 + $0x38] sm:$0xff] %vm2680, %v2671
  %2689 = vrot.lane.b32.xlu0 %v427, 112
  %v2690 = vpop.permute.xlu0 %2689
  %2691 = vrot.lane.b32.xlu0 %v432, 112
  %v2692 = vpop.permute.xlu0 %2691
  %2693 = vrot.lane.b32.xlu0 %v437, 112
  %v2694 = vpop.permute.xlu0 %2693
  %2695 = vrot.lane.b32.xlu0 %v442, 112
  %v2696 = vpop.permute.xlu0 %2695
  %2697 = vrot.lane.b32.xlu0 %v447, 112
  %v2698 = vpop.permute.xlu0 %2697
  %2699 = vrot.lane.b32.xlu0 %v452, 112
  %v2700 = vpop.permute.xlu0 %2699
  %2701 = vrot.lane.b32.xlu0 %v457, 112
  %v2702 = vpop.permute.xlu0 %2701
  %2703 = vrot.lane.b32.xlu0 %v462, 112
  %v2704 = vpop.permute.xlu0 %2703
  %2705 = vrot.lane.b32.xlu0 %v427, 80
  %v2706 = vpop.permute.xlu0 %2705
  %2707 = vrot.lane.b32.xlu0 %v432, 80
  %v2708 = vpop.permute.xlu0 %2707
  %2709 = vrot.lane.b32.xlu0 %v437, 80
  %v2710 = vpop.permute.xlu0 %2709
  %2711 = vrot.lane.b32.xlu0 %v442, 80
  %v2712 = vpop.permute.xlu0 %2711
  %2713 = vrot.lane.b32.xlu0 %v447, 80
  %v2714 = vpop.permute.xlu0 %2713
  %2715 = vrot.lane.b32.xlu0 %v452, 80
  %v2716 = vpop.permute.xlu0 %2715
  %2717 = vrot.lane.b32.xlu0 %v457, 80
  %v2718 = vpop.permute.xlu0 %2717
  %2719 = vrot.lane.b32.xlu0 %v462, 80
  %v2720 = vpop.permute.xlu0 %2719
  %v2721 = vsel %vm505, %v2690, 0
  %v2723 = vsel %vm505, %v2692, 0
  %v2725 = vsel %vm505, %v2694, 0
  %v2727 = vsel %vm505, %v2696, 0
  %v2729 = vsel %vm505, %v2698, 0
  %v2731 = vsel %vm505, %v2700, 0
  %v2733 = vsel %vm505, %v2702, 0
  %v2735 = vsel %vm505, %v2704, 0
  %v2737 = vsel %vm505, %v2706, 0
  %v2739 = vsel %vm505, %v2708, 0
  %v2741 = vsel %vm505, %v2710, 0
  %v2743 = vsel %vm505, %v2712, 0
  %v2745 = vsel %vm505, %v2714, 0
  %v2747 = vsel %vm505, %v2716, 0
  %v2749 = vsel %vm505, %v2718, 0
  %v2751 = vsel %vm505, %v2720, 0
  %2753 = vmatprep.subr.mxu0 0.0
  %2754 = vmatpush1.xpose.msra.mxu0 %v2737
  %2755 = vmatprep.subr.mxu0 0.0
  %2756 = vmatpush1.xpose.msra.mxu0 %v2739
  %2757 = vmatprep.subr.mxu0 0.0
  %2758 = vmatpush1.xpose.msra.mxu0 %v2741
  %2759 = vmatprep.subr.mxu0 0.0
  %2760 = vmatpush1.xpose.msra.mxu0 %v2743
  %2761 = vmatprep.subr.mxu0 0.0
  %2762 = vmatpush1.xpose.msra.mxu0 %v2745
  %2763 = vmatprep.subr.mxu0 0.0
  %2764 = vmatpush1.xpose.msra.mxu0 %v2747
  %2765 = vmatprep.subr.mxu0 0.0
  %2766 = vmatpush1.xpose.msra.mxu0 %v2749
  %2767 = vmatprep.subr.mxu0 0.0
  %2768 = vmatpush1.xpose.msra.mxu0 %v2751
  %2769 = vmatprep.subr.mxu0 0.0
  %2770 = vmatpush1.xpose.msra.mxu0 0.0
  %2771 = vmatprep.subr.mxu0 0.0
  %2772 = vmatpush1.xpose.msra.mxu0 0.0
  %2773 = vmatprep.subr.mxu0 0.0
  %2774 = vmatpush1.xpose.msra.mxu0 0.0
  %2775 = vmatprep.subr.mxu0 0.0
  %2776 = vmatpush1.xpose.msra.mxu0 0.0
  %2777 = vmatprep.subr.mxu0 0.0
  %2778 = vmatpush1.xpose.msra.mxu0 0.0
  %2779 = vmatprep.subr.mxu0 0.0
  %2780 = vmatpush1.xpose.msra.mxu0 0.0
  %2781 = vmatprep.subr.mxu0 0.0
  %2782 = vmatpush1.xpose.msra.mxu0 0.0
  %2783 = vmatprep.subr.mxu0 0.0
  %2784 = vmatpush1.xpose.msra.mxu0 0.0
  %2785 = vmatprep.subr.mxu0 0.0
  %2786 = vmatpush1.xpose.msra.mxu0 0.0
  %2787 = vmatprep.subr.mxu0 0.0
  %2788 = vmatpush1.xpose.msra.mxu0 0.0
  %2789 = vmatprep.subr.mxu0 0.0
  %2790 = vmatpush1.xpose.msra.mxu0 0.0
  %2791 = vmatprep.subr.mxu0 0.0
  %2792 = vmatpush1.xpose.msra.mxu0 0.0
  %2793 = vmatprep.subr.mxu0 0.0
  %2794 = vmatpush1.xpose.msra.mxu0 0.0
  %2795 = vmatprep.subr.mxu0 0.0
  %2796 = vmatpush1.xpose.msra.mxu0 0.0
  %2797 = vmatprep.subr.mxu0 0.0
  %2798 = vmatpush1.xpose.msra.mxu0 0.0
  %2799 = vmatprep.subr.mxu0 0.0
  %2800 = vmatpush1.xpose.msra.mxu0 0.0
  %2801 = vmatprep.subr.mxu0 0.0
  %2802 = vmatpush1.xpose.msra.mxu0 0.0
  %2803 = vmatprep.subr.mxu0 0.0
  %2804 = vmatpush1.xpose.msra.mxu0 0.0
  %2805 = vmatprep.subr.mxu0 0.0
  %2806 = vmatpush1.xpose.msra.mxu0 0.0
  %2807 = vmatprep.subr.mxu0 0.0
  %2808 = vmatpush1.xpose.msra.mxu0 0.0
  %2809 = vmatprep.subr.mxu0 0.0
  %2810 = vmatpush1.xpose.msra.mxu0 0.0
  %2811 = vmatprep.subr.mxu0 0.0
  %2812 = vmatpush1.xpose.msra.mxu0 0.0
  %2813 = vmatprep.subr.mxu0 0.0
  %2814 = vmatpush1.xpose.msra.mxu0 0.0
  %2815 = vmatprep.subr.mxu0 0.0
  %2816 = vmatpush1.xpose.msra.mxu0 0.0
  %2817 = vmatprep.mubr.f32.mxu0 0.0
  %2818 = vmatmul.mubr.f32.gmra.mrb[0].mxu0 %v2721
  %v2819 = vpop.f32.mrb[0].mxu0
  %v2820 = vadd.f32 %v2230, %v2819
  %v2821 = vpop.f32.mrb[0].mxu0
  %2822 = vmatprep.mubr.f32.mxu0 0.0
  %2823 = vmatmul.mubr.f32.gmra.mrb[0].mxu0 %v2723
  %v2824 = vpop.f32.mrb[0].mxu0
  %v2825 = vadd.f32 %v2231, %v2824
  %v2826 = vpop.f32.mrb[0].mxu0
  %2827 = vmatprep.mubr.f32.mxu0 0.0
  %2828 = vmatmul.mubr.f32.gmra.mrb[0].mxu0 %v2725
  %v2829 = vpop.f32.mrb[0].mxu0
  %v2830 = vadd.f32 %v2232, %v2829
  %v2831 = vpop.f32.mrb[0].mxu0
  %2832 = vmatprep.mubr.f32.mxu0 0.0
  %2833 = vmatmul.mubr.f32.gmra.mrb[0].mxu0 %v2727
  %v2834 = vpop.f32.mrb[0].mxu0
  %v2835 = vadd.f32 %v2233, %v2834
  %v2836 = vpop.f32.mrb[0].mxu0
  %2837 = vmatprep.mubr.f32.mxu0 0.0
  %2838 = vmatmul.mubr.f32.gmra.mrb[0].mxu0 %v2729
  %v2839 = vpop.f32.mrb[0].mxu0
  %v2840 = vadd.f32 %v2234, %v2839
  %v2841 = vpop.f32.mrb[0].mxu0
  %2842 = vmatprep.mubr.f32.mxu0 0.0
  %2843 = vmatmul.mubr.f32.gmra.mrb[0].mxu0 %v2731
  %v2844 = vpop.f32.mrb[0].mxu0
  %v2845 = vadd.f32 %v2235, %v2844
  %v2846 = vpop.f32.mrb[0].mxu0
  %2847 = vmatprep.mubr.f32.mxu0 0.0
  %2848 = vmatmul.mubr.f32.gmra.mrb[0].mxu0 %v2733
  %v2849 = vpop.f32.mrb[0].mxu0
  %v2850 = vadd.f32 %v2236, %v2849
  %v2851 = vpop.f32.mrb[0].mxu0
  %2852 = vmatprep.mubr.f32.mxu0 0.0
  %2853 = vmatmul.mubr.f32.gmra.mrb[0].mxu0 %v2735
  %v2854 = vpop.f32.mrb[0].mxu0
  %v2855 = vadd.f32 %v2237, %v2854
  %v2856 = vpop.f32.mrb[0].mxu0
  %2857 = vdwg.mxu0
  %v2858 = vsel %vm643, %v2820, -inf
  %2859 = vmax.xlane.f32.xlu0 %v2858
  %v2860 = vpop.xlane.xlu0 %2859
  %v2861 = vsel %vm643, %v2825, -inf
  %2862 = vmax.xlane.f32.xlu0 %v2861
  %v2863 = vpop.xlane.xlu0 %2862
  %v2864 = vsel %vm643, %v2830, -inf
  %2865 = vmax.xlane.f32.xlu0 %v2864
  %v2866 = vpop.xlane.xlu0 %2865
  %v2867 = vsel %vm643, %v2835, -inf
  %2868 = vmax.xlane.f32.xlu0 %v2867
  %v2869 = vpop.xlane.xlu0 %2868
  %v2870 = vsel %vm643, %v2840, -inf
  %2871 = vmax.xlane.f32.xlu0 %v2870
  %v2872 = vpop.xlane.xlu0 %2871
  %v2873 = vsel %vm643, %v2845, -inf
  %2874 = vmax.xlane.f32.xlu0 %v2873
  %v2875 = vpop.xlane.xlu0 %2874
  %v2876 = vsel %vm643, %v2850, -inf
  %2877 = vmax.xlane.f32.xlu0 %v2876
  %v2878 = vpop.xlane.xlu0 %2877
  %v2879 = vsel %vm643, %v2855, -inf
  %2880 = vmax.xlane.f32.xlu0 %v2879
  %v2881 = vpop.xlane.xlu0 %2880
  %v2882 = vsub.f32 %v2820, %v2860
  %v2883 = vsub.f32 %v2825, %v2863
  %v2884 = vsub.f32 %v2830, %v2866
  %v2885 = vsub.f32 %v2835, %v2869
  %v2886 = vsub.f32 %v2840, %v2872
  %v2887 = vsub.f32 %v2845, %v2875
  %v2888 = vsub.f32 %v2850, %v2878
  %v2889 = vsub.f32 %v2855, %v2881
  %v2890 = vmul.f32 %v2882, 1.442695
  %v2891 = vpow.pop %v2890
  %v2892 = vmul.f32 %v2883, 1.442695
  %v2893 = vpow.pop %v2892
  %v2894 = vmul.f32 %v2884, 1.442695
  %v2895 = vpow.pop %v2894
  %v2896 = vmul.f32 %v2885, 1.442695
  %v2897 = vpow.pop %v2896
  %v2898 = vmul.f32 %v2886, 1.442695
  %v2899 = vpow.pop %v2898
  %v2900 = vmul.f32 %v2887, 1.442695
  %v2901 = vpow.pop %v2900
  %v2902 = vmul.f32 %v2888, 1.442695
  %v2903 = vpow.pop %v2902
  %v2904 = vmul.f32 %v2889, 1.442695
  %v2905 = vpow.pop %v2904
  %v2906 = vsel %vm643, %v2891, 0.0
  %2907 = vadd.xlane.f32.xlu0 %v2906
  %v2908 = vpop.xlane.xlu0 %2907
  %v2909 = vsel %vm643, %v2893, 0.0
  %2910 = vadd.xlane.f32.xlu0 %v2909
  %v2911 = vpop.xlane.xlu0 %2910
  %v2912 = vsel %vm643, %v2895, 0.0
  %2913 = vadd.xlane.f32.xlu0 %v2912
  %v2914 = vpop.xlane.xlu0 %2913
  %v2915 = vsel %vm643, %v2897, 0.0
  %2916 = vadd.xlane.f32.xlu0 %v2915
  %v2917 = vpop.xlane.xlu0 %2916
  %v2918 = vsel %vm643, %v2899, 0.0
  %2919 = vadd.xlane.f32.xlu0 %v2918
  %v2920 = vpop.xlane.xlu0 %2919
  %v2921 = vsel %vm643, %v2901, 0.0
  %2922 = vadd.xlane.f32.xlu0 %v2921
  %v2923 = vpop.xlane.xlu0 %2922
  %v2924 = vsel %vm643, %v2903, 0.0
  %2925 = vadd.xlane.f32.xlu0 %v2924
  %v2926 = vpop.xlane.xlu0 %2925
  %v2927 = vsel %vm643, %v2905, 0.0
  %2928 = vadd.xlane.f32.xlu0 %v2927
  %v2929 = vpop.xlane.xlu0 %2928
  %v2930 = vrcp.pop %v2908
  %v2931 = vmul.f32 %v2891, %v2930
  %v2932 = vrcp.pop %v2911
  %v2933 = vmul.f32 %v2893, %v2932
  %v2934 = vrcp.pop %v2914
  %v2935 = vmul.f32 %v2895, %v2934
  %v2936 = vrcp.pop %v2917
  %v2937 = vmul.f32 %v2897, %v2936
  %v2938 = vrcp.pop %v2920
  %v2939 = vmul.f32 %v2899, %v2938
  %v2940 = vrcp.pop %v2923
  %v2941 = vmul.f32 %v2901, %v2940
  %v2942 = vrcp.pop %v2926
  %v2943 = vmul.f32 %v2903, %v2942
  %v2944 = vrcp.pop %v2929
  %v2945 = vmul.f32 %v2905, %v2944
  %2946 = vrot.lane.b32.xlu0 %v427, 48
  %v2947 = vpop.permute.xlu0 %2946
  %2948 = vrot.lane.b32.xlu0 %v432, 48
  %v2949 = vpop.permute.xlu0 %2948
  %2950 = vrot.lane.b32.xlu0 %v437, 48
  %v2951 = vpop.permute.xlu0 %2950
  %2952 = vrot.lane.b32.xlu0 %v442, 48
  %v2953 = vpop.permute.xlu0 %2952
  %2954 = vrot.lane.b32.xlu0 %v447, 48
  %v2955 = vpop.permute.xlu0 %2954
  %2956 = vrot.lane.b32.xlu0 %v452, 48
  %v2957 = vpop.permute.xlu0 %2956
  %2958 = vrot.lane.b32.xlu0 %v457, 48
  %v2959 = vpop.permute.xlu0 %2958
  %2960 = vrot.lane.b32.xlu0 %v462, 48
  %v2961 = vpop.permute.xlu0 %2960
  %v2971 = vsel %vm643, %v2931, 0
  %v2974 = vsel %vm643, %v2933, 0
  %v2977 = vsel %vm643, %v2935, 0
  %v2980 = vsel %vm643, %v2937, 0
  %v2983 = vsel %vm643, %v2939, 0
  %v2986 = vsel %vm643, %v2941, 0
  %v2989 = vsel %vm643, %v2943, 0
  %v2992 = vsel %vm643, %v2945, 0
  %2994 = vmatprep.subr.mxu0 0.0
  %2995 = vmatpush1.msra.mxu0 %v2947
  %2996 = vmatprep.subr.mxu0 0.0
  %2997 = vmatpush1.msra.mxu0 %v2949
  %2998 = vmatprep.subr.mxu0 0.0
  %2999 = vmatpush1.msra.mxu0 %v2951
  %3000 = vmatprep.subr.mxu0 0.0
  %3001 = vmatpush1.msra.mxu0 %v2953
  %3002 = vmatprep.subr.mxu0 0.0
  %3003 = vmatpush1.msra.mxu0 %v2955
  %3004 = vmatprep.subr.mxu0 0.0
  %3005 = vmatpush1.msra.mxu0 %v2957
  %3006 = vmatprep.subr.mxu0 0.0
  %3007 = vmatpush1.msra.mxu0 %v2959
  %3008 = vmatprep.subr.mxu0 0.0
  %3009 = vmatpush1.msra.mxu0 %v2961
  %3010 = vmatprep.subr.mxu0 0.0
  %3011 = vmatpush1.msra.mxu0 0.0
  %3012 = vmatprep.subr.mxu0 0.0
  %3013 = vmatpush1.msra.mxu0 0.0
  %3014 = vmatprep.subr.mxu0 0.0
  %3015 = vmatpush1.msra.mxu0 0.0
  %3016 = vmatprep.subr.mxu0 0.0
  %3017 = vmatpush1.msra.mxu0 0.0
  %3018 = vmatprep.subr.mxu0 0.0
  %3019 = vmatpush1.msra.mxu0 0.0
  %3020 = vmatprep.subr.mxu0 0.0
  %3021 = vmatpush1.msra.mxu0 0.0
  %3022 = vmatprep.subr.mxu0 0.0
  %3023 = vmatpush1.msra.mxu0 0.0
  %3024 = vmatprep.subr.mxu0 0.0
  %3025 = vmatpush1.msra.mxu0 0.0
  %3026 = vmatprep.subr.mxu0 0.0
  %3027 = vmatpush1.msra.mxu0 0.0
  %3028 = vmatprep.subr.mxu0 0.0
  %3029 = vmatpush1.msra.mxu0 0.0
  %3030 = vmatprep.subr.mxu0 0.0
  %3031 = vmatpush1.msra.mxu0 0.0
  %3032 = vmatprep.subr.mxu0 0.0
  %3033 = vmatpush1.msra.mxu0 0.0
  %3034 = vmatprep.subr.mxu0 0.0
  %3035 = vmatpush1.msra.mxu0 0.0
  %3036 = vmatprep.subr.mxu0 0.0
  %3037 = vmatpush1.msra.mxu0 0.0
  %3038 = vmatprep.subr.mxu0 0.0
  %3039 = vmatpush1.msra.mxu0 0.0
  %3040 = vmatprep.subr.mxu0 0.0
  %3041 = vmatpush1.msra.mxu0 0.0
  %3042 = vmatprep.subr.mxu0 0.0
  %3043 = vmatpush1.msra.mxu0 0.0
  %3044 = vmatprep.subr.mxu0 0.0
  %3045 = vmatpush1.msra.mxu0 0.0
  %3046 = vmatprep.subr.mxu0 0.0
  %3047 = vmatpush1.msra.mxu0 0.0
  %3048 = vmatprep.subr.mxu0 0.0
  %3049 = vmatpush1.msra.mxu0 0.0
  %3050 = vmatprep.subr.mxu0 0.0
  %3051 = vmatpush1.msra.mxu0 0.0
  %3052 = vmatprep.subr.mxu0 0.0
  %3053 = vmatpush1.msra.mxu0 0.0
  %3054 = vmatprep.subr.mxu0 0.0
  %3055 = vmatpush1.msra.mxu0 0.0
  %3056 = vmatprep.subr.mxu0 0.0
  %3057 = vmatpush1.msra.mxu0 0.0
  %3058 = vmatprep.mubr.f32.mxu0 0.0
  %3059 = vmatmul.mubr.f32.gmra.mrb[0].mxu0 %v2971
  %v3060 = vpop.f32.mrb[0].mxu0
  %v3061 = vadd.f32 0.0, %v3060
  %v3062 = vpop.f32.mrb[0].mxu0
  %3063 = vmatprep.mubr.f32.mxu0 0.0
  %3064 = vmatmul.mubr.f32.gmra.mrb[0].mxu0 %v2974
  %v3065 = vpop.f32.mrb[0].mxu0
  %v3066 = vadd.f32 0.0, %v3065
  %v3067 = vpop.f32.mrb[0].mxu0
  %3068 = vmatprep.mubr.f32.mxu0 0.0
  %3069 = vmatmul.mubr.f32.gmra.mrb[0].mxu0 %v2977
  %v3070 = vpop.f32.mrb[0].mxu0
  %v3071 = vadd.f32 0.0, %v3070
  %v3072 = vpop.f32.mrb[0].mxu0
  %3073 = vmatprep.mubr.f32.mxu0 0.0
  %3074 = vmatmul.mubr.f32.gmra.mrb[0].mxu0 %v2980
  %v3075 = vpop.f32.mrb[0].mxu0
  %v3076 = vadd.f32 0.0, %v3075
  %v3077 = vpop.f32.mrb[0].mxu0
  %3078 = vmatprep.mubr.f32.mxu0 0.0
  %3079 = vmatmul.mubr.f32.gmra.mrb[0].mxu0 %v2983
  %v3080 = vpop.f32.mrb[0].mxu0
  %v3081 = vadd.f32 0.0, %v3080
  %v3082 = vpop.f32.mrb[0].mxu0
  %3083 = vmatprep.mubr.f32.mxu0 0.0
  %3084 = vmatmul.mubr.f32.gmra.mrb[0].mxu0 %v2986
  %v3085 = vpop.f32.mrb[0].mxu0
  %v3086 = vadd.f32 0.0, %v3085
  %v3087 = vpop.f32.mrb[0].mxu0
  %3088 = vmatprep.mubr.f32.mxu0 0.0
  %3089 = vmatmul.mubr.f32.gmra.mrb[0].mxu0 %v2989
  %v3090 = vpop.f32.mrb[0].mxu0
  %v3091 = vadd.f32 0.0, %v3090
  %v3092 = vpop.f32.mrb[0].mxu0
  %3093 = vmatprep.mubr.f32.mxu0 0.0
  %3094 = vmatmul.mubr.f32.gmra.mrb[0].mxu0 %v2992
  %v3095 = vpop.f32.mrb[0].mxu0
  %v3096 = vadd.f32 0.0, %v3095
  %v3097 = vpop.f32.mrb[0].mxu0
  %3098 = vdwg.mxu0
  %3107 = vrot.lane.b32.xlu0 %v3061, 16
  %v3108 = vpop.permute.xlu0 %3107
  %3109 = vrot.lane.b32.xlu0 %v3066, 16
  %v3110 = vpop.permute.xlu0 %3109
  %3111 = vrot.lane.b32.xlu0 %v3071, 16
  %v3112 = vpop.permute.xlu0 %3111
  %3113 = vrot.lane.b32.xlu0 %v3076, 16
  %v3114 = vpop.permute.xlu0 %3113
  %3115 = vrot.lane.b32.xlu0 %v3081, 16
  %v3116 = vpop.permute.xlu0 %3115
  %3117 = vrot.lane.b32.xlu0 %v3086, 16
  %v3118 = vpop.permute.xlu0 %3117
  %3119 = vrot.lane.b32.xlu0 %v3091, 16
  %v3120 = vpop.permute.xlu0 %3119
  %3121 = vrot.lane.b32.xlu0 %v3096, 16
  %v3122 = vpop.permute.xlu0 %3121
  %3131 = vst.msk [vmem:[#allocation2 + $0x40] sm:$0xff] %vm2680, %v3108
  %3132 = vst.msk [vmem:[#allocation2 + $0x48] sm:$0xff] %vm2680, %v3110
  %3133 = vst.msk [vmem:[#allocation2 + $0x50] sm:$0xff] %vm2680, %v3112
  %3134 = vst.msk [vmem:[#allocation2 + $0x58] sm:$0xff] %vm2680, %v3114
  %3135 = vst.msk [vmem:[#allocation2 + $0x60] sm:$0xff] %vm2680, %v3116
  %3136 = vst.msk [vmem:[#allocation2 + $0x68] sm:$0xff] %vm2680, %v3118
  %3137 = vst.msk [vmem:[#allocation2 + $0x70] sm:$0xff] %vm2680, %v3120
  %3138 = vst.msk [vmem:[#allocation2 + $0x78] sm:$0xff] %vm2680, %v3122
  %s3139 = scalar_lea.vmem %s1, 96
  %v3140 = vld [vmem:[%s3139] sm:$0xf]
  %v3141 = vld [vmem:[%s3139 + $0x4] sm:$0xf]
  %v3142 = vld [vmem:[%s3139 + $0x8] sm:$0xf]
  %v3143 = vld [vmem:[%s3139 + $0xc] sm:$0xf]
  %v3144 = vld [vmem:[%s3139 + $0x10] sm:$0xf]
  %v3145 = vld [vmem:[%s3139 + $0x14] sm:$0xf]
  %v3146 = vld [vmem:[%s3139 + $0x18] sm:$0xf]
  %v3147 = vld [vmem:[%s3139 + $0x1c] sm:$0xf]
  %v3148 = vunpack.c.l.bf16 %v3140
  %v3149 = vunpack.c.l.bf16 %v3141
  %v3150 = vunpack.c.l.bf16 %v3142
  %v3151 = vunpack.c.l.bf16 %v3143
  %v3152 = vunpack.c.l.bf16 %v3144
  %v3153 = vunpack.c.l.bf16 %v3145
  %v3154 = vunpack.c.l.bf16 %v3146
  %v3155 = vunpack.c.l.bf16 %v3147
  %3156 = vrot.lane.b32.xlu0 %v387, 104
  %v3157 = vpop.permute.xlu0 %3156
  %3158 = vrot.lane.b32.xlu0 %v392, 104
  %v3159 = vpop.permute.xlu0 %3158
  %3160 = vrot.lane.b32.xlu0 %v397, 104
  %v3161 = vpop.permute.xlu0 %3160
  %3162 = vrot.lane.b32.xlu0 %v402, 104
  %v3163 = vpop.permute.xlu0 %3162
  %3164 = vrot.lane.b32.xlu0 %v407, 104
  %v3165 = vpop.permute.xlu0 %3164
  %3166 = vrot.lane.b32.xlu0 %v412, 104
  %v3167 = vpop.permute.xlu0 %3166
  %3168 = vrot.lane.b32.xlu0 %v417, 104
  %v3169 = vpop.permute.xlu0 %3168
  %3170 = vrot.lane.b32.xlu0 %v422, 104
  %v3171 = vpop.permute.xlu0 %3170
  %3172 = vrot.lane.b32.xlu0 %v387, 72
  %v3173 = vpop.permute.xlu0 %3172
  %3174 = vrot.lane.b32.xlu0 %v392, 72
  %v3175 = vpop.permute.xlu0 %3174
  %3176 = vrot.lane.b32.xlu0 %v397, 72
  %v3177 = vpop.permute.xlu0 %3176
  %3178 = vrot.lane.b32.xlu0 %v402, 72
  %v3179 = vpop.permute.xlu0 %3178
  %3180 = vrot.lane.b32.xlu0 %v407, 72
  %v3181 = vpop.permute.xlu0 %3180
  %3182 = vrot.lane.b32.xlu0 %v412, 72
  %v3183 = vpop.permute.xlu0 %3182
  %3184 = vrot.lane.b32.xlu0 %v417, 72
  %v3185 = vpop.permute.xlu0 %3184
  %3186 = vrot.lane.b32.xlu0 %v422, 72
  %v3187 = vpop.permute.xlu0 %3186
  %v3188 = vsel %vm505, %v3157, 0
  %v3190 = vsel %vm505, %v3159, 0
  %v3192 = vsel %vm505, %v3161, 0
  %v3194 = vsel %vm505, %v3163, 0
  %v3196 = vsel %vm505, %v3165, 0
  %v3198 = vsel %vm505, %v3167, 0
  %v3200 = vsel %vm505, %v3169, 0
  %v3202 = vsel %vm505, %v3171, 0
  %v3204 = vsel %vm505, %v3173, 0
  %v3206 = vsel %vm505, %v3175, 0
  %v3208 = vsel %vm505, %v3177, 0
  %v3210 = vsel %vm505, %v3179, 0
  %v3212 = vsel %vm505, %v3181, 0
  %v3214 = vsel %vm505, %v3183, 0
  %v3216 = vsel %vm505, %v3185, 0
  %v3218 = vsel %vm505, %v3187, 0
  %3220 = vmatprep.subr.mxu0 0.0
  %3221 = vmatpush1.xpose.msra.mxu0 %v3204
  %3222 = vmatprep.subr.mxu0 0.0
  %3223 = vmatpush1.xpose.msra.mxu0 %v3206
  %3224 = vmatprep.subr.mxu0 0.0
  %3225 = vmatpush1.xpose.msra.mxu0 %v3208
  %3226 = vmatprep.subr.mxu0 0.0
  %3227 = vmatpush1.xpose.msra.mxu0 %v3210
  %3228 = vmatprep.subr.mxu0 0.0
  %3229 = vmatpush1.xpose.msra.mxu0 %v3212
  %3230 = vmatprep.subr.mxu0 0.0
  %3231 = vmatpush1.xpose.msra.mxu0 %v3214
  %3232 = vmatprep.subr.mxu0 0.0
  %3233 = vmatpush1.xpose.msra.mxu0 %v3216
  %3234 = vmatprep.subr.mxu0 0.0
  %3235 = vmatpush1.xpose.msra.mxu0 %v3218
  %3236 = vmatprep.subr.mxu0 0.0
  %3237 = vmatpush1.xpose.msra.mxu0 0.0
  %3238 = vmatprep.subr.mxu0 0.0
  %3239 = vmatpush1.xpose.msra.mxu0 0.0
  %3240 = vmatprep.subr.mxu0 0.0
  %3241 = vmatpush1.xpose.msra.mxu0 0.0
  %3242 = vmatprep.subr.mxu0 0.0
  %3243 = vmatpush1.xpose.msra.mxu0 0.0
  %3244 = vmatprep.subr.mxu0 0.0
  %3245 = vmatpush1.xpose.msra.mxu0 0.0
  %3246 = vmatprep.subr.mxu0 0.0
  %3247 = vmatpush1.xpose.msra.mxu0 0.0
  %3248 = vmatprep.subr.mxu0 0.0
  %3249 = vmatpush1.xpose.msra.mxu0 0.0
  %3250 = vmatprep.subr.mxu0 0.0
  %3251 = vmatpush1.xpose.msra.mxu0 0.0
  %3252 = vmatprep.subr.mxu0 0.0
  %3253 = vmatpush1.xpose.msra.mxu0 0.0
  %3254 = vmatprep.subr.mxu0 0.0
  %3255 = vmatpush1.xpose.msra.mxu0 0.0
  %3256 = vmatprep.subr.mxu0 0.0
  %3257 = vmatpush1.xpose.msra.mxu0 0.0
  %3258 = vmatprep.subr.mxu0 0.0
  %3259 = vmatpush1.xpose.msra.mxu0 0.0
  %3260 = vmatprep.subr.mxu0 0.0
  %3261 = vmatpush1.xpose.msra.mxu0 0.0
  %3262 = vmatprep.subr.mxu0 0.0
  %3263 = vmatpush1.xpose.msra.mxu0 0.0
  %3264 = vmatprep.subr.mxu0 0.0
  %3265 = vmatpush1.xpose.msra.mxu0 0.0
  %3266 = vmatprep.subr.mxu0 0.0
  %3267 = vmatpush1.xpose.msra.mxu0 0.0
  %3268 = vmatprep.subr.mxu0 0.0
  %3269 = vmatpush1.xpose.msra.mxu0 0.0
  %3270 = vmatprep.subr.mxu0 0.0
  %3271 = vmatpush1.xpose.msra.mxu0 0.0
  %3272 = vmatprep.subr.mxu0 0.0
  %3273 = vmatpush1.xpose.msra.mxu0 0.0
  %3274 = vmatprep.subr.mxu0 0.0
  %3275 = vmatpush1.xpose.msra.mxu0 0.0
  %3276 = vmatprep.subr.mxu0 0.0
  %3277 = vmatpush1.xpose.msra.mxu0 0.0
  %3278 = vmatprep.subr.mxu0 0.0
  %3279 = vmatpush1.xpose.msra.mxu0 0.0
  %3280 = vmatprep.subr.mxu0 0.0
  %3281 = vmatpush1.xpose.msra.mxu0 0.0
  %3282 = vmatprep.subr.mxu0 0.0
  %3283 = vmatpush1.xpose.msra.mxu0 0.0
  %3284 = vmatprep.mubr.f32.mxu0 0.0
  %3285 = vmatmul.mubr.f32.gmra.mrb[0].mxu0 %v3188
  %v3286 = vpop.f32.mrb[0].mxu0
  %v3287 = vadd.f32 %v3148, %v3286
  %v3288 = vpop.f32.mrb[0].mxu0
  %3289 = vmatprep.mubr.f32.mxu0 0.0
  %3290 = vmatmul.mubr.f32.gmra.mrb[0].mxu0 %v3190
  %v3291 = vpop.f32.mrb[0].mxu0
  %v3292 = vadd.f32 %v3149, %v3291
  %v3293 = vpop.f32.mrb[0].mxu0
  %3294 = vmatprep.mubr.f32.mxu0 0.0
  %3295 = vmatmul.mubr.f32.gmra.mrb[0].mxu0 %v3192
  %v3296 = vpop.f32.mrb[0].mxu0
  %v3297 = vadd.f32 %v3150, %v3296
  %v3298 = vpop.f32.mrb[0].mxu0
  %3299 = vmatprep.mubr.f32.mxu0 0.0
  %3300 = vmatmul.mubr.f32.gmra.mrb[0].mxu0 %v3194
  %v3301 = vpop.f32.mrb[0].mxu0
  %v3302 = vadd.f32 %v3151, %v3301
  %v3303 = vpop.f32.mrb[0].mxu0
  %3304 = vmatprep.mubr.f32.mxu0 0.0
  %3305 = vmatmul.mubr.f32.gmra.mrb[0].mxu0 %v3196
  %v3306 = vpop.f32.mrb[0].mxu0
  %v3307 = vadd.f32 %v3152, %v3306
  %v3308 = vpop.f32.mrb[0].mxu0
  %3309 = vmatprep.mubr.f32.mxu0 0.0
  %3310 = vmatmul.mubr.f32.gmra.mrb[0].mxu0 %v3198
  %v3311 = vpop.f32.mrb[0].mxu0
  %v3312 = vadd.f32 %v3153, %v3311
  %v3313 = vpop.f32.mrb[0].mxu0
  %3314 = vmatprep.mubr.f32.mxu0 0.0
  %3315 = vmatmul.mubr.f32.gmra.mrb[0].mxu0 %v3200
  %v3316 = vpop.f32.mrb[0].mxu0
  %v3317 = vadd.f32 %v3154, %v3316
  %v3318 = vpop.f32.mrb[0].mxu0
  %3319 = vmatprep.mubr.f32.mxu0 0.0
  %3320 = vmatmul.mubr.f32.gmra.mrb[0].mxu0 %v3202
  %v3321 = vpop.f32.mrb[0].mxu0
  %v3322 = vadd.f32 %v3155, %v3321
  %v3323 = vpop.f32.mrb[0].mxu0
  %3324 = vdwg.mxu0
  %v3325 = vsel %vm643, %v3287, -inf
  %3326 = vmax.xlane.f32.xlu0 %v3325
  %v3327 = vpop.xlane.xlu0 %3326
  %v3328 = vsel %vm643, %v3292, -inf
  %3329 = vmax.xlane.f32.xlu0 %v3328
  %v3330 = vpop.xlane.xlu0 %3329
  %v3331 = vsel %vm643, %v3297, -inf
  %3332 = vmax.xlane.f32.xlu0 %v3331
  %v3333 = vpop.xlane.xlu0 %3332
  %v3334 = vsel %vm643, %v3302, -inf
  %3335 = vmax.xlane.f32.xlu0 %v3334
  %v3336 = vpop.xlane.xlu0 %3335
  %v3337 = vsel %vm643, %v3307, -inf
  %3338 = vmax.xlane.f32.xlu0 %v3337
  %v3339 = vpop.xlane.xlu0 %3338
  %v3340 = vsel %vm643, %v3312, -inf
  %3341 = vmax.xlane.f32.xlu0 %v3340
  %v3342 = vpop.xlane.xlu0 %3341
  %v3343 = vsel %vm643, %v3317, -inf
  %3344 = vmax.xlane.f32.xlu0 %v3343
  %v3345 = vpop.xlane.xlu0 %3344
  %v3346 = vsel %vm643, %v3322, -inf
  %3347 = vmax.xlane.f32.xlu0 %v3346
  %v3348 = vpop.xlane.xlu0 %3347
  %v3349 = vsub.f32 %v3287, %v3327
  %v3350 = vsub.f32 %v3292, %v3330
  %v3351 = vsub.f32 %v3297, %v3333
  %v3352 = vsub.f32 %v3302, %v3336
  %v3353 = vsub.f32 %v3307, %v3339
  %v3354 = vsub.f32 %v3312, %v3342
  %v3355 = vsub.f32 %v3317, %v3345
  %v3356 = vsub.f32 %v3322, %v3348
  %v3357 = vmul.f32 %v3349, 1.442695
  %v3358 = vpow.pop %v3357
  %v3359 = vmul.f32 %v3350, 1.442695
  %v3360 = vpow.pop %v3359
  %v3361 = vmul.f32 %v3351, 1.442695
  %v3362 = vpow.pop %v3361
  %v3363 = vmul.f32 %v3352, 1.442695
  %v3364 = vpow.pop %v3363
  %v3365 = vmul.f32 %v3353, 1.442695
  %v3366 = vpow.pop %v3365
  %v3367 = vmul.f32 %v3354, 1.442695
  %v3368 = vpow.pop %v3367
  %v3369 = vmul.f32 %v3355, 1.442695
  %v3370 = vpow.pop %v3369
  %v3371 = vmul.f32 %v3356, 1.442695
  %v3372 = vpow.pop %v3371
  %v3373 = vsel %vm643, %v3358, 0.0
  %3374 = vadd.xlane.f32.xlu0 %v3373
  %v3375 = vpop.xlane.xlu0 %3374
  %v3376 = vsel %vm643, %v3360, 0.0
  %3377 = vadd.xlane.f32.xlu0 %v3376
  %v3378 = vpop.xlane.xlu0 %3377
  %v3379 = vsel %vm643, %v3362, 0.0
  %3380 = vadd.xlane.f32.xlu0 %v3379
  %v3381 = vpop.xlane.xlu0 %3380
  %v3382 = vsel %vm643, %v3364, 0.0
  %3383 = vadd.xlane.f32.xlu0 %v3382
  %v3384 = vpop.xlane.xlu0 %3383
  %v3385 = vsel %vm643, %v3366, 0.0
  %3386 = vadd.xlane.f32.xlu0 %v3385
  %v3387 = vpop.xlane.xlu0 %3386
  %v3388 = vsel %vm643, %v3368, 0.0
  %3389 = vadd.xlane.f32.xlu0 %v3388
  %v3390 = vpop.xlane.xlu0 %3389
  %v3391 = vsel %vm643, %v3370, 0.0
  %3392 = vadd.xlane.f32.xlu0 %v3391
  %v3393 = vpop.xlane.xlu0 %3392
  %v3394 = vsel %vm643, %v3372, 0.0
  %3395 = vadd.xlane.f32.xlu0 %v3394
  %v3396 = vpop.xlane.xlu0 %3395
  %v3397 = vrcp.pop %v3375
  %v3398 = vmul.f32 %v3358, %v3397
  %v3399 = vrcp.pop %v3378
  %v3400 = vmul.f32 %v3360, %v3399
  %v3401 = vrcp.pop %v3381
  %v3402 = vmul.f32 %v3362, %v3401
  %v3403 = vrcp.pop %v3384
  %v3404 = vmul.f32 %v3364, %v3403
  %v3405 = vrcp.pop %v3387
  %v3406 = vmul.f32 %v3366, %v3405
  %v3407 = vrcp.pop %v3390
  %v3408 = vmul.f32 %v3368, %v3407
  %v3409 = vrcp.pop %v3393
  %v3410 = vmul.f32 %v3370, %v3409
  %v3411 = vrcp.pop %v3396
  %v3412 = vmul.f32 %v3372, %v3411
  %3413 = vrot.lane.b32.xlu0 %v387, 40
  %v3414 = vpop.permute.xlu0 %3413
  %3415 = vrot.lane.b32.xlu0 %v392, 40
  %v3416 = vpop.permute.xlu0 %3415
  %3417 = vrot.lane.b32.xlu0 %v397, 40
  %v3418 = vpop.permute.xlu0 %3417
  %3419 = vrot.lane.b32.xlu0 %v402, 40
  %v3420 = vpop.permute.xlu0 %3419
  %3421 = vrot.lane.b32.xlu0 %v407, 40
  %v3422 = vpop.permute.xlu0 %3421
  %3423 = vrot.lane.b32.xlu0 %v412, 40
  %v3424 = vpop.permute.xlu0 %3423
  %3425 = vrot.lane.b32.xlu0 %v417, 40
  %v3426 = vpop.permute.xlu0 %3425
  %3427 = vrot.lane.b32.xlu0 %v422, 40
  %v3428 = vpop.permute.xlu0 %3427
  %v3438 = vsel %vm643, %v3398, 0
  %v3441 = vsel %vm643, %v3400, 0
  %v3444 = vsel %vm643, %v3402, 0
  %v3447 = vsel %vm643, %v3404, 0
  %v3450 = vsel %vm643, %v3406, 0
  %v3453 = vsel %vm643, %v3408, 0
  %v3456 = vsel %vm643, %v3410, 0
  %v3459 = vsel %vm643, %v3412, 0
  %3461 = vmatprep.subr.mxu0 0.0
  %3462 = vmatpush1.msra.mxu0 %v3414
  %3463 = vmatprep.subr.mxu0 0.0
  %3464 = vmatpush1.msra.mxu0 %v3416
  %3465 = vmatprep.subr.mxu0 0.0
  %3466 = vmatpush1.msra.mxu0 %v3418
  %3467 = vmatprep.subr.mxu0 0.0
  %3468 = vmatpush1.msra.mxu0 %v3420
  %3469 = vmatprep.subr.mxu0 0.0
  %3470 = vmatpush1.msra.mxu0 %v3422
  %3471 = vmatprep.subr.mxu0 0.0
  %3472 = vmatpush1.msra.mxu0 %v3424
  %3473 = vmatprep.subr.mxu0 0.0
  %3474 = vmatpush1.msra.mxu0 %v3426
  %3475 = vmatprep.subr.mxu0 0.0
  %3476 = vmatpush1.msra.mxu0 %v3428
  %3477 = vmatprep.subr.mxu0 0.0
  %3478 = vmatpush1.msra.mxu0 0.0
  %3479 = vmatprep.subr.mxu0 0.0
  %3480 = vmatpush1.msra.mxu0 0.0
  %3481 = vmatprep.subr.mxu0 0.0
  %3482 = vmatpush1.msra.mxu0 0.0
  %3483 = vmatprep.subr.mxu0 0.0
  %3484 = vmatpush1.msra.mxu0 0.0
  %3485 = vmatprep.subr.mxu0 0.0
  %3486 = vmatpush1.msra.mxu0 0.0
  %3487 = vmatprep.subr.mxu0 0.0
  %3488 = vmatpush1.msra.mxu0 0.0
  %3489 = vmatprep.subr.mxu0 0.0
  %3490 = vmatpush1.msra.mxu0 0.0
  %3491 = vmatprep.subr.mxu0 0.0
  %3492 = vmatpush1.msra.mxu0 0.0
  %3493 = vmatprep.subr.mxu0 0.0
  %3494 = vmatpush1.msra.mxu0 0.0
  %3495 = vmatprep.subr.mxu0 0.0
  %3496 = vmatpush1.msra.mxu0 0.0
  %3497 = vmatprep.subr.mxu0 0.0
  %3498 = vmatpush1.msra.mxu0 0.0
  %3499 = vmatprep.subr.mxu0 0.0
  %3500 = vmatpush1.msra.mxu0 0.0
  %3501 = vmatprep.subr.mxu0 0.0
  %3502 = vmatpush1.msra.mxu0 0.0
  %3503 = vmatprep.subr.mxu0 0.0
  %3504 = vmatpush1.msra.mxu0 0.0
  %3505 = vmatprep.subr.mxu0 0.0
  %3506 = vmatpush1.msra.mxu0 0.0
  %3507 = vmatprep.subr.mxu0 0.0
  %3508 = vmatpush1.msra.mxu0 0.0
  %3509 = vmatprep.subr.mxu0 0.0
  %3510 = vmatpush1.msra.mxu0 0.0
  %3511 = vmatprep.subr.mxu0 0.0
  %3512 = vmatpush1.msra.mxu0 0.0
  %3513 = vmatprep.subr.mxu0 0.0
  %3514 = vmatpush1.msra.mxu0 0.0
  %3515 = vmatprep.subr.mxu0 0.0
  %3516 = vmatpush1.msra.mxu0 0.0
  %3517 = vmatprep.subr.mxu0 0.0
  %3518 = vmatpush1.msra.mxu0 0.0
  %3519 = vmatprep.subr.mxu0 0.0
  %3520 = vmatpush1.msra.mxu0 0.0
  %3521 = vmatprep.subr.mxu0 0.0
  %3522 = vmatpush1.msra.mxu0 0.0
  %3523 = vmatprep.subr.mxu0 0.0
  %3524 = vmatpush1.msra.mxu0 0.0
  %3525 = vmatprep.mubr.f32.mxu0 0.0
  %3526 = vmatmul.mubr.f32.gmra.mrb[0].mxu0 %v3438
  %v3527 = vpop.f32.mrb[0].mxu0
  %v3528 = vadd.f32 0.0, %v3527
  %v3529 = vpop.f32.mrb[0].mxu0
  %3530 = vmatprep.mubr.f32.mxu0 0.0
  %3531 = vmatmul.mubr.f32.gmra.mrb[0].mxu0 %v3441
  %v3532 = vpop.f32.mrb[0].mxu0
  %v3533 = vadd.f32 0.0, %v3532
  %v3534 = vpop.f32.mrb[0].mxu0
  %3535 = vmatprep.mubr.f32.mxu0 0.0
  %3536 = vmatmul.mubr.f32.gmra.mrb[0].mxu0 %v3444
  %v3537 = vpop.f32.mrb[0].mxu0
  %v3538 = vadd.f32 0.0, %v3537
  %v3539 = vpop.f32.mrb[0].mxu0
  %3540 = vmatprep.mubr.f32.mxu0 0.0
  %3541 = vmatmul.mubr.f32.gmra.mrb[0].mxu0 %v3447
  %v3542 = vpop.f32.mrb[0].mxu0
  %v3543 = vadd.f32 0.0, %v3542
  %v3544 = vpop.f32.mrb[0].mxu0
  %3545 = vmatprep.mubr.f32.mxu0 0.0
  %3546 = vmatmul.mubr.f32.gmra.mrb[0].mxu0 %v3450
  %v3547 = vpop.f32.mrb[0].mxu0
  %v3548 = vadd.f32 0.0, %v3547
  %v3549 = vpop.f32.mrb[0].mxu0
  %3550 = vmatprep.mubr.f32.mxu0 0.0
  %3551 = vmatmul.mubr.f32.gmra.mrb[0].mxu0 %v3453
  %v3552 = vpop.f32.mrb[0].mxu0
  %v3553 = vadd.f32 0.0, %v3552
  %v3554 = vpop.f32.mrb[0].mxu0
  %3555 = vmatprep.mubr.f32.mxu0 0.0
  %3556 = vmatmul.mubr.f32.gmra.mrb[0].mxu0 %v3456
  %v3557 = vpop.f32.mrb[0].mxu0
  %v3558 = vadd.f32 0.0, %v3557
  %v3559 = vpop.f32.mrb[0].mxu0
  %3560 = vmatprep.mubr.f32.mxu0 0.0
  %3561 = vmatmul.mubr.f32.gmra.mrb[0].mxu0 %v3459
  %v3562 = vpop.f32.mrb[0].mxu0
  %v3563 = vadd.f32 0.0, %v3562
  %v3564 = vpop.f32.mrb[0].mxu0
  %3565 = vdwg.mxu0
  %3574 = vrot.lane.b32.xlu0 %v3528, 24
  %v3575 = vpop.permute.xlu0 %3574
  %3576 = vrot.lane.b32.xlu0 %v3533, 24
  %v3577 = vpop.permute.xlu0 %3576
  %3578 = vrot.lane.b32.xlu0 %v3538, 24
  %v3579 = vpop.permute.xlu0 %3578
  %3580 = vrot.lane.b32.xlu0 %v3543, 24
  %v3581 = vpop.permute.xlu0 %3580
  %3582 = vrot.lane.b32.xlu0 %v3548, 24
  %v3583 = vpop.permute.xlu0 %3582
  %3584 = vrot.lane.b32.xlu0 %v3553, 24
  %v3585 = vpop.permute.xlu0 %3584
  %3586 = vrot.lane.b32.xlu0 %v3558, 24
  %v3587 = vpop.permute.xlu0 %3586
  %3588 = vrot.lane.b32.xlu0 %v3563, 24
  %v3589 = vpop.permute.xlu0 %3588
  %vm3598 = vcmask 261312
  %3599 = vst.msk [vmem:[#allocation2] sm:$0xff] %vm3598, %v3575
  %3600 = vst.msk [vmem:[#allocation2 + $0x8] sm:$0xff] %vm3598, %v3577
  %3601 = vst.msk [vmem:[#allocation2 + $0x10] sm:$0xff] %vm3598, %v3579
  %3602 = vst.msk [vmem:[#allocation2 + $0x18] sm:$0xff] %vm3598, %v3581
  %3603 = vst.msk [vmem:[#allocation2 + $0x20] sm:$0xff] %vm3598, %v3583
  %3604 = vst.msk [vmem:[#allocation2 + $0x28] sm:$0xff] %vm3598, %v3585
  %3605 = vst.msk [vmem:[#allocation2 + $0x30] sm:$0xff] %vm3598, %v3587
  %3606 = vst.msk [vmem:[#allocation2 + $0x38] sm:$0xff] %vm3598, %v3589
  %3607 = vrot.lane.b32.xlu0 %v427, 104
  %v3608 = vpop.permute.xlu0 %3607
  %3609 = vrot.lane.b32.xlu0 %v432, 104
  %v3610 = vpop.permute.xlu0 %3609
  %3611 = vrot.lane.b32.xlu0 %v437, 104
  %v3612 = vpop.permute.xlu0 %3611
  %3613 = vrot.lane.b32.xlu0 %v442, 104
  %v3614 = vpop.permute.xlu0 %3613
  %3615 = vrot.lane.b32.xlu0 %v447, 104
  %v3616 = vpop.permute.xlu0 %3615
  %3617 = vrot.lane.b32.xlu0 %v452, 104
  %v3618 = vpop.permute.xlu0 %3617
  %3619 = vrot.lane.b32.xlu0 %v457, 104
  %v3620 = vpop.permute.xlu0 %3619
  %3621 = vrot.lane.b32.xlu0 %v462, 104
  %v3622 = vpop.permute.xlu0 %3621
  %3623 = vrot.lane.b32.xlu0 %v427, 72
  %v3624 = vpop.permute.xlu0 %3623
  %3625 = vrot.lane.b32.xlu0 %v432, 72
  %v3626 = vpop.permute.xlu0 %3625
  %3627 = vrot.lane.b32.xlu0 %v437, 72
  %v3628 = vpop.permute.xlu0 %3627
  %3629 = vrot.lane.b32.xlu0 %v442, 72
  %v3630 = vpop.permute.xlu0 %3629
  %3631 = vrot.lane.b32.xlu0 %v447, 72
  %v3632 = vpop.permute.xlu0 %3631
  %3633 = vrot.lane.b32.xlu0 %v452, 72
  %v3634 = vpop.permute.xlu0 %3633
  %3635 = vrot.lane.b32.xlu0 %v457, 72
  %v3636 = vpop.permute.xlu0 %3635
  %3637 = vrot.lane.b32.xlu0 %v462, 72
  %v3638 = vpop.permute.xlu0 %3637
  %v3639 = vsel %vm505, %v3608, 0
  %v3641 = vsel %vm505, %v3610, 0
  %v3643 = vsel %vm505, %v3612, 0
  %v3645 = vsel %vm505, %v3614, 0
  %v3647 = vsel %vm505, %v3616, 0
  %v3649 = vsel %vm505, %v3618, 0
  %v3651 = vsel %vm505, %v3620, 0
  %v3653 = vsel %vm505, %v3622, 0
  %v3655 = vsel %vm505, %v3624, 0
  %v3657 = vsel %vm505, %v3626, 0
  %v3659 = vsel %vm505, %v3628, 0
  %v3661 = vsel %vm505, %v3630, 0
  %v3663 = vsel %vm505, %v3632, 0
  %v3665 = vsel %vm505, %v3634, 0
  %v3667 = vsel %vm505, %v3636, 0
  %v3669 = vsel %vm505, %v3638, 0
  %3671 = vmatprep.subr.mxu0 0.0
  %3672 = vmatpush1.xpose.msra.mxu0 %v3655
  %3673 = vmatprep.subr.mxu0 0.0
  %3674 = vmatpush1.xpose.msra.mxu0 %v3657
  %3675 = vmatprep.subr.mxu0 0.0
  %3676 = vmatpush1.xpose.msra.mxu0 %v3659
  %3677 = vmatprep.subr.mxu0 0.0
  %3678 = vmatpush1.xpose.msra.mxu0 %v3661
  %3679 = vmatprep.subr.mxu0 0.0
  %3680 = vmatpush1.xpose.msra.mxu0 %v3663
  %3681 = vmatprep.subr.mxu0 0.0
  %3682 = vmatpush1.xpose.msra.mxu0 %v3665
  %3683 = vmatprep.subr.mxu0 0.0
  %3684 = vmatpush1.xpose.msra.mxu0 %v3667
  %3685 = vmatprep.subr.mxu0 0.0
  %3686 = vmatpush1.xpose.msra.mxu0 %v3669
  %3687 = vmatprep.subr.mxu0 0.0
  %3688 = vmatpush1.xpose.msra.mxu0 0.0
  %3689 = vmatprep.subr.mxu0 0.0
  %3690 = vmatpush1.xpose.msra.mxu0 0.0
  %3691 = vmatprep.subr.mxu0 0.0
  %3692 = vmatpush1.xpose.msra.mxu0 0.0
  %3693 = vmatprep.subr.mxu0 0.0
  %3694 = vmatpush1.xpose.msra.mxu0 0.0
  %3695 = vmatprep.subr.mxu0 0.0
  %3696 = vmatpush1.xpose.msra.mxu0 0.0
  %3697 = vmatprep.subr.mxu0 0.0
  %3698 = vmatpush1.xpose.msra.mxu0 0.0
  %3699 = vmatprep.subr.mxu0 0.0
  %3700 = vmatpush1.xpose.msra.mxu0 0.0
  %3701 = vmatprep.subr.mxu0 0.0
  %3702 = vmatpush1.xpose.msra.mxu0 0.0
  %3703 = vmatprep.subr.mxu0 0.0
  %3704 = vmatpush1.xpose.msra.mxu0 0.0
  %3705 = vmatprep.subr.mxu0 0.0
  %3706 = vmatpush1.xpose.msra.mxu0 0.0
  %3707 = vmatprep.subr.mxu0 0.0
  %3708 = vmatpush1.xpose.msra.mxu0 0.0
  %3709 = vmatprep.subr.mxu0 0.0
  %3710 = vmatpush1.xpose.msra.mxu0 0.0
  %3711 = vmatprep.subr.mxu0 0.0
  %3712 = vmatpush1.xpose.msra.mxu0 0.0
  %3713 = vmatprep.subr.mxu0 0.0
  %3714 = vmatpush1.xpose.msra.mxu0 0.0
  %3715 = vmatprep.subr.mxu0 0.0
  %3716 = vmatpush1.xpose.msra.mxu0 0.0
  %3717 = vmatprep.subr.mxu0 0.0
  %3718 = vmatpush1.xpose.msra.mxu0 0.0
  %3719 = vmatprep.subr.mxu0 0.0
  %3720 = vmatpush1.xpose.msra.mxu0 0.0
  %3721 = vmatprep.subr.mxu0 0.0
  %3722 = vmatpush1.xpose.msra.mxu0 0.0
  %3723 = vmatprep.subr.mxu0 0.0
  %3724 = vmatpush1.xpose.msra.mxu0 0.0
  %3725 = vmatprep.subr.mxu0 0.0
  %3726 = vmatpush1.xpose.msra.mxu0 0.0
  %3727 = vmatprep.subr.mxu0 0.0
  %3728 = vmatpush1.xpose.msra.mxu0 0.0
  %3729 = vmatprep.subr.mxu0 0.0
  %3730 = vmatpush1.xpose.msra.mxu0 0.0
  %3731 = vmatprep.subr.mxu0 0.0
  %3732 = vmatpush1.xpose.msra.mxu0 0.0
  %3733 = vmatprep.subr.mxu0 0.0
  %3734 = vmatpush1.xpose.msra.mxu0 0.0
  %3735 = vmatprep.mubr.f32.mxu0 0.0
  %3736 = vmatmul.mubr.f32.gmra.mrb[0].mxu0 %v3639
  %v3737 = vpop.f32.mrb[0].mxu0
  %v3738 = vadd.f32 %v3148, %v3737
  %v3739 = vpop.f32.mrb[0].mxu0
  %3740 = vmatprep.mubr.f32.mxu0 0.0
  %3741 = vmatmul.mubr.f32.gmra.mrb[0].mxu0 %v3641
  %v3742 = vpop.f32.mrb[0].mxu0
  %v3743 = vadd.f32 %v3149, %v3742
  %v3744 = vpop.f32.mrb[0].mxu0
  %3745 = vmatprep.mubr.f32.mxu0 0.0
  %3746 = vmatmul.mubr.f32.gmra.mrb[0].mxu0 %v3643
  %v3747 = vpop.f32.mrb[0].mxu0
  %v3748 = vadd.f32 %v3150, %v3747
  %v3749 = vpop.f32.mrb[0].mxu0
  %3750 = vmatprep.mubr.f32.mxu0 0.0
  %3751 = vmatmul.mubr.f32.gmra.mrb[0].mxu0 %v3645
  %v3752 = vpop.f32.mrb[0].mxu0
  %v3753 = vadd.f32 %v3151, %v3752
  %v3754 = vpop.f32.mrb[0].mxu0
  %3755 = vmatprep.mubr.f32.mxu0 0.0
  %3756 = vmatmul.mubr.f32.gmra.mrb[0].mxu0 %v3647
  %v3757 = vpop.f32.mrb[0].mxu0
  %v3758 = vadd.f32 %v3152, %v3757
  %v3759 = vpop.f32.mrb[0].mxu0
  %3760 = vmatprep.mubr.f32.mxu0 0.0
  %3761 = vmatmul.mubr.f32.gmra.mrb[0].mxu0 %v3649
  %v3762 = vpop.f32.mrb[0].mxu0
  %v3763 = vadd.f32 %v3153, %v3762
  %v3764 = vpop.f32.mrb[0].mxu0
  %3765 = vmatprep.mubr.f32.mxu0 0.0
  %3766 = vmatmul.mubr.f32.gmra.mrb[0].mxu0 %v3651
  %v3767 = vpop.f32.mrb[0].mxu0
  %v3768 = vadd.f32 %v3154, %v3767
  %v3769 = vpop.f32.mrb[0].mxu0
  %3770 = vmatprep.mubr.f32.mxu0 0.0
  %3771 = vmatmul.mubr.f32.gmra.mrb[0].mxu0 %v3653
  %v3772 = vpop.f32.mrb[0].mxu0
  %v3773 = vadd.f32 %v3155, %v3772
  %v3774 = vpop.f32.mrb[0].mxu0
  %3775 = vdwg.mxu0
  %v3776 = vsel %vm643, %v3738, -inf
  %3777 = vmax.xlane.f32.xlu0 %v3776
  %v3778 = vpop.xlane.xlu0 %3777
  %v3779 = vsel %vm643, %v3743, -inf
  %3780 = vmax.xlane.f32.xlu0 %v3779
  %v3781 = vpop.xlane.xlu0 %3780
  %v3782 = vsel %vm643, %v3748, -inf
  %3783 = vmax.xlane.f32.xlu0 %v3782
  %v3784 = vpop.xlane.xlu0 %3783
  %v3785 = vsel %vm643, %v3753, -inf
  %3786 = vmax.xlane.f32.xlu0 %v3785
  %v3787 = vpop.xlane.xlu0 %3786
  %v3788 = vsel %vm643, %v3758, -inf
  %3789 = vmax.xlane.f32.xlu0 %v3788
  %v3790 = vpop.xlane.xlu0 %3789
  %v3791 = vsel %vm643, %v3763, -inf
  %3792 = vmax.xlane.f32.xlu0 %v3791
  %v3793 = vpop.xlane.xlu0 %3792
  %v3794 = vsel %vm643, %v3768, -inf
  %3795 = vmax.xlane.f32.xlu0 %v3794
  %v3796 = vpop.xlane.xlu0 %3795
  %v3797 = vsel %vm643, %v3773, -inf
  %3798 = vmax.xlane.f32.xlu0 %v3797
  %v3799 = vpop.xlane.xlu0 %3798
  %v3800 = vsub.f32 %v3738, %v3778
  %v3801 = vsub.f32 %v3743, %v3781
  %v3802 = vsub.f32 %v3748, %v3784
  %v3803 = vsub.f32 %v3753, %v3787
  %v3804 = vsub.f32 %v3758, %v3790
  %v3805 = vsub.f32 %v3763, %v3793
  %v3806 = vsub.f32 %v3768, %v3796
  %v3807 = vsub.f32 %v3773, %v3799
  %v3808 = vmul.f32 %v3800, 1.442695
  %v3809 = vpow.pop %v3808
  %v3810 = vmul.f32 %v3801, 1.442695
  %v3811 = vpow.pop %v3810
  %v3812 = vmul.f32 %v3802, 1.442695
  %v3813 = vpow.pop %v3812
  %v3814 = vmul.f32 %v3803, 1.442695
  %v3815 = vpow.pop %v3814
  %v3816 = vmul.f32 %v3804, 1.442695
  %v3817 = vpow.pop %v3816
  %v3818 = vmul.f32 %v3805, 1.442695
  %v3819 = vpow.pop %v3818
  %v3820 = vmul.f32 %v3806, 1.442695
  %v3821 = vpow.pop %v3820
  %v3822 = vmul.f32 %v3807, 1.442695
  %v3823 = vpow.pop %v3822
  %v3824 = vsel %vm643, %v3809, 0.0
  %3825 = vadd.xlane.f32.xlu0 %v3824
  %v3826 = vpop.xlane.xlu0 %3825
  %v3827 = vsel %vm643, %v3811, 0.0
  %3828 = vadd.xlane.f32.xlu0 %v3827
  %v3829 = vpop.xlane.xlu0 %3828
  %v3830 = vsel %vm643, %v3813, 0.0
  %3831 = vadd.xlane.f32.xlu0 %v3830
  %v3832 = vpop.xlane.xlu0 %3831
  %v3833 = vsel %vm643, %v3815, 0.0
  %3834 = vadd.xlane.f32.xlu0 %v3833
  %v3835 = vpop.xlane.xlu0 %3834
  %v3836 = vsel %vm643, %v3817, 0.0
  %3837 = vadd.xlane.f32.xlu0 %v3836
  %v3838 = vpop.xlane.xlu0 %3837
  %v3839 = vsel %vm643, %v3819, 0.0
  %3840 = vadd.xlane.f32.xlu0 %v3839
  %v3841 = vpop.xlane.xlu0 %3840
  %v3842 = vsel %vm643, %v3821, 0.0
  %3843 = vadd.xlane.f32.xlu0 %v3842
  %v3844 = vpop.xlane.xlu0 %3843
  %v3845 = vsel %vm643, %v3823, 0.0
  %3846 = vadd.xlane.f32.xlu0 %v3845
  %v3847 = vpop.xlane.xlu0 %3846
  %v3848 = vrcp.pop %v3826
  %v3849 = vmul.f32 %v3809, %v3848
  %v3850 = vrcp.pop %v3829
  %v3851 = vmul.f32 %v3811, %v3850
  %v3852 = vrcp.pop %v3832
  %v3853 = vmul.f32 %v3813, %v3852
  %v3854 = vrcp.pop %v3835
  %v3855 = vmul.f32 %v3815, %v3854
  %v3856 = vrcp.pop %v3838
  %v3857 = vmul.f32 %v3817, %v3856
  %v3858 = vrcp.pop %v3841
  %v3859 = vmul.f32 %v3819, %v3858
  %v3860 = vrcp.pop %v3844
  %v3861 = vmul.f32 %v3821, %v3860
  %v3862 = vrcp.pop %v3847
  %v3863 = vmul.f32 %v3823, %v3862
  %3864 = vrot.lane.b32.xlu0 %v427, 40
  %v3865 = vpop.permute.xlu0 %3864
  %3866 = vrot.lane.b32.xlu0 %v432, 40
  %v3867 = vpop.permute.xlu0 %3866
  %3868 = vrot.lane.b32.xlu0 %v437, 40
  %v3869 = vpop.permute.xlu0 %3868
  %3870 = vrot.lane.b32.xlu0 %v442, 40
  %v3871 = vpop.permute.xlu0 %3870
  %3872 = vrot.lane.b32.xlu0 %v447, 40
  %v3873 = vpop.permute.xlu0 %3872
  %3874 = vrot.lane.b32.xlu0 %v452, 40
  %v3875 = vpop.permute.xlu0 %3874
  %3876 = vrot.lane.b32.xlu0 %v457, 40
  %v3877 = vpop.permute.xlu0 %3876
  %3878 = vrot.lane.b32.xlu0 %v462, 40
  %v3879 = vpop.permute.xlu0 %3878
  %v3889 = vsel %vm643, %v3849, 0
  %v3892 = vsel %vm643, %v3851, 0
  %v3895 = vsel %vm643, %v3853, 0
  %v3898 = vsel %vm643, %v3855, 0
  %v3901 = vsel %vm643, %v3857, 0
  %v3904 = vsel %vm643, %v3859, 0
  %v3907 = vsel %vm643, %v3861, 0
  %v3910 = vsel %vm643, %v3863, 0
  %3912 = vmatprep.subr.mxu0 0.0
  %3913 = vmatpush1.msra.mxu0 %v3865
  %3914 = vmatprep.subr.mxu0 0.0
  %3915 = vmatpush1.msra.mxu0 %v3867
  %3916 = vmatprep.subr.mxu0 0.0
  %3917 = vmatpush1.msra.mxu0 %v3869
  %3918 = vmatprep.subr.mxu0 0.0
  %3919 = vmatpush1.msra.mxu0 %v3871
  %3920 = vmatprep.subr.mxu0 0.0
  %3921 = vmatpush1.msra.mxu0 %v3873
  %3922 = vmatprep.subr.mxu0 0.0
  %3923 = vmatpush1.msra.mxu0 %v3875
  %3924 = vmatprep.subr.mxu0 0.0
  %3925 = vmatpush1.msra.mxu0 %v3877
  %3926 = vmatprep.subr.mxu0 0.0
  %3927 = vmatpush1.msra.mxu0 %v3879
  %3928 = vmatprep.subr.mxu0 0.0
  %3929 = vmatpush1.msra.mxu0 0.0
  %3930 = vmatprep.subr.mxu0 0.0
  %3931 = vmatpush1.msra.mxu0 0.0
  %3932 = vmatprep.subr.mxu0 0.0
  %3933 = vmatpush1.msra.mxu0 0.0
  %3934 = vmatprep.subr.mxu0 0.0
  %3935 = vmatpush1.msra.mxu0 0.0
  %3936 = vmatprep.subr.mxu0 0.0
  %3937 = vmatpush1.msra.mxu0 0.0
  %3938 = vmatprep.subr.mxu0 0.0
  %3939 = vmatpush1.msra.mxu0 0.0
  %3940 = vmatprep.subr.mxu0 0.0
  %3941 = vmatpush1.msra.mxu0 0.0
  %3942 = vmatprep.subr.mxu0 0.0
  %3943 = vmatpush1.msra.mxu0 0.0
  %3944 = vmatprep.subr.mxu0 0.0
  %3945 = vmatpush1.msra.mxu0 0.0
  %3946 = vmatprep.subr.mxu0 0.0
  %3947 = vmatpush1.msra.mxu0 0.0
  %3948 = vmatprep.subr.mxu0 0.0
  %3949 = vmatpush1.msra.mxu0 0.0
  %3950 = vmatprep.subr.mxu0 0.0
  %3951 = vmatpush1.msra.mxu0 0.0
  %3952 = vmatprep.subr.mxu0 0.0
  %3953 = vmatpush1.msra.mxu0 0.0
  %3954 = vmatprep.subr.mxu0 0.0
  %3955 = vmatpush1.msra.mxu0 0.0
  %3956 = vmatprep.subr.mxu0 0.0
  %3957 = vmatpush1.msra.mxu0 0.0
  %3958 = vmatprep.subr.mxu0 0.0
  %3959 = vmatpush1.msra.mxu0 0.0
  %3960 = vmatprep.subr.mxu0 0.0
  %3961 = vmatpush1.msra.mxu0 0.0
  %3962 = vmatprep.subr.mxu0 0.0
  %3963 = vmatpush1.msra.mxu0 0.0
  %3964 = vmatprep.subr.mxu0 0.0
  %3965 = vmatpush1.msra.mxu0 0.0
  %3966 = vmatprep.subr.mxu0 0.0
  %3967 = vmatpush1.msra.mxu0 0.0
  %3968 = vmatprep.subr.mxu0 0.0
  %3969 = vmatpush1.msra.mxu0 0.0
  %3970 = vmatprep.subr.mxu0 0.0
  %3971 = vmatpush1.msra.mxu0 0.0
  %3972 = vmatprep.subr.mxu0 0.0
  %3973 = vmatpush1.msra.mxu0 0.0
  %3974 = vmatprep.subr.mxu0 0.0
  %3975 = vmatpush1.msra.mxu0 0.0
  %3976 = vmatprep.mubr.f32.mxu0 0.0
  %3977 = vmatmul.mubr.f32.gmra.mrb[0].mxu0 %v3889
  %v3978 = vpop.f32.mrb[0].mxu0
  %v3979 = vadd.f32 0.0, %v3978
  %v3980 = vpop.f32.mrb[0].mxu0
  %3981 = vmatprep.mubr.f32.mxu0 0.0
  %3982 = vmatmul.mubr.f32.gmra.mrb[0].mxu0 %v3892
  %v3983 = vpop.f32.mrb[0].mxu0
  %v3984 = vadd.f32 0.0, %v3983
  %v3985 = vpop.f32.mrb[0].mxu0
  %3986 = vmatprep.mubr.f32.mxu0 0.0
  %3987 = vmatmul.mubr.f32.gmra.mrb[0].mxu0 %v3895
  %v3988 = vpop.f32.mrb[0].mxu0
  %v3989 = vadd.f32 0.0, %v3988
  %v3990 = vpop.f32.mrb[0].mxu0
  %3991 = vmatprep.mubr.f32.mxu0 0.0
  %3992 = vmatmul.mubr.f32.gmra.mrb[0].mxu0 %v3898
  %v3993 = vpop.f32.mrb[0].mxu0
  %v3994 = vadd.f32 0.0, %v3993
  %v3995 = vpop.f32.mrb[0].mxu0
  %3996 = vmatprep.mubr.f32.mxu0 0.0
  %3997 = vmatmul.mubr.f32.gmra.mrb[0].mxu0 %v3901
  %v3998 = vpop.f32.mrb[0].mxu0
  %v3999 = vadd.f32 0.0, %v3998
  %v4000 = vpop.f32.mrb[0].mxu0
  %4001 = vmatprep.mubr.f32.mxu0 0.0
  %4002 = vmatmul.mubr.f32.gmra.mrb[0].mxu0 %v3904
  %v4003 = vpop.f32.mrb[0].mxu0
  %v4004 = vadd.f32 0.0, %v4003
  %v4005 = vpop.f32.mrb[0].mxu0
  %4006 = vmatprep.mubr.f32.mxu0 0.0
  %4007 = vmatmul.mubr.f32.gmra.mrb[0].mxu0 %v3907
  %v4008 = vpop.f32.mrb[0].mxu0
  %v4009 = vadd.f32 0.0, %v4008
  %v4010 = vpop.f32.mrb[0].mxu0
  %4011 = vmatprep.mubr.f32.mxu0 0.0
  %4012 = vmatmul.mubr.f32.gmra.mrb[0].mxu0 %v3910
  %v4013 = vpop.f32.mrb[0].mxu0
  %v4014 = vadd.f32 0.0, %v4013
  %v4015 = vpop.f32.mrb[0].mxu0
  %4016 = vdwg.mxu0
  %4025 = vrot.lane.b32.xlu0 %v3979, 24
  %v4026 = vpop.permute.xlu0 %4025
  %4027 = vrot.lane.b32.xlu0 %v3984, 24
  %v4028 = vpop.permute.xlu0 %4027
  %4029 = vrot.lane.b32.xlu0 %v3989, 24
  %v4030 = vpop.permute.xlu0 %4029
  %4031 = vrot.lane.b32.xlu0 %v3994, 24
  %v4032 = vpop.permute.xlu0 %4031
  %4033 = vrot.lane.b32.xlu0 %v3999, 24
  %v4034 = vpop.permute.xlu0 %4033
  %4035 = vrot.lane.b32.xlu0 %v4004, 24
  %v4036 = vpop.permute.xlu0 %4035
  %4037 = vrot.lane.b32.xlu0 %v4009, 24
  %v4038 = vpop.permute.xlu0 %4037
  %4039 = vrot.lane.b32.xlu0 %v4014, 24
  %v4040 = vpop.permute.xlu0 %4039
  %4049 = vst.msk [vmem:[#allocation2 + $0x40] sm:$0xff] %vm3598, %v4026
  %4050 = vst.msk [vmem:[#allocation2 + $0x48] sm:$0xff] %vm3598, %v4028
  %4051 = vst.msk [vmem:[#allocation2 + $0x50] sm:$0xff] %vm3598, %v4030
  %4052 = vst.msk [vmem:[#allocation2 + $0x58] sm:$0xff] %vm3598, %v4032
  %4053 = vst.msk [vmem:[#allocation2 + $0x60] sm:$0xff] %vm3598, %v4034
  %4054 = vst.msk [vmem:[#allocation2 + $0x68] sm:$0xff] %vm3598, %v4036
  %4055 = vst.msk [vmem:[#allocation2 + $0x70] sm:$0xff] %vm3598, %v4038
  %4056 = vst.msk [vmem:[#allocation2 + $0x78] sm:$0xff] %vm3598, %v4040
  %v4057 = vld [vmem:[#allocation2] sm:$0xff]
  %v4058 = vld [vmem:[#allocation2 + $0x8] sm:$0xff]
  %v4059 = vld [vmem:[#allocation2 + $0x10] sm:$0xff]
  %v4060 = vld [vmem:[#allocation2 + $0x18] sm:$0xff]
  %v4061 = vld [vmem:[#allocation2 + $0x20] sm:$0xff]
  %v4062 = vld [vmem:[#allocation2 + $0x28] sm:$0xff]
  %v4063 = vld [vmem:[#allocation2 + $0x30] sm:$0xff]
  %v4064 = vld [vmem:[#allocation2 + $0x38] sm:$0xff]
  %v4065 = vld [vmem:[#allocation2 + $0x40] sm:$0xff]
  %v4066 = vld [vmem:[#allocation2 + $0x48] sm:$0xff]
  %v4067 = vld [vmem:[#allocation2 + $0x50] sm:$0xff]
  %v4068 = vld [vmem:[#allocation2 + $0x58] sm:$0xff]
  %v4069 = vld [vmem:[#allocation2 + $0x60] sm:$0xff]
  %v4070 = vld [vmem:[#allocation2 + $0x68] sm:$0xff]
  %v4071 = vld [vmem:[#allocation2 + $0x70] sm:$0xff]
  %v4072 = vld [vmem:[#allocation2 + $0x78] sm:$0xff]
  %v4073 = vld [vmem:[%s4] sm:$0xff]
  %v4074 = vld [vmem:[%s4 + $0x8] sm:$0xff]
  %v4075 = vld [vmem:[%s4 + $0x10] sm:$0xff]
  %v4076 = vld [vmem:[%s4 + $0x18] sm:$0xff]
  %v4077 = vld [vmem:[%s5] sm:$0x1]
  %v4079 = vlaneseq
  %v4080 = vshrl.u32 %v4079, 7
  %v4081 = vsub.s32 0, %v4080
  %v4082 = vrot.slane %v4077, %v4081
  %v4085 = vsel %vm51, %v4057, 0
  %v4088 = vsel %vm51, %v4058, 0
  %v4091 = vsel %vm51, %v4059, 0
  %v4094 = vsel %vm51, %v4060, 0
  %v4097 = vsel %vm51, %v4061, 0
  %v4100 = vsel %vm51, %v4062, 0
  %v4103 = vsel %vm51, %v4063, 0
  %v4106 = vsel %vm51, %v4064, 0
  %v4109 = vsel %vm51, %v4065, 0
  %v4112 = vsel %vm51, %v4066, 0
  %v4115 = vsel %vm51, %v4067, 0
  %v4118 = vsel %vm51, %v4068, 0
  %v4121 = vsel %vm51, %v4069, 0
  %v4124 = vsel %vm51, %v4070, 0
  %v4127 = vsel %vm51, %v4071, 0
  %v4130 = vsel %vm51, %v4072, 0
  %4132 = vmatprep.subr.mxu0 0.0
  %4133 = vmatpush1.msra.mxu0 %v4073
  %4134 = vmatprep.subr.mxu0 0.0
  %4135 = vmatpush1.msra.mxu0 %v4074
  %4136 = vmatprep.subr.mxu0 0.0
  %4137 = vmatpush1.msra.mxu0 %v4075
  %4138 = vmatprep.subr.mxu0 0.0
  %4139 = vmatpush1.msra.mxu0 %v4076
  %4140 = vmatprep.subr.mxu0 0.0
  %4141 = vmatpush1.msra.mxu0 0.0
  %4142 = vmatprep.subr.mxu0 0.0
  %4143 = vmatpush1.msra.mxu0 0.0
  %4144 = vmatprep.subr.mxu0 0.0
  %4145 = vmatpush1.msra.mxu0 0.0
  %4146 = vmatprep.subr.mxu0 0.0
  %4147 = vmatpush1.msra.mxu0 0.0
  %4148 = vmatprep.subr.mxu0 0.0
  %4149 = vmatpush1.msra.mxu0 0.0
  %4150 = vmatprep.subr.mxu0 0.0
  %4151 = vmatpush1.msra.mxu0 0.0
  %4152 = vmatprep.subr.mxu0 0.0
  %4153 = vmatpush1.msra.mxu0 0.0
  %4154 = vmatprep.subr.mxu0 0.0
  %4155 = vmatpush1.msra.mxu0 0.0
  %4156 = vmatprep.subr.mxu0 0.0
  %4157 = vmatpush1.msra.mxu0 0.0
  %4158 = vmatprep.subr.mxu0 0.0
  %4159 = vmatpush1.msra.mxu0 0.0
  %4160 = vmatprep.subr.mxu0 0.0
  %4161 = vmatpush1.msra.mxu0 0.0
  %4162 = vmatprep.subr.mxu0 0.0
  %4163 = vmatpush1.msra.mxu0 0.0
  %4164 = vmatprep.subr.mxu0 0.0
  %4165 = vmatpush1.msra.mxu0 0.0
  %4166 = vmatprep.subr.mxu0 0.0
  %4167 = vmatpush1.msra.mxu0 0.0
  %4168 = vmatprep.subr.mxu0 0.0
  %4169 = vmatpush1.msra.mxu0 0.0
  %4170 = vmatprep.subr.mxu0 0.0
  %4171 = vmatpush1.msra.mxu0 0.0
  %4172 = vmatprep.subr.mxu0 0.0
  %4173 = vmatpush1.msra.mxu0 0.0
  %4174 = vmatprep.subr.mxu0 0.0
  %4175 = vmatpush1.msra.mxu0 0.0
  %4176 = vmatprep.subr.mxu0 0.0
  %4177 = vmatpush1.msra.mxu0 0.0
  %4178 = vmatprep.subr.mxu0 0.0
  %4179 = vmatpush1.msra.mxu0 0.0
  %4180 = vmatprep.subr.mxu0 0.0
  %4181 = vmatpush1.msra.mxu0 0.0
  %4182 = vmatprep.subr.mxu0 0.0
  %4183 = vmatpush1.msra.mxu0 0.0
  %4184 = vmatprep.subr.mxu0 0.0
  %4185 = vmatpush1.msra.mxu0 0.0
  %4186 = vmatprep.subr.mxu0 0.0
  %4187 = vmatpush1.msra.mxu0 0.0
  %4188 = vmatprep.subr.mxu0 0.0
  %4189 = vmatpush1.msra.mxu0 0.0
  %4190 = vmatprep.subr.mxu0 0.0
  %4191 = vmatpush1.msra.mxu0 0.0
  %4192 = vmatprep.subr.mxu0 0.0
  %4193 = vmatpush1.msra.mxu0 0.0
  %4194 = vmatprep.subr.mxu0 0.0
  %4195 = vmatpush1.msra.mxu0 0.0
  %4196 = vmatprep.mubr.f32.mxu0 0.0
  %4197 = vmatmul.mubr.f32.gmra.mrb[0].mxu0 %v4085
  %v4198 = vpop.f32.mrb[0].mxu0
  %v4199 = vadd.f32 %v4082, %v4198
  %v4200 = vpop.f32.mrb[0].mxu0
  %4201 = vmatprep.mubr.f32.mxu0 0.0
  %4202 = vmatmul.mubr.f32.gmra.mrb[0].mxu0 %v4088
  %v4203 = vpop.f32.mrb[0].mxu0
  %v4204 = vadd.f32 %v4082, %v4203
  %v4205 = vpop.f32.mrb[0].mxu0
  %4206 = vmatprep.mubr.f32.mxu0 0.0
  %4207 = vmatmul.mubr.f32.gmra.mrb[0].mxu0 %v4091
  %v4208 = vpop.f32.mrb[0].mxu0
  %v4209 = vadd.f32 %v4082, %v4208
  %v4210 = vpop.f32.mrb[0].mxu0
  %4211 = vmatprep.mubr.f32.mxu0 0.0
  %4212 = vmatmul.mubr.f32.gmra.mrb[0].mxu0 %v4094
  %v4213 = vpop.f32.mrb[0].mxu0
  %v4214 = vadd.f32 %v4082, %v4213
  %v4215 = vpop.f32.mrb[0].mxu0
  %4216 = vmatprep.mubr.f32.mxu0 0.0
  %4217 = vmatmul.mubr.f32.gmra.mrb[0].mxu0 %v4097
  %v4218 = vpop.f32.mrb[0].mxu0
  %v4219 = vadd.f32 %v4082, %v4218
  %v4220 = vpop.f32.mrb[0].mxu0
  %4221 = vmatprep.mubr.f32.mxu0 0.0
  %4222 = vmatmul.mubr.f32.gmra.mrb[0].mxu0 %v4100
  %v4223 = vpop.f32.mrb[0].mxu0
  %v4224 = vadd.f32 %v4082, %v4223
  %v4225 = vpop.f32.mrb[0].mxu0
  %4226 = vmatprep.mubr.f32.mxu0 0.0
  %4227 = vmatmul.mubr.f32.gmra.mrb[0].mxu0 %v4103
  %v4228 = vpop.f32.mrb[0].mxu0
  %v4229 = vadd.f32 %v4082, %v4228
  %v4230 = vpop.f32.mrb[0].mxu0
  %4231 = vmatprep.mubr.f32.mxu0 0.0
  %4232 = vmatmul.mubr.f32.gmra.mrb[0].mxu0 %v4106
  %v4233 = vpop.f32.mrb[0].mxu0
  %v4234 = vadd.f32 %v4082, %v4233
  %v4235 = vpop.f32.mrb[0].mxu0
  %4236 = vmatprep.mubr.f32.mxu0 0.0
  %4237 = vmatmul.mubr.f32.gmra.mrb[0].mxu0 %v4109
  %v4238 = vpop.f32.mrb[0].mxu0
  %v4239 = vadd.f32 %v4082, %v4238
  %v4240 = vpop.f32.mrb[0].mxu0
  %4241 = vmatprep.mubr.f32.mxu0 0.0
  %4242 = vmatmul.mubr.f32.gmra.mrb[0].mxu0 %v4112
  %v4243 = vpop.f32.mrb[0].mxu0
  %v4244 = vadd.f32 %v4082, %v4243
  %v4245 = vpop.f32.mrb[0].mxu0
  %4246 = vmatprep.mubr.f32.mxu0 0.0
  %4247 = vmatmul.mubr.f32.gmra.mrb[0].mxu0 %v4115
  %v4248 = vpop.f32.mrb[0].mxu0
  %v4249 = vadd.f32 %v4082, %v4248
  %v4250 = vpop.f32.mrb[0].mxu0
  %4251 = vmatprep.mubr.f32.mxu0 0.0
  %4252 = vmatmul.mubr.f32.gmra.mrb[0].mxu0 %v4118
  %v4253 = vpop.f32.mrb[0].mxu0
  %v4254 = vadd.f32 %v4082, %v4253
  %v4255 = vpop.f32.mrb[0].mxu0
  %4256 = vmatprep.mubr.f32.mxu0 0.0
  %4257 = vmatmul.mubr.f32.gmra.mrb[0].mxu0 %v4121
  %v4258 = vpop.f32.mrb[0].mxu0
  %v4259 = vadd.f32 %v4082, %v4258
  %v4260 = vpop.f32.mrb[0].mxu0
  %4261 = vmatprep.mubr.f32.mxu0 0.0
  %4262 = vmatmul.mubr.f32.gmra.mrb[0].mxu0 %v4124
  %v4263 = vpop.f32.mrb[0].mxu0
  %v4264 = vadd.f32 %v4082, %v4263
  %v4265 = vpop.f32.mrb[0].mxu0
  %4266 = vmatprep.mubr.f32.mxu0 0.0
  %4267 = vmatmul.mubr.f32.gmra.mrb[0].mxu0 %v4127
  %v4268 = vpop.f32.mrb[0].mxu0
  %v4269 = vadd.f32 %v4082, %v4268
  %v4270 = vpop.f32.mrb[0].mxu0
  %4271 = vmatprep.mubr.f32.mxu0 0.0
  %4272 = vmatmul.mubr.f32.gmra.mrb[0].mxu0 %v4130
  %v4273 = vpop.f32.mrb[0].mxu0
  %v4274 = vadd.f32 %v4082, %v4273
  %v4275 = vpop.f32.mrb[0].mxu0
  %4276 = vdwg.mxu0
  %v4277 = vadd.f32 %v35, %v4199
  %v4278 = vadd.f32 %v36, %v4204
  %v4279 = vadd.f32 %v37, %v4209
  %v4280 = vadd.f32 %v38, %v4214
  %v4281 = vadd.f32 %v39, %v4219
  %v4282 = vadd.f32 %v40, %v4224
  %v4283 = vadd.f32 %v41, %v4229
  %v4284 = vadd.f32 %v42, %v4234
  %v4285 = vadd.f32 %v43, %v4239
  %v4286 = vadd.f32 %v44, %v4244
  %v4287 = vadd.f32 %v45, %v4249
  %v4288 = vadd.f32 %v46, %v4254
  %v4289 = vadd.f32 %v47, %v4259
  %v4290 = vadd.f32 %v48, %v4264
  %v4291 = vadd.f32 %v49, %v4269
  %v4292 = vadd.f32 %v50, %v4274
  %v4293 = vsel %vm51, %v4277, 0.0
  %4294 = vadd.xlane.f32.xlu0 %v4293
  %v4295 = vpop.xlane.xlu0 %4294
  %v4296 = vsel %vm51, %v4278, 0.0
  %4297 = vadd.xlane.f32.xlu0 %v4296
  %v4298 = vpop.xlane.xlu0 %4297
  %v4299 = vsel %vm51, %v4279, 0.0
  %4300 = vadd.xlane.f32.xlu0 %v4299
  %v4301 = vpop.xlane.xlu0 %4300
  %v4302 = vsel %vm51, %v4280, 0.0
  %4303 = vadd.xlane.f32.xlu0 %v4302
  %v4304 = vpop.xlane.xlu0 %4303
  %v4305 = vsel %vm51, %v4281, 0.0
  %4306 = vadd.xlane.f32.xlu0 %v4305
  %v4307 = vpop.xlane.xlu0 %4306
  %v4308 = vsel %vm51, %v4282, 0.0
  %4309 = vadd.xlane.f32.xlu0 %v4308
  %v4310 = vpop.xlane.xlu0 %4309
  %v4311 = vsel %vm51, %v4283, 0.0
  %4312 = vadd.xlane.f32.xlu0 %v4311
  %v4313 = vpop.xlane.xlu0 %4312
  %v4314 = vsel %vm51, %v4284, 0.0
  %4315 = vadd.xlane.f32.xlu0 %v4314
  %v4316 = vpop.xlane.xlu0 %4315
  %v4317 = vsel %vm51, %v4285, 0.0
  %4318 = vadd.xlane.f32.xlu0 %v4317
  %v4319 = vpop.xlane.xlu0 %4318
  %v4320 = vsel %vm51, %v4286, 0.0
  %4321 = vadd.xlane.f32.xlu0 %v4320
  %v4322 = vpop.xlane.xlu0 %4321
  %v4323 = vsel %vm51, %v4287, 0.0
  %4324 = vadd.xlane.f32.xlu0 %v4323
  %v4325 = vpop.xlane.xlu0 %4324
  %v4326 = vsel %vm51, %v4288, 0.0
  %4327 = vadd.xlane.f32.xlu0 %v4326
  %v4328 = vpop.xlane.xlu0 %4327
  %v4329 = vsel %vm51, %v4289, 0.0
  %4330 = vadd.xlane.f32.xlu0 %v4329
  %v4331 = vpop.xlane.xlu0 %4330
  %v4332 = vsel %vm51, %v4290, 0.0
  %4333 = vadd.xlane.f32.xlu0 %v4332
  %v4334 = vpop.xlane.xlu0 %4333
  %v4335 = vsel %vm51, %v4291, 0.0
  %4336 = vadd.xlane.f32.xlu0 %v4335
  %v4337 = vpop.xlane.xlu0 %4336
  %v4338 = vsel %vm51, %v4292, 0.0
  %4339 = vadd.xlane.f32.xlu0 %v4338
  %v4340 = vpop.xlane.xlu0 %4339
  %v4341 = vmul.f32 %v4295, %v100
  %v4342 = vmul.f32 %v4298, %v100
  %v4343 = vmul.f32 %v4301, %v100
  %v4344 = vmul.f32 %v4304, %v100
  %v4345 = vmul.f32 %v4307, %v100
  %v4346 = vmul.f32 %v4310, %v100
  %v4347 = vmul.f32 %v4313, %v100
  %v4348 = vmul.f32 %v4316, %v100
  %v4349 = vmul.f32 %v4319, %v100
  %v4350 = vmul.f32 %v4322, %v100
  %v4351 = vmul.f32 %v4325, %v100
  %v4352 = vmul.f32 %v4328, %v100
  %v4353 = vmul.f32 %v4331, %v100
  %v4354 = vmul.f32 %v4334, %v100
  %v4355 = vmul.f32 %v4337, %v100
  %v4356 = vmul.f32 %v4340, %v100
  %v4357 = vsub.f32 %v4277, %v4341
  %v4358 = vsub.f32 %v4278, %v4342
  %v4359 = vsub.f32 %v4279, %v4343
  %v4360 = vsub.f32 %v4280, %v4344
  %v4361 = vsub.f32 %v4281, %v4345
  %v4362 = vsub.f32 %v4282, %v4346
  %v4363 = vsub.f32 %v4283, %v4347
  %v4364 = vsub.f32 %v4284, %v4348
  %v4365 = vsub.f32 %v4285, %v4349
  %v4366 = vsub.f32 %v4286, %v4350
  %v4367 = vsub.f32 %v4287, %v4351
  %v4368 = vsub.f32 %v4288, %v4352
  %v4369 = vsub.f32 %v4289, %v4353
  %v4370 = vsub.f32 %v4290, %v4354
  %v4371 = vsub.f32 %v4291, %v4355
  %v4372 = vsub.f32 %v4292, %v4356
  %v4373 = vmul.f32 %v4357, %v4357
  %v4374 = vmul.f32 %v4358, %v4358
  %v4375 = vmul.f32 %v4359, %v4359
  %v4376 = vmul.f32 %v4360, %v4360
  %v4377 = vmul.f32 %v4361, %v4361
  %v4378 = vmul.f32 %v4362, %v4362
  %v4379 = vmul.f32 %v4363, %v4363
  %v4380 = vmul.f32 %v4364, %v4364
  %v4381 = vmul.f32 %v4365, %v4365
  %v4382 = vmul.f32 %v4366, %v4366
  %v4383 = vmul.f32 %v4367, %v4367
  %v4384 = vmul.f32 %v4368, %v4368
  %v4385 = vmul.f32 %v4369, %v4369
  %v4386 = vmul.f32 %v4370, %v4370
  %v4387 = vmul.f32 %v4371, %v4371
  %v4388 = vmul.f32 %v4372, %v4372
  %v4389 = vsel %vm51, %v4373, 0.0
  %4390 = vadd.xlane.f32.xlu0 %v4389
  %v4391 = vpop.xlane.xlu0 %4390
  %v4392 = vsel %vm51, %v4374, 0.0
  %4393 = vadd.xlane.f32.xlu0 %v4392
  %v4394 = vpop.xlane.xlu0 %4393
  %v4395 = vsel %vm51, %v4375, 0.0
  %4396 = vadd.xlane.f32.xlu0 %v4395
  %v4397 = vpop.xlane.xlu0 %4396
  %v4398 = vsel %vm51, %v4376, 0.0
  %4399 = vadd.xlane.f32.xlu0 %v4398
  %v4400 = vpop.xlane.xlu0 %4399
  %v4401 = vsel %vm51, %v4377, 0.0
  %4402 = vadd.xlane.f32.xlu0 %v4401
  %v4403 = vpop.xlane.xlu0 %4402
  %v4404 = vsel %vm51, %v4378, 0.0
  %4405 = vadd.xlane.f32.xlu0 %v4404
  %v4406 = vpop.xlane.xlu0 %4405
  %v4407 = vsel %vm51, %v4379, 0.0
  %4408 = vadd.xlane.f32.xlu0 %v4407
  %v4409 = vpop.xlane.xlu0 %4408
  %v4410 = vsel %vm51, %v4380, 0.0
  %4411 = vadd.xlane.f32.xlu0 %v4410
  %v4412 = vpop.xlane.xlu0 %4411
  %v4413 = vsel %vm51, %v4381, 0.0
  %4414 = vadd.xlane.f32.xlu0 %v4413
  %v4415 = vpop.xlane.xlu0 %4414
  %v4416 = vsel %vm51, %v4382, 0.0
  %4417 = vadd.xlane.f32.xlu0 %v4416
  %v4418 = vpop.xlane.xlu0 %4417
  %v4419 = vsel %vm51, %v4383, 0.0
  %4420 = vadd.xlane.f32.xlu0 %v4419
  %v4421 = vpop.xlane.xlu0 %4420
  %v4422 = vsel %vm51, %v4384, 0.0
  %4423 = vadd.xlane.f32.xlu0 %v4422
  %v4424 = vpop.xlane.xlu0 %4423
  %v4425 = vsel %vm51, %v4385, 0.0
  %4426 = vadd.xlane.f32.xlu0 %v4425
  %v4427 = vpop.xlane.xlu0 %4426
  %v4428 = vsel %vm51, %v4386, 0.0
  %4429 = vadd.xlane.f32.xlu0 %v4428
  %v4430 = vpop.xlane.xlu0 %4429
  %v4431 = vsel %vm51, %v4387, 0.0
  %4432 = vadd.xlane.f32.xlu0 %v4431
  %v4433 = vpop.xlane.xlu0 %4432
  %v4434 = vsel %vm51, %v4388, 0.0
  %4435 = vadd.xlane.f32.xlu0 %v4434
  %v4436 = vpop.xlane.xlu0 %4435
  %v4437 = vmul.f32 %v4391, %v100
  %v4438 = vmul.f32 %v4394, %v100
  %v4439 = vmul.f32 %v4397, %v100
  %v4440 = vmul.f32 %v4400, %v100
  %v4441 = vmul.f32 %v4403, %v100
  %v4442 = vmul.f32 %v4406, %v100
  %v4443 = vmul.f32 %v4409, %v100
  %v4444 = vmul.f32 %v4412, %v100
  %v4445 = vmul.f32 %v4415, %v100
  %v4446 = vmul.f32 %v4418, %v100
  %v4447 = vmul.f32 %v4421, %v100
  %v4448 = vmul.f32 %v4424, %v100
  %v4449 = vmul.f32 %v4427, %v100
  %v4450 = vmul.f32 %v4430, %v100
  %v4451 = vmul.f32 %v4433, %v100
  %v4452 = vmul.f32 %v4436, %v100
  %v4453 = vadd.f32 %v4437, 1e-05
  %v4454 = vadd.f32 %v4438, 1e-05
  %v4455 = vadd.f32 %v4439, 1e-05
  %v4456 = vadd.f32 %v4440, 1e-05
  %v4457 = vadd.f32 %v4441, 1e-05
  %v4458 = vadd.f32 %v4442, 1e-05
  %v4459 = vadd.f32 %v4443, 1e-05
  %v4460 = vadd.f32 %v4444, 1e-05
  %v4461 = vadd.f32 %v4445, 1e-05
  %v4462 = vadd.f32 %v4446, 1e-05
  %v4463 = vadd.f32 %v4447, 1e-05
  %v4464 = vadd.f32 %v4448, 1e-05
  %v4465 = vadd.f32 %v4449, 1e-05
  %v4466 = vadd.f32 %v4450, 1e-05
  %v4467 = vadd.f32 %v4451, 1e-05
  %v4468 = vadd.f32 %v4452, 1e-05
  %v4469 = vrsqrt.pop %v4453
  %v4470 = vrsqrt.pop %v4454
  %v4471 = vrsqrt.pop %v4455
  %v4472 = vrsqrt.pop %v4456
  %v4473 = vrsqrt.pop %v4457
  %v4474 = vrsqrt.pop %v4458
  %v4475 = vrsqrt.pop %v4459
  %v4476 = vrsqrt.pop %v4460
  %v4477 = vrsqrt.pop %v4461
  %v4478 = vrsqrt.pop %v4462
  %v4479 = vrsqrt.pop %v4463
  %v4480 = vrsqrt.pop %v4464
  %v4481 = vrsqrt.pop %v4465
  %v4482 = vrsqrt.pop %v4466
  %v4483 = vrsqrt.pop %v4467
  %v4484 = vrsqrt.pop %v4468
  %v4485 = vmul.f32 %v4357, %v4469
  %v4486 = vmul.f32 %v4358, %v4470
  %v4487 = vmul.f32 %v4359, %v4471
  %v4488 = vmul.f32 %v4360, %v4472
  %v4489 = vmul.f32 %v4361, %v4473
  %v4490 = vmul.f32 %v4362, %v4474
  %v4491 = vmul.f32 %v4363, %v4475
  %v4492 = vmul.f32 %v4364, %v4476
  %v4493 = vmul.f32 %v4365, %v4477
  %v4494 = vmul.f32 %v4366, %v4478
  %v4495 = vmul.f32 %v4367, %v4479
  %v4496 = vmul.f32 %v4368, %v4480
  %v4497 = vmul.f32 %v4369, %v4481
  %v4498 = vmul.f32 %v4370, %v4482
  %v4499 = vmul.f32 %v4371, %v4483
  %v4500 = vmul.f32 %v4372, %v4484
  %v4501 = vld [vmem:[%s6] sm:$0xff]
  %v4502 = vld [vmem:[%s6 + $0x8] sm:$0xff]
  %v4503 = vld [vmem:[%s6 + $0x10] sm:$0xff]
  %v4504 = vld [vmem:[%s6 + $0x18] sm:$0xff]
  %v4505 = vld [vmem:[%s7] sm:$0x1]
  %v4507 = vlaneseq
  %v4508 = vshrl.u32 %v4507, 7
  %v4509 = vsub.s32 0, %v4508
  %v4510 = vrot.slane %v4505, %v4509
  %v4513 = vsel %vm51, %v4485, 0
  %v4516 = vsel %vm51, %v4486, 0
  %v4519 = vsel %vm51, %v4487, 0
  %v4522 = vsel %vm51, %v4488, 0
  %v4525 = vsel %vm51, %v4489, 0
  %v4528 = vsel %vm51, %v4490, 0
  %v4531 = vsel %vm51, %v4491, 0
  %v4534 = vsel %vm51, %v4492, 0
  %v4537 = vsel %vm51, %v4493, 0
  %v4540 = vsel %vm51, %v4494, 0
  %v4543 = vsel %vm51, %v4495, 0
  %v4546 = vsel %vm51, %v4496, 0
  %v4549 = vsel %vm51, %v4497, 0
  %v4552 = vsel %vm51, %v4498, 0
  %v4555 = vsel %vm51, %v4499, 0
  %v4558 = vsel %vm51, %v4500, 0
  %4560 = vmatprep.subr.mxu0 0.0
  %4561 = vmatpush1.msra.mxu0 %v4501
  %4562 = vmatprep.subr.mxu0 0.0
  %4563 = vmatpush1.msra.mxu0 %v4502
  %4564 = vmatprep.subr.mxu0 0.0
  %4565 = vmatpush1.msra.mxu0 %v4503
  %4566 = vmatprep.subr.mxu0 0.0
  %4567 = vmatpush1.msra.mxu0 %v4504
  %4568 = vmatprep.subr.mxu0 0.0
  %4569 = vmatpush1.msra.mxu0 0.0
  %4570 = vmatprep.subr.mxu0 0.0
  %4571 = vmatpush1.msra.mxu0 0.0
  %4572 = vmatprep.subr.mxu0 0.0
  %4573 = vmatpush1.msra.mxu0 0.0
  %4574 = vmatprep.subr.mxu0 0.0
  %4575 = vmatpush1.msra.mxu0 0.0
  %4576 = vmatprep.subr.mxu0 0.0
  %4577 = vmatpush1.msra.mxu0 0.0
  %4578 = vmatprep.subr.mxu0 0.0
  %4579 = vmatpush1.msra.mxu0 0.0
  %4580 = vmatprep.subr.mxu0 0.0
  %4581 = vmatpush1.msra.mxu0 0.0
  %4582 = vmatprep.subr.mxu0 0.0
  %4583 = vmatpush1.msra.mxu0 0.0
  %4584 = vmatprep.subr.mxu0 0.0
  %4585 = vmatpush1.msra.mxu0 0.0
  %4586 = vmatprep.subr.mxu0 0.0
  %4587 = vmatpush1.msra.mxu0 0.0
  %4588 = vmatprep.subr.mxu0 0.0
  %4589 = vmatpush1.msra.mxu0 0.0
  %4590 = vmatprep.subr.mxu0 0.0
  %4591 = vmatpush1.msra.mxu0 0.0
  %4592 = vmatprep.subr.mxu0 0.0
  %4593 = vmatpush1.msra.mxu0 0.0
  %4594 = vmatprep.subr.mxu0 0.0
  %4595 = vmatpush1.msra.mxu0 0.0
  %4596 = vmatprep.subr.mxu0 0.0
  %4597 = vmatpush1.msra.mxu0 0.0
  %4598 = vmatprep.subr.mxu0 0.0
  %4599 = vmatpush1.msra.mxu0 0.0
  %4600 = vmatprep.subr.mxu0 0.0
  %4601 = vmatpush1.msra.mxu0 0.0
  %4602 = vmatprep.subr.mxu0 0.0
  %4603 = vmatpush1.msra.mxu0 0.0
  %4604 = vmatprep.subr.mxu0 0.0
  %4605 = vmatpush1.msra.mxu0 0.0
  %4606 = vmatprep.subr.mxu0 0.0
  %4607 = vmatpush1.msra.mxu0 0.0
  %4608 = vmatprep.subr.mxu0 0.0
  %4609 = vmatpush1.msra.mxu0 0.0
  %4610 = vmatprep.subr.mxu0 0.0
  %4611 = vmatpush1.msra.mxu0 0.0
  %4612 = vmatprep.subr.mxu0 0.0
  %4613 = vmatpush1.msra.mxu0 0.0
  %4614 = vmatprep.subr.mxu0 0.0
  %4615 = vmatpush1.msra.mxu0 0.0
  %4616 = vmatprep.subr.mxu0 0.0
  %4617 = vmatpush1.msra.mxu0 0.0
  %4618 = vmatprep.subr.mxu0 0.0
  %4619 = vmatpush1.msra.mxu0 0.0
  %4620 = vmatprep.subr.mxu0 0.0
  %4621 = vmatpush1.msra.mxu0 0.0
  %4622 = vmatprep.subr.mxu0 0.0
  %4623 = vmatpush1.msra.mxu0 0.0
  %4624 = vmatprep.mubr.f32.mxu0 0.0
  %4625 = vmatmul.mubr.f32.gmra.mrb[0].mxu0 %v4513
  %v4626 = vpop.f32.mrb[0].mxu0
  %v4627 = vadd.f32 %v4510, %v4626
  %v4628 = vpop.f32.mrb[0].mxu0
  %4629 = vmatprep.mubr.f32.mxu0 0.0
  %4630 = vmatmul.mubr.f32.gmra.mrb[0].mxu0 %v4516
  %v4631 = vpop.f32.mrb[0].mxu0
  %v4632 = vadd.f32 %v4510, %v4631
  %v4633 = vpop.f32.mrb[0].mxu0
  %4634 = vmatprep.mubr.f32.mxu0 0.0
  %4635 = vmatmul.mubr.f32.gmra.mrb[0].mxu0 %v4519
  %v4636 = vpop.f32.mrb[0].mxu0
  %v4637 = vadd.f32 %v4510, %v4636
  %v4638 = vpop.f32.mrb[0].mxu0
  %4639 = vmatprep.mubr.f32.mxu0 0.0
  %4640 = vmatmul.mubr.f32.gmra.mrb[0].mxu0 %v4522
  %v4641 = vpop.f32.mrb[0].mxu0
  %v4642 = vadd.f32 %v4510, %v4641
  %v4643 = vpop.f32.mrb[0].mxu0
  %4644 = vmatprep.mubr.f32.mxu0 0.0
  %4645 = vmatmul.mubr.f32.gmra.mrb[0].mxu0 %v4525
  %v4646 = vpop.f32.mrb[0].mxu0
  %v4647 = vadd.f32 %v4510, %v4646
  %v4648 = vpop.f32.mrb[0].mxu0
  %4649 = vmatprep.mubr.f32.mxu0 0.0
  %4650 = vmatmul.mubr.f32.gmra.mrb[0].mxu0 %v4528
  %v4651 = vpop.f32.mrb[0].mxu0
  %v4652 = vadd.f32 %v4510, %v4651
  %v4653 = vpop.f32.mrb[0].mxu0
  %4654 = vmatprep.mubr.f32.mxu0 0.0
  %4655 = vmatmul.mubr.f32.gmra.mrb[0].mxu0 %v4531
  %v4656 = vpop.f32.mrb[0].mxu0
  %v4657 = vadd.f32 %v4510, %v4656
  %v4658 = vpop.f32.mrb[0].mxu0
  %4659 = vmatprep.mubr.f32.mxu0 0.0
  %4660 = vmatmul.mubr.f32.gmra.mrb[0].mxu0 %v4534
  %v4661 = vpop.f32.mrb[0].mxu0
  %v4662 = vadd.f32 %v4510, %v4661
  %v4663 = vpop.f32.mrb[0].mxu0
  %4664 = vmatprep.mubr.f32.mxu0 0.0
  %4665 = vmatmul.mubr.f32.gmra.mrb[0].mxu0 %v4537
  %v4666 = vpop.f32.mrb[0].mxu0
  %v4667 = vadd.f32 %v4510, %v4666
  %v4668 = vpop.f32.mrb[0].mxu0
  %4669 = vmatprep.mubr.f32.mxu0 0.0
  %4670 = vmatmul.mubr.f32.gmra.mrb[0].mxu0 %v4540
  %v4671 = vpop.f32.mrb[0].mxu0
  %v4672 = vadd.f32 %v4510, %v4671
  %v4673 = vpop.f32.mrb[0].mxu0
  %4674 = vmatprep.mubr.f32.mxu0 0.0
  %4675 = vmatmul.mubr.f32.gmra.mrb[0].mxu0 %v4543
  %v4676 = vpop.f32.mrb[0].mxu0
  %v4677 = vadd.f32 %v4510, %v4676
  %v4678 = vpop.f32.mrb[0].mxu0
  %4679 = vmatprep.mubr.f32.mxu0 0.0
  %4680 = vmatmul.mubr.f32.gmra.mrb[0].mxu0 %v4546
  %v4681 = vpop.f32.mrb[0].mxu0
  %v4682 = vadd.f32 %v4510, %v4681
  %v4683 = vpop.f32.mrb[0].mxu0
  %4684 = vmatprep.mubr.f32.mxu0 0.0
  %4685 = vmatmul.mubr.f32.gmra.mrb[0].mxu0 %v4549
  %v4686 = vpop.f32.mrb[0].mxu0
  %v4687 = vadd.f32 %v4510, %v4686
  %v4688 = vpop.f32.mrb[0].mxu0
  %4689 = vmatprep.mubr.f32.mxu0 0.0
  %4690 = vmatmul.mubr.f32.gmra.mrb[0].mxu0 %v4552
  %v4691 = vpop.f32.mrb[0].mxu0
  %v4692 = vadd.f32 %v4510, %v4691
  %v4693 = vpop.f32.mrb[0].mxu0
  %4694 = vmatprep.mubr.f32.mxu0 0.0
  %4695 = vmatmul.mubr.f32.gmra.mrb[0].mxu0 %v4555
  %v4696 = vpop.f32.mrb[0].mxu0
  %v4697 = vadd.f32 %v4510, %v4696
  %v4698 = vpop.f32.mrb[0].mxu0
  %4699 = vmatprep.mubr.f32.mxu0 0.0
  %4700 = vmatmul.mubr.f32.gmra.mrb[0].mxu0 %v4558
  %v4701 = vpop.f32.mrb[0].mxu0
  %v4702 = vadd.f32 %v4510, %v4701
  %v4703 = vpop.f32.mrb[0].mxu0
  %4704 = vdwg.mxu0
  %v4705 = vmul.f32 %v4627, 0.5
  %v4706 = vmul.f32 %v4632, 0.5
  %v4707 = vmul.f32 %v4637, 0.5
  %v4708 = vmul.f32 %v4642, 0.5
  %v4709 = vmul.f32 %v4647, 0.5
  %v4710 = vmul.f32 %v4652, 0.5
  %v4711 = vmul.f32 %v4657, 0.5
  %v4712 = vmul.f32 %v4662, 0.5
  %v4713 = vmul.f32 %v4667, 0.5
  %v4714 = vmul.f32 %v4672, 0.5
  %v4715 = vmul.f32 %v4677, 0.5
  %v4716 = vmul.f32 %v4682, 0.5
  %v4717 = vmul.f32 %v4687, 0.5
  %v4718 = vmul.f32 %v4692, 0.5
  %v4719 = vmul.f32 %v4697, 0.5
  %v4720 = vmul.f32 %v4702, 0.5
  %v4721 = vmul.f32 %v4627, 0.70710677
  %v4722 = vmul.f32 %v4632, 0.70710677
  %v4723 = vmul.f32 %v4637, 0.70710677
  %v4724 = vmul.f32 %v4642, 0.70710677
  %v4725 = vmul.f32 %v4647, 0.70710677
  %v4726 = vmul.f32 %v4652, 0.70710677
  %v4727 = vmul.f32 %v4657, 0.70710677
  %v4728 = vmul.f32 %v4662, 0.70710677
  %v4729 = vmul.f32 %v4667, 0.70710677
  %v4730 = vmul.f32 %v4672, 0.70710677
  %v4731 = vmul.f32 %v4677, 0.70710677
  %v4732 = vmul.f32 %v4682, 0.70710677
  %v4733 = vmul.f32 %v4687, 0.70710677
  %v4734 = vmul.f32 %v4692, 0.70710677
  %v4735 = vmul.f32 %v4697, 0.70710677
  %v4736 = vmul.f32 %v4702, 0.70710677
  %v4737 = verf.f32.pop %v4721
  %v4738 = verf.f32.pop %v4722
  %v4739 = verf.f32.pop %v4723
  %v4740 = verf.f32.pop %v4724
  %v4741 = verf.f32.pop %v4725
  %v4742 = verf.f32.pop %v4726
  %v4743 = verf.f32.pop %v4727
  %v4744 = verf.f32.pop %v4728
  %v4745 = verf.f32.pop %v4729
  %v4746 = verf.f32.pop %v4730
  %v4747 = verf.f32.pop %v4731
  %v4748 = verf.f32.pop %v4732
  %v4749 = verf.f32.pop %v4733
  %v4750 = verf.f32.pop %v4734
  %v4751 = verf.f32.pop %v4735
  %v4752 = verf.f32.pop %v4736
  %v4753 = vadd.f32 %v4737, 1.0
  %v4754 = vadd.f32 %v4738, 1.0
  %v4755 = vadd.f32 %v4739, 1.0
  %v4756 = vadd.f32 %v4740, 1.0
  %v4757 = vadd.f32 %v4741, 1.0
  %v4758 = vadd.f32 %v4742, 1.0
  %v4759 = vadd.f32 %v4743, 1.0
  %v4760 = vadd.f32 %v4744, 1.0
  %v4761 = vadd.f32 %v4745, 1.0
  %v4762 = vadd.f32 %v4746, 1.0
  %v4763 = vadd.f32 %v4747, 1.0
  %v4764 = vadd.f32 %v4748, 1.0
  %v4765 = vadd.f32 %v4749, 1.0
  %v4766 = vadd.f32 %v4750, 1.0
  %v4767 = vadd.f32 %v4751, 1.0
  %v4768 = vadd.f32 %v4752, 1.0
  %v4769 = vmul.f32 %v4705, %v4753
  %v4770 = vmul.f32 %v4706, %v4754
  %v4771 = vmul.f32 %v4707, %v4755
  %v4772 = vmul.f32 %v4708, %v4756
  %v4773 = vmul.f32 %v4709, %v4757
  %v4774 = vmul.f32 %v4710, %v4758
  %v4775 = vmul.f32 %v4711, %v4759
  %v4776 = vmul.f32 %v4712, %v4760
  %v4777 = vmul.f32 %v4713, %v4761
  %v4778 = vmul.f32 %v4714, %v4762
  %v4779 = vmul.f32 %v4715, %v4763
  %v4780 = vmul.f32 %v4716, %v4764
  %v4781 = vmul.f32 %v4717, %v4765
  %v4782 = vmul.f32 %v4718, %v4766
  %v4783 = vmul.f32 %v4719, %v4767
  %v4784 = vmul.f32 %v4720, %v4768
  %v4785 = vld [vmem:[%s8] sm:$0xff]
  %v4786 = vld [vmem:[%s8 + $0x8] sm:$0xff]
  %v4787 = vld [vmem:[%s8 + $0x10] sm:$0xff]
  %v4788 = vld [vmem:[%s8 + $0x18] sm:$0xff]
  %v4789 = vld [vmem:[%s8 + $0x20] sm:$0xff]
  %v4790 = vld [vmem:[%s8 + $0x28] sm:$0xff]
  %v4791 = vld [vmem:[%s8 + $0x30] sm:$0xff]
  %v4792 = vld [vmem:[%s8 + $0x38] sm:$0xff]
  %v4793 = vld [vmem:[%s8 + $0x40] sm:$0xff]
  %v4794 = vld [vmem:[%s8 + $0x48] sm:$0xff]
  %v4795 = vld [vmem:[%s8 + $0x50] sm:$0xff]
  %v4796 = vld [vmem:[%s8 + $0x58] sm:$0xff]
  %v4797 = vld [vmem:[%s8 + $0x60] sm:$0xff]
  %v4798 = vld [vmem:[%s8 + $0x68] sm:$0xff]
  %v4799 = vld [vmem:[%s8 + $0x70] sm:$0xff]
  %v4800 = vld [vmem:[%s8 + $0x78] sm:$0xff]
  %v4801 = vld [vmem:[%s9] sm:$0x1]
  %v4803 = vlaneseq
  %v4804 = vshrl.u32 %v4803, 7
  %v4805 = vsub.s32 0, %v4804
  %v4806 = vrot.slane %v4801, %v4805
  %4808 = vmatprep.subr.mxu0 0.0
  %4809 = vmatpush1.msra.mxu0 %v4785
  %4810 = vmatprep.subr.mxu0 0.0
  %4811 = vmatpush1.msra.mxu0 %v4786
  %4812 = vmatprep.subr.mxu0 0.0
  %4813 = vmatpush1.msra.mxu0 %v4787
  %4814 = vmatprep.subr.mxu0 0.0
  %4815 = vmatpush1.msra.mxu0 %v4788
  %4816 = vmatprep.subr.mxu0 0.0
  %4817 = vmatpush1.msra.mxu0 %v4789
  %4818 = vmatprep.subr.mxu0 0.0
  %4819 = vmatpush1.msra.mxu0 %v4790
  %4820 = vmatprep.subr.mxu0 0.0
  %4821 = vmatpush1.msra.mxu0 %v4791
  %4822 = vmatprep.subr.mxu0 0.0
  %4823 = vmatpush1.msra.mxu0 %v4792
  %4824 = vmatprep.subr.mxu0 0.0
  %4825 = vmatpush1.msra.mxu0 %v4793
  %4826 = vmatprep.subr.mxu0 0.0
  %4827 = vmatpush1.msra.mxu0 %v4794
  %4828 = vmatprep.subr.mxu0 0.0
  %4829 = vmatpush1.msra.mxu0 %v4795
  %4830 = vmatprep.subr.mxu0 0.0
  %4831 = vmatpush1.msra.mxu0 %v4796
  %4832 = vmatprep.subr.mxu0 0.0
  %4833 = vmatpush1.msra.mxu0 %v4797
  %4834 = vmatprep.subr.mxu0 0.0
  %4835 = vmatpush1.msra.mxu0 %v4798
  %4836 = vmatprep.subr.mxu0 0.0
  %4837 = vmatpush1.msra.mxu0 %v4799
  %4838 = vmatprep.subr.mxu0 0.0
  %4839 = vmatpush1.msra.mxu0 %v4800
  %4840 = vmatprep.subr.mxu0 0.0
  %4841 = vmatpush1.msra.mxu0 0.0
  %4842 = vmatprep.subr.mxu0 0.0
  %4843 = vmatpush1.msra.mxu0 0.0
  %4844 = vmatprep.subr.mxu0 0.0
  %4845 = vmatpush1.msra.mxu0 0.0
  %4846 = vmatprep.subr.mxu0 0.0
  %4847 = vmatpush1.msra.mxu0 0.0
  %4848 = vmatprep.subr.mxu0 0.0
  %4849 = vmatpush1.msra.mxu0 0.0
  %4850 = vmatprep.subr.mxu0 0.0
  %4851 = vmatpush1.msra.mxu0 0.0
  %4852 = vmatprep.subr.mxu0 0.0
  %4853 = vmatpush1.msra.mxu0 0.0
  %4854 = vmatprep.subr.mxu0 0.0
  %4855 = vmatpush1.msra.mxu0 0.0
  %4856 = vmatprep.subr.mxu0 0.0
  %4857 = vmatpush1.msra.mxu0 0.0
  %4858 = vmatprep.subr.mxu0 0.0
  %4859 = vmatpush1.msra.mxu0 0.0
  %4860 = vmatprep.subr.mxu0 0.0
  %4861 = vmatpush1.msra.mxu0 0.0
  %4862 = vmatprep.subr.mxu0 0.0
  %4863 = vmatpush1.msra.mxu0 0.0
  %4864 = vmatprep.subr.mxu0 0.0
  %4865 = vmatpush1.msra.mxu0 0.0
  %4866 = vmatprep.subr.mxu0 0.0
  %4867 = vmatpush1.msra.mxu0 0.0
  %4868 = vmatprep.subr.mxu0 0.0
  %4869 = vmatpush1.msra.mxu0 0.0
  %4870 = vmatprep.subr.mxu0 0.0
  %4871 = vmatpush1.msra.mxu0 0.0
  %4872 = vmatprep.mubr.f32.mxu0 0.0
  %4873 = vmatmul.mubr.f32.gmra.mrb[0].mxu0 %v4769
  %v4874 = vpop.f32.mrb[0].mxu0
  %v4875 = vadd.f32 %v4806, %v4874
  %v4876 = vpop.f32.mrb[0].mxu0
  %4877 = vmatprep.mubr.f32.mxu0 0.0
  %4878 = vmatmul.mubr.f32.gmra.mrb[0].mxu0 %v4770
  %v4879 = vpop.f32.mrb[0].mxu0
  %v4880 = vadd.f32 %v4806, %v4879
  %v4881 = vpop.f32.mrb[0].mxu0
  %4882 = vmatprep.mubr.f32.mxu0 0.0
  %4883 = vmatmul.mubr.f32.gmra.mrb[0].mxu0 %v4771
  %v4884 = vpop.f32.mrb[0].mxu0
  %v4885 = vadd.f32 %v4806, %v4884
  %v4886 = vpop.f32.mrb[0].mxu0
  %4887 = vmatprep.mubr.f32.mxu0 0.0
  %4888 = vmatmul.mubr.f32.gmra.mrb[0].mxu0 %v4772
  %v4889 = vpop.f32.mrb[0].mxu0
  %v4890 = vadd.f32 %v4806, %v4889
  %v4891 = vpop.f32.mrb[0].mxu0
  %4892 = vmatprep.mubr.f32.mxu0 0.0
  %4893 = vmatmul.mubr.f32.gmra.mrb[0].mxu0 %v4773
  %v4894 = vpop.f32.mrb[0].mxu0
  %v4895 = vadd.f32 %v4806, %v4894
  %v4896 = vpop.f32.mrb[0].mxu0
  %4897 = vmatprep.mubr.f32.mxu0 0.0
  %4898 = vmatmul.mubr.f32.gmra.mrb[0].mxu0 %v4774
  %v4899 = vpop.f32.mrb[0].mxu0
  %v4900 = vadd.f32 %v4806, %v4899
  %v4901 = vpop.f32.mrb[0].mxu0
  %4902 = vmatprep.mubr.f32.mxu0 0.0
  %4903 = vmatmul.mubr.f32.gmra.mrb[0].mxu0 %v4775
  %v4904 = vpop.f32.mrb[0].mxu0
  %v4905 = vadd.f32 %v4806, %v4904
  %v4906 = vpop.f32.mrb[0].mxu0
  %4907 = vmatprep.mubr.f32.mxu0 0.0
  %4908 = vmatmul.mubr.f32.gmra.mrb[0].mxu0 %v4776
  %v4909 = vpop.f32.mrb[0].mxu0
  %v4910 = vadd.f32 %v4806, %v4909
  %v4911 = vpop.f32.mrb[0].mxu0
  %4912 = vmatprep.mubr.f32.mxu0 0.0
  %4913 = vmatmul.mubr.f32.gmra.mrb[0].mxu0 %v4777
  %v4914 = vpop.f32.mrb[0].mxu0
  %v4915 = vadd.f32 %v4806, %v4914
  %v4916 = vpop.f32.mrb[0].mxu0
  %4917 = vmatprep.mubr.f32.mxu0 0.0
  %4918 = vmatmul.mubr.f32.gmra.mrb[0].mxu0 %v4778
  %v4919 = vpop.f32.mrb[0].mxu0
  %v4920 = vadd.f32 %v4806, %v4919
  %v4921 = vpop.f32.mrb[0].mxu0
  %4922 = vmatprep.mubr.f32.mxu0 0.0
  %4923 = vmatmul.mubr.f32.gmra.mrb[0].mxu0 %v4779
  %v4924 = vpop.f32.mrb[0].mxu0
  %v4925 = vadd.f32 %v4806, %v4924
  %v4926 = vpop.f32.mrb[0].mxu0
  %4927 = vmatprep.mubr.f32.mxu0 0.0
  %4928 = vmatmul.mubr.f32.gmra.mrb[0].mxu0 %v4780
  %v4929 = vpop.f32.mrb[0].mxu0
  %v4930 = vadd.f32 %v4806, %v4929
  %v4931 = vpop.f32.mrb[0].mxu0
  %4932 = vmatprep.mubr.f32.mxu0 0.0
  %4933 = vmatmul.mubr.f32.gmra.mrb[0].mxu0 %v4781
  %v4934 = vpop.f32.mrb[0].mxu0
  %v4935 = vadd.f32 %v4806, %v4934
  %v4936 = vpop.f32.mrb[0].mxu0
  %4937 = vmatprep.mubr.f32.mxu0 0.0
  %4938 = vmatmul.mubr.f32.gmra.mrb[0].mxu0 %v4782
  %v4939 = vpop.f32.mrb[0].mxu0
  %v4940 = vadd.f32 %v4806, %v4939
  %v4941 = vpop.f32.mrb[0].mxu0
  %4942 = vmatprep.mubr.f32.mxu0 0.0
  %4943 = vmatmul.mubr.f32.gmra.mrb[0].mxu0 %v4783
  %v4944 = vpop.f32.mrb[0].mxu0
  %v4945 = vadd.f32 %v4806, %v4944
  %v4946 = vpop.f32.mrb[0].mxu0
  %4947 = vmatprep.mubr.f32.mxu0 0.0
  %4948 = vmatmul.mubr.f32.gmra.mrb[0].mxu0 %v4784
  %v4949 = vpop.f32.mrb[0].mxu0
  %v4950 = vadd.f32 %v4806, %v4949
  %v4951 = vpop.f32.mrb[0].mxu0
  %4952 = vdwg.mxu0
  %v4953 = vadd.f32 %v4277, %v4875
  %v4954 = vadd.f32 %v4278, %v4880
  %v4955 = vadd.f32 %v4279, %v4885
  %v4956 = vadd.f32 %v4280, %v4890
  %v4957 = vadd.f32 %v4281, %v4895
  %v4958 = vadd.f32 %v4282, %v4900
  %v4959 = vadd.f32 %v4283, %v4905
  %v4960 = vadd.f32 %v4284, %v4910
  %v4961 = vadd.f32 %v4285, %v4915
  %v4962 = vadd.f32 %v4286, %v4920
  %v4963 = vadd.f32 %v4287, %v4925
  %v4964 = vadd.f32 %v4288, %v4930
  %v4965 = vadd.f32 %v4289, %v4935
  %v4966 = vadd.f32 %v4290, %v4940
  %v4967 = vadd.f32 %v4291, %v4945
  %v4968 = vadd.f32 %v4292, %v4950
  %4969 = vst.msk [vmem:[%s10] sm:$0xff] %vm51, %v4953
  %4970 = vst.msk [vmem:[%s10 + $0x8] sm:$0xff] %vm51, %v4954
  %4971 = vst.msk [vmem:[%s10 + $0x10] sm:$0xff] %vm51, %v4955
  %4972 = vst.msk [vmem:[%s10 + $0x18] sm:$0xff] %vm51, %v4956
  %4973 = vst.msk [vmem:[%s10 + $0x20] sm:$0xff] %vm51, %v4957
  %4974 = vst.msk [vmem:[%s10 + $0x28] sm:$0xff] %vm51, %v4958
  %4975 = vst.msk [vmem:[%s10 + $0x30] sm:$0xff] %vm51, %v4959
  %4976 = vst.msk [vmem:[%s10 + $0x38] sm:$0xff] %vm51, %v4960
  %4977 = vst.msk [vmem:[%s10 + $0x40] sm:$0xff] %vm51, %v4961
  %4978 = vst.msk [vmem:[%s10 + $0x48] sm:$0xff] %vm51, %v4962
  %4979 = vst.msk [vmem:[%s10 + $0x50] sm:$0xff] %vm51, %v4963
  %4980 = vst.msk [vmem:[%s10 + $0x58] sm:$0xff] %vm51, %v4964
  %4981 = vst.msk [vmem:[%s10 + $0x60] sm:$0xff] %vm51, %v4965
  %4982 = vst.msk [vmem:[%s10 + $0x68] sm:$0xff] %vm51, %v4966
  %4983 = vst.msk [vmem:[%s10 + $0x70] sm:$0xff] %vm51, %v4967
  %4984 = vst.msk [vmem:[%s10 + $0x78] sm:$0xff] %vm51, %v4968
  // Predicated region
  $region42: #{swin_block_forward.1} parent=0 // pred_check
    _
  $region43: #{swin_block_forward.1} parent=0 // pred_check_branch
    %4986 = sbr.rel (0) target = $region45
  $region44: #{swin_block_forward.1} parent=0 // pred_region
    _
  $region45: #{swin_block_forward.1} parent=0 // pred_fallthru
    _
  // Predicated region
  $region46: #{swin_block_forward.1} parent=0 // pred_check
    _
  $region47: #{swin_block_forward.1} parent=0 // pred_check_branch
    %4988 = sbr.rel (0) target = $region49
  $region48: #{swin_block_forward.1} parent=0 // pred_region
    _
  $region49: #{swin_block_forward.1} parent=0 // pred_fallthru
    _

</llo_original>
